<compile_context>
chip_gen: v7x
topology: tpu7x:2x2x1
jax: 0.10.0
libtpu: 0.0.40
codegen_flags: <defaults>
</compile_context>

<pallas_src>
import functools

import jax
import jax.numpy as jnp
from jax import lax
from jax.experimental import pallas as pl
from jax.experimental.pallas import tpu as pltpu


def _round_up(v, m):
    return (v + m - 1) // m * m


# ----------------------------- fused kernel ---------------------------------
def _gru_classifier_kernel(x_ref, *rest, seq_len, batch, hidden, num_layers, unroll):
    """Whole forward for one batch tile.

    x_ref:      (T, Bt, Dp)              time-major padded input tile (f32)
    per layer:  wih (Dp_in, 3Hp) bf16, whh (Hp, 3Hp) bf16,
                bih (1, 3Hp) f32, bhh (1, 3Hp) f32
    wfc_ref:    (Hp, Cp) bf16, bfc_ref: (1, Cp) f32
    out_ref:    (Bt, Cp)
    scratch:    gi (T, Bt, 3Hp) f32, y (T, Bt, Hp) bf16
    """
    T, Bt, Hp = seq_len, batch, hidden
    n_layer_refs = 4 * num_layers
    layer_refs = rest[:n_layer_refs]
    wfc_ref = rest[n_layer_refs]
    bfc_ref = rest[n_layer_refs + 1]
    out_ref = rest[n_layer_refs + 2]
    gi_scr, y_scr = rest[n_layer_refs + 3:]

    h_last = None
    for layer in range(num_layers):
        wih_ref, whh_ref, bih_ref, bhh_ref = layer_refs[4 * layer:4 * layer + 4]

        # Layer input: padded x for layer 0, previous layer's VMEM output after.
        # (Full-value read BEFORE this layer's in-loop writes to y_scr: required
        #  for correctness when num_layers > 2 -- do not move into the loop.)
        xin = x_ref[...] if layer == 0 else y_scr[...]
        din = xin.shape[-1]
        x2d = xin.reshape(T * Bt, din).astype(jnp.bfloat16)

        # Hoisted, fused input projection: ONE matmul over all timesteps & gates.
        gi = jnp.dot(x2d, wih_ref[...], preferred_element_type=jnp.float32) + bih_ref[...]
        gi_scr[...] = gi.reshape(T, Bt, 3 * Hp)

        # Recurrent weights/biases hoisted out of the time loop (resident in VMEM).
        whh = whh_ref[...]          # [Hp, 3Hp] bf16
        bhh = bhh_ref[...]          # [1, 3Hp]  f32
        is_last_layer = layer == num_layers - 1

        def step(t, h_prev):
            # h_prev: [Bt, Hp] f32, carried in vregs (no VMEM round-trip).
            gh = jnp.dot(h_prev.astype(jnp.bfloat16), whh,
                         preferred_element_type=jnp.float32) + bhh      # [Bt, 3Hp]
            gi_t = gi_scr[t]                                            # [Bt, 3Hp]
            r = jax.nn.sigmoid(gi_t[:, :Hp] + gh[:, :Hp])
            z = jax.nn.sigmoid(gi_t[:, Hp:2 * Hp] + gh[:, Hp:2 * Hp])
            # PyTorch GRU: n = tanh(i_n + b_in + r * (h @ W_hn^T + b_hn))
            n = jnp.tanh(gi_t[:, 2 * Hp:] + r * gh[:, 2 * Hp:])
            h_new = (1.0 - z) * n + z * h_prev
            if not is_last_layer:       # static; last layer's sequence never needed
                y_scr[t] = h_new.astype(y_scr.dtype)
            return h_new

        h0 = jnp.zeros((Bt, Hp), jnp.float32)
        h_last = lax.fori_loop(0, T, step, h0, unroll=unroll)

    # Final FC on the resident last-layer hidden state (lane-dense Cp output).
    logits = (jnp.dot(h_last.astype(jnp.bfloat16), wfc_ref[...],
                      preferred_element_type=jnp.float32) + bfc_ref[...])
    out_ref[...] = logits.astype(out_ref.dtype)


# ------------------------------- wrapper -------------------------------------
def _resident_spec(shape):
    """Full-array, grid-invariant block; single-buffered when supported."""
    index_map = lambda b: (0,) * len(shape)
    try:
        return pl.BlockSpec(shape, index_map, pipeline_mode=pl.Buffered(1))
    except TypeError:       # older jax without pipeline_mode kwarg
        return pl.BlockSpec(shape, index_map)


def _default_batch_tile(b_pad):
    """Use >=2 grid programs on dual-TensorCore parts when the batch permits."""
    try:
        kind = jax.devices()[0].device_kind.lower()
        dual_core = "v7" in kind
    except Exception:
        dual_core = False
    if dual_core and b_pad % 16 == 0:
        return b_pad // 2
    return b_pad


def rnn_classifier_forward(x_btd, prepared, *, batch_tile=None):
    """x_btd: [B, T, D] -> logits [B, num_classes]  (attention_mask=None path)."""
    B, T, D = x_btd.shape
    H = prepared["hidden"]
    C = prepared["num_classes"]
    Hp = prepared["hidden_p"]
    Cp = prepared["classes_p"]
    Dp = prepared["input_p"]
    L = len(prepared["layers"])
    assert D <= Dp and H <= Hp and C <= Cp

    # Pad batch to a multiple of 8 and features to Dp (padded entries are zero
    # and stay inert through the padded-zero weight columns).
    Bp = _round_up(max(B, 8), 8)
    x_pad = jnp.zeros((Bp, T, Dp), x_btd.dtype).at[:B, :, :D].set(x_btd)
    x_tbd = jnp.transpose(x_pad, (1, 0, 2))          # [T, Bp, Dp] time-major

    bt = _default_batch_tile(Bp) if batch_tile is None else batch_tile
    assert Bp % bt == 0 and bt % 8 == 0, "batch_tile must divide padded B and be a multiple of 8"

    unroll = True if T <= 16 else 8                  # cap unroll for long sequences

    kernel = functools.partial(_gru_classifier_kernel,
                               seq_len=T, batch=bt, hidden=Hp,
                               num_layers=L, unroll=unroll)

    inputs = [x_tbd]
    in_specs = [pl.BlockSpec((T, bt, Dp), lambda b: (0, b, 0))]
    for (wih_f, whh_f, bih_f, bhh_f) in prepared["layers"]:
        inputs += [wih_f, whh_f, bih_f, bhh_f]
        in_specs += [_resident_spec(wih_f.shape),    # [Dp_in, 3Hp] fused W_ih^T
                     _resident_spec(whh_f.shape),    # [Hp, 3Hp]    fused W_hh^T
                     _resident_spec(bih_f.shape),    # [1, 3Hp]
                     _resident_spec(bhh_f.shape)]    # [1, 3Hp]
    inputs += [prepared["wfc_t"], prepared["bfc"]]
    in_specs += [_resident_spec(prepared["wfc_t"].shape),
                 _resident_spec(prepared["bfc"].shape)]

    scratch_shapes = [
        pltpu.VMEM((T, bt, 3 * Hp), jnp.float32),    # fused gate pre-activations
        pltpu.VMEM((T, bt, Hp), jnp.bfloat16),       # layer output sequence
    ]

    # Explicit VMEM budget: actual buffers + headroom, capped well under v7x's
    # 64 MiB physical per-TC VMEM.
    in_bytes = sum(int(a.size) * a.dtype.itemsize for a in inputs)
    scr_bytes = T * bt * 3 * Hp * 4 + T * bt * Hp * 2
    out_bytes = 2 * bt * Cp * 4
    est = 2 * in_bytes + scr_bytes + out_bytes
    vmem_limit = int(min(max(est + (4 << 20), 8 << 20), 48 << 20))

    logits = pl.pallas_call(
        kernel,
        out_shape=jax.ShapeDtypeStruct((Bp, Cp), x_btd.dtype),
        grid_spec=pltpu.PrefetchScalarGridSpec(
            num_scalar_prefetch=0,
            grid=(Bp // bt,),                        # batch tiles (parallel across TCs)
            in_specs=in_specs,
            out_specs=pl.BlockSpec((bt, Cp), lambda b: (b, 0)),
            scratch_shapes=scratch_shapes,
        ),
        compiler_params=pltpu.CompilerParams(
            dimension_semantics=("parallel",),
            vmem_limit_bytes=vmem_limit,
        ),
    )(*inputs)
    return logits[:B, :C]


# ----------------------- parameter init & relayout ---------------------------
def init_params(key, input_size, hidden_size, num_layers, num_classes):
    """PyTorch-layout GRU + Linear params (gate order r, z, n)."""
    params = {"gru_layers": []}
    bound = 1.0 / jnp.sqrt(jnp.float32(hidden_size))
    for layer in range(num_layers):
        d_in = input_size if layer == 0 else hidden_size
        key, k1, k2, k3, k4 = jax.random.split(key, 5)
        w_ih = jax.random.uniform(k1, (3 * hidden_size, d_in), jnp.float32, -bound, bound)
        w_hh = jax.random.uniform(k2, (3 * hidden_size, hidden_size), jnp.float32, -bound, bound)
        b_ih = jax.random.uniform(k3, (3 * hidden_size,), jnp.float32, -bound, bound)
        b_hh = jax.random.uniform(k4, (3 * hidden_size,), jnp.float32, -bound, bound)
        params["gru_layers"].append((w_ih, w_hh, b_ih, b_hh))
    key, k5, k6 = jax.random.split(key, 3)
    fb = 1.0 / jnp.sqrt(jnp.float32(hidden_size))
    params["w_fc"] = jax.random.uniform(k5, (num_classes, hidden_size), jnp.float32, -fb, fb)
    params["b_fc"] = jax.random.uniform(k6, (num_classes,), jnp.float32, -fb, fb)
    return params


def prepare_params(params):
    """One-time relayout: fused per-gate-concatenated, transposed, 128-padded,
    bf16 weights (done once, not per forward)."""
    w_fc = params["w_fc"]                    # [C, H]
    C, H = w_fc.shape
    Hp = _round_up(H, 128)
    Cp = _round_up(C, 128)

    def pad_w_t(w_gate, dp):                 # [H, d] -> transposed+padded [dp, Hp]
        wt = jnp.transpose(w_gate)           # [d, H]
        return jnp.zeros((dp, Hp), jnp.float32).at[:wt.shape[0], :H].set(wt)

    def pad_b(b3h):                          # [3H] -> [1, 3Hp] (per-gate padded)
        bg = b3h.reshape(3, H)
        parts = [jnp.zeros((1, Hp), jnp.float32).at[0, :H].set(bg[g]) for g in range(3)]
        return jnp.concatenate(parts, axis=1)

    layers = []
    input_p = None
    for li, (w_ih, w_hh, b_ih, b_hh) in enumerate(params["gru_layers"]):
        d_in = w_ih.shape[1]
        Dp = _round_up(d_in, 128)
        if li == 0:
            input_p = Dp
        wih_g = w_ih.reshape(3, H, d_in)
        whh_g = w_hh.reshape(3, H, H)
        wih_f = jnp.concatenate([pad_w_t(wih_g[g], Dp) for g in range(3)], axis=1)  # [Dp, 3Hp]
        whh_f = jnp.concatenate([pad_w_t(whh_g[g], Hp) for g in range(3)], axis=1)  # [Hp, 3Hp]
        layers.append((wih_f.astype(jnp.bfloat16), whh_f.astype(jnp.bfloat16),
                       pad_b(b_ih), pad_b(b_hh)))

    wfc_t = jnp.zeros((Hp, Cp), jnp.float32).at[:H, :C].set(jnp.transpose(w_fc))
    bfc = jnp.zeros((1, Cp), jnp.float32).at[0, :C].set(params["b_fc"])
    return {"layers": layers,
            "wfc_t": wfc_t.astype(jnp.bfloat16), "bfc": bfc,
            "hidden": H, "hidden_p": Hp,
            "num_classes": C, "classes_p": Cp,
            "input_p": input_p}


# --------------------------- pure-JAX reference -------------------------------
def _gru_classifier_reference(x_btd, params):
    seq = x_btd
    h_last = None
    for (w_ih, w_hh, b_ih, b_hh) in params["gru_layers"]:
        H = w_hh.shape[1]
        B = seq.shape[0]

        def cell(h, x_t):
            gi = x_t @ w_ih.T + b_ih
            gh = h @ w_hh.T + b_hh
            i_r, i_z, i_n = gi[:, :H], gi[:, H:2 * H], gi[:, 2 * H:]
            h_r, h_z, h_n = gh[:, :H], gh[:, H:2 * H], gh[:, 2 * H:]
            r = jax.nn.sigmoid(i_r + h_r)
            z = jax.nn.sigmoid(i_z + h_z)
            n = jnp.tanh(i_n + r * h_n)
            h_new = (1.0 - z) * n + z * h
            return h_new, h_new

        h0 = jnp.zeros((B, H), jnp.float32)
        h_last, ys = lax.scan(cell, h0, jnp.transpose(seq, (1, 0, 2)))
        seq = jnp.transpose(ys, (1, 0, 2))
    return h_last @ params["w_fc"].T + params["b_fc"]


# --------------------------------- main ---------------------------------------
if __name__ == "__main__":
    B, T, D = 2, 8, 16          # batch, seq_len, input_size
    H, L, C = 32, 2, 5          # hidden_size, num_layers, num_classes

    key = jax.random.PRNGKey(0)
    key, kx = jax.random.split(key)
    x = jax.random.normal(kx, (B, T, D), dtype=jnp.float32)

    params = init_params(key, D, H, L, C)
    prepared = prepare_params(params)             # one-time weight relayout/pad/bf16

    logits = rnn_classifier_forward(x, prepared)
    logits = jax.block_until_ready(logits)

    assert logits.shape == (B, C), logits.shape
    assert jnp.all(jnp.isfinite(logits))

    ref = _gru_classifier_reference(x, params)
    err = float(jnp.max(jnp.abs(logits - ref)))
    assert jnp.allclose(logits, ref, rtol=2.5e-2, atol=2.5e-2), ("mismatch vs reference", err)

    print("KERNEL_OK")
</pallas_src>

<mosaic_0001>
module attributes {stable_mosaic.version = 11 : i64} {
  func.func @_gru_classifier_kernel(%arg0: i32, %arg1: memref<8x8x128xf32, #tpu.memory_space<vmem>>, %arg2: memref<128x384xbf16, #tpu.memory_space<vmem>>, %arg3: memref<128x384xbf16, #tpu.memory_space<vmem>>, %arg4: memref<1x384xf32, #tpu.memory_space<vmem>>, %arg5: memref<1x384xf32, #tpu.memory_space<vmem>>, %arg6: memref<128x384xbf16, #tpu.memory_space<vmem>>, %arg7: memref<128x384xbf16, #tpu.memory_space<vmem>>, %arg8: memref<1x384xf32, #tpu.memory_space<vmem>>, %arg9: memref<1x384xf32, #tpu.memory_space<vmem>>, %arg10: memref<128x128xbf16, #tpu.memory_space<vmem>>, %arg11: memref<1x128xf32, #tpu.memory_space<vmem>>, %arg12: memref<8x128xf32, #tpu.memory_space<vmem>>, %arg13: memref<8x8x384xf32, #tpu.memory_space<vmem>>, %arg14: memref<8x8x128xbf16, #tpu.memory_space<vmem>>) attributes {dimension_semantics = [#tpu.dimension_semantics<parallel>], iteration_bounds = array<i64: 1>, scalar_prefetch = 0 : i64, scratch_operands = 2 : i64, tpu.core_type = #tpu.core_type<tc>, window_params = [{transform_indices = @transform_0, window_bounds = array<i64: 8, 8, 128>}, {pipeline_mode = #tpu.pipeline_mode<synchronous>, transform_indices = @transform_1, window_bounds = array<i64: 128, 384>}, {pipeline_mode = #tpu.pipeline_mode<synchronous>, transform_indices = @transform_2, window_bounds = array<i64: 128, 384>}, {pipeline_mode = #tpu.pipeline_mode<synchronous>, transform_indices = @transform_3, window_bounds = array<i64: 1, 384>}, {pipeline_mode = #tpu.pipeline_mode<synchronous>, transform_indices = @transform_4, window_bounds = array<i64: 1, 384>}, {pipeline_mode = #tpu.pipeline_mode<synchronous>, transform_indices = @transform_5, window_bounds = array<i64: 128, 384>}, {pipeline_mode = #tpu.pipeline_mode<synchronous>, transform_indices = @transform_6, window_bounds = array<i64: 128, 384>}, {pipeline_mode = #tpu.pipeline_mode<synchronous>, transform_indices = @transform_7, window_bounds = array<i64: 1, 384>}, {pipeline_mode = #tpu.pipeline_mode<synchronous>, transform_indices = @transform_8, window_bounds = array<i64: 1, 384>}, {pipeline_mode = #tpu.pipeline_mode<synchronous>, transform_indices = @transform_9, window_bounds = array<i64: 128, 128>}, {pipeline_mode = #tpu.pipeline_mode<synchronous>, transform_indices = @transform_10, window_bounds = array<i64: 1, 128>}, {transform_indices = @transform_11, window_bounds = array<i64: 8, 128>}]} {
    %c0 = arith.constant 0 : index
    %c0_0 = arith.constant 0 : index
    %c0_1 = arith.constant 0 : index
    %0 = vector.load %arg1[%c0, %c0_0, %c0_1] : memref<8x8x128xf32, #tpu.memory_space<vmem>>, vector<8x8x128xf32>
    %1 = vector.shape_cast %0 : vector<8x8x128xf32> to vector<64x128xf32>
    %2 = arith.truncf %1 : vector<64x128xf32> to vector<64x128xbf16>
    %c0_2 = arith.constant 0 : index
    %c0_3 = arith.constant 0 : index
    %3 = vector.load %arg2[%c0_2, %c0_3] : memref<128x384xbf16, #tpu.memory_space<vmem>>, vector<128x384xbf16>
    %cst = arith.constant dense<0.000000e+00> : vector<64x384xf32>
    %4 = tpu.matmul %2, %3, %cst {dimension_numbers = #tpu.dot_dimension_numbers<[1], [0], [0], [1], [0, 0, 1, 1], [], []>} : vector<64x128xbf16>, vector<128x384xbf16>, vector<64x384xf32> -> vector<64x384xf32>
    %c0_4 = arith.constant 0 : index
    %c0_5 = arith.constant 0 : index
    %5 = vector.load %arg4[%c0_4, %c0_5] : memref<1x384xf32, #tpu.memory_space<vmem>>, vector<1x384xf32>
    %6 = vector.broadcast %5 : vector<1x384xf32> to vector<64x384xf32>
    %7 = arith.addf %4, %6 : vector<64x384xf32>
    %8 = vector.shape_cast %7 : vector<64x384xf32> to vector<8x8x384xf32>
    %c0_6 = arith.constant 0 : index
    %c0_7 = arith.constant 0 : index
    %c0_8 = arith.constant 0 : index
    %9 = vector.load %arg13[%c0_6, %c0_7, %c0_8] : memref<8x8x384xf32, #tpu.memory_space<vmem>>, vector<8x8x384xf32>
    tpu.vector_store %arg13[%c0_6, %c0_7, %c0_8], %8 {strides = array<i32>} : memref<8x8x384xf32, #tpu.memory_space<vmem>>, vector<8x8x384xf32>,
    %c0_9 = arith.constant 0 : index
    %c0_10 = arith.constant 0 : index
    %10 = vector.load %arg3[%c0_9, %c0_10] : memref<128x384xbf16, #tpu.memory_space<vmem>>, vector<128x384xbf16>
    %c0_11 = arith.constant 0 : index
    %c0_12 = arith.constant 0 : index
    %11 = vector.load %arg5[%c0_11, %c0_12] : memref<1x384xf32, #tpu.memory_space<vmem>>, vector<1x384xf32>
    %cst_13 = arith.constant 0.000000e+00 : f32
    %12 = vector.broadcast %cst_13 : f32 to vector<8x128xf32>
    %c0_i32 = arith.constant 0 : i32
    %13 = arith.truncf %12 : vector<8x128xf32> to vector<8x128xbf16>
    %cst_14 = arith.constant dense<0.000000e+00> : vector<8x384xf32>
    %14 = tpu.matmul %13, %10, %cst_14 {dimension_numbers = #tpu.dot_dimension_numbers<[1], [0], [0], [1], [0, 0, 1, 1], [], []>} : vector<8x128xbf16>, vector<128x384xbf16>, vector<8x384xf32> -> vector<8x384xf32>
    %15 = vector.broadcast %11 : vector<1x384xf32> to vector<8x384xf32>
    %16 = arith.addf %14, %15 : vector<8x384xf32>
    %17 = arith.index_cast %c0_i32 : i32 to index
    %c0_15 = arith.constant 0 : index
    %c0_16 = arith.constant 0 : index
    %18 = vector.load %arg13[%17, %c0_15, %c0_16] : memref<8x8x384xf32, #tpu.memory_space<vmem>>, vector<1x8x384xf32>
    %19 = vector.shape_cast %18 : vector<1x8x384xf32> to vector<8x384xf32>
    %20 = vector.extract_strided_slice %19 {offsets = [0, 0], sizes = [8, 128], strides = [1, 1]} : vector<8x384xf32> to vector<8x128xf32>
    %21 = vector.extract_strided_slice %16 {offsets = [0, 0], sizes = [8, 128], strides = [1, 1]} : vector<8x384xf32> to vector<8x128xf32>
    %22 = arith.addf %20, %21 : vector<8x128xf32>
    %23 = arith.negf %22 : vector<8x128xf32>
    %24 = math.exp %23 : vector<8x128xf32>
    %cst_17 = arith.constant 1.000000e+00 : f32
    %25 = vector.broadcast %cst_17 : f32 to vector<8x128xf32>
    %26 = arith.addf %25, %24 : vector<8x128xf32>
    %27 = arith.divf %25, %26 : vector<8x128xf32>
    %28 = vector.extract_strided_slice %19 {offsets = [0, 128], sizes = [8, 128], strides = [1, 1]} : vector<8x384xf32> to vector<8x128xf32>
    %29 = vector.extract_strided_slice %16 {offsets = [0, 128], sizes = [8, 128], strides = [1, 1]} : vector<8x384xf32> to vector<8x128xf32>
    %30 = arith.addf %28, %29 : vector<8x128xf32>
    %31 = arith.negf %30 : vector<8x128xf32>
    %32 = math.exp %31 : vector<8x128xf32>
    %cst_18 = arith.constant 1.000000e+00 : f32
    %33 = vector.broadcast %cst_18 : f32 to vector<8x128xf32>
    %34 = arith.addf %33, %32 : vector<8x128xf32>
    %35 = arith.divf %33, %34 : vector<8x128xf32>
    %36 = vector.extract_strided_slice %19 {offsets = [0, 256], sizes = [8, 128], strides = [1, 1]} : vector<8x384xf32> to vector<8x128xf32>
    %37 = vector.extract_strided_slice %16 {offsets = [0, 256], sizes = [8, 128], strides = [1, 1]} : vector<8x384xf32> to vector<8x128xf32>
    %38 = arith.mulf %27, %37 : vector<8x128xf32>
    %39 = arith.addf %36, %38 : vector<8x128xf32>
    %40 = math.tanh %39 : vector<8x128xf32>
    %cst_19 = arith.constant 1.000000e+00 : f32
    %41 = vector.broadcast %cst_19 : f32 to vector<8x128xf32>
    %42 = arith.subf %41, %35 : vector<8x128xf32>
    %43 = arith.mulf %42, %40 : vector<8x128xf32>
    %44 = arith.mulf %35, %12 : vector<8x128xf32>
    %45 = arith.addf %43, %44 : vector<8x128xf32>
    %46 = arith.truncf %45 : vector<8x128xf32> to vector<8x128xbf16>
    %47 = arith.index_cast %c0_i32 : i32 to index
    %c0_20 = arith.constant 0 : index
    %c0_21 = arith.constant 0 : index
    %48 = vector.load %arg14[%47, %c0_20, %c0_21] : memref<8x8x128xbf16, #tpu.memory_space<vmem>>, vector<1x8x128xbf16>
    %49 = vector.shape_cast %48 : vector<1x8x128xbf16> to vector<8x128xbf16>
    %50 = vector.shape_cast %46 : vector<8x128xbf16> to vector<1x8x128xbf16>
    tpu.vector_store %arg14[%47, %c0_20, %c0_21], %50 {strides = array<i32>} : memref<8x8x128xbf16, #tpu.memory_space<vmem>>, vector<1x8x128xbf16>,
    %c1_i32 = arith.constant 1 : i32
    %51 = arith.truncf %45 : vector<8x128xf32> to vector<8x128xbf16>
    %cst_22 = arith.constant dense<0.000000e+00> : vector<8x384xf32>
    %52 = tpu.matmul %51, %10, %cst_22 {dimension_numbers = #tpu.dot_dimension_numbers<[1], [0], [0], [1], [0, 0, 1, 1], [], []>} : vector<8x128xbf16>, vector<128x384xbf16>, vector<8x384xf32> -> vector<8x384xf32>
    %53 = vector.broadcast %11 : vector<1x384xf32> to vector<8x384xf32>
    %54 = arith.addf %52, %53 : vector<8x384xf32>
    %55 = arith.index_cast %c1_i32 : i32 to index
    %c0_23 = arith.constant 0 : index
    %c0_24 = arith.constant 0 : index
    %56 = vector.load %arg13[%55, %c0_23, %c0_24] : memref<8x8x384xf32, #tpu.memory_space<vmem>>, vector<1x8x384xf32>
    %57 = vector.shape_cast %56 : vector<1x8x384xf32> to vector<8x384xf32>
    %58 = vector.extract_strided_slice %57 {offsets = [0, 0], sizes = [8, 128], strides = [1, 1]} : vector<8x384xf32> to vector<8x128xf32>
    %59 = vector.extract_strided_slice %54 {offsets = [0, 0], sizes = [8, 128], strides = [1, 1]} : vector<8x384xf32> to vector<8x128xf32>
    %60 = arith.addf %58, %59 : vector<8x128xf32>
    %61 = arith.negf %60 : vector<8x128xf32>
    %62 = math.exp %61 : vector<8x128xf32>
    %cst_25 = arith.constant 1.000000e+00 : f32
    %63 = vector.broadcast %cst_25 : f32 to vector<8x128xf32>
    %64 = arith.addf %63, %62 : vector<8x128xf32>
    %65 = arith.divf %63, %64 : vector<8x128xf32>
    %66 = vector.extract_strided_slice %57 {offsets = [0, 128], sizes = [8, 128], strides = [1, 1]} : vector<8x384xf32> to vector<8x128xf32>
    %67 = vector.extract_strided_slice %54 {offsets = [0, 128], sizes = [8, 128], strides = [1, 1]} : vector<8x384xf32> to vector<8x128xf32>
    %68 = arith.addf %66, %67 : vector<8x128xf32>
    %69 = arith.negf %68 : vector<8x128xf32>
    %70 = math.exp %69 : vector<8x128xf32>
    %cst_26 = arith.constant 1.000000e+00 : f32
    %71 = vector.broadcast %cst_26 : f32 to vector<8x128xf32>
    %72 = arith.addf %71, %70 : vector<8x128xf32>
    %73 = arith.divf %71, %72 : vector<8x128xf32>
    %74 = vector.extract_strided_slice %57 {offsets = [0, 256], sizes = [8, 128], strides = [1, 1]} : vector<8x384xf32> to vector<8x128xf32>
    %75 = vector.extract_strided_slice %54 {offsets = [0, 256], sizes = [8, 128], strides = [1, 1]} : vector<8x384xf32> to vector<8x128xf32>
    %76 = arith.mulf %65, %75 : vector<8x128xf32>
    %77 = arith.addf %74, %76 : vector<8x128xf32>
    %78 = math.tanh %77 : vector<8x128xf32>
    %cst_27 = arith.constant 1.000000e+00 : f32
    %79 = vector.broadcast %cst_27 : f32 to vector<8x128xf32>
    %80 = arith.subf %79, %73 : vector<8x128xf32>
    %81 = arith.mulf %80, %78 : vector<8x128xf32>
    %82 = arith.mulf %73, %45 : vector<8x128xf32>
    %83 = arith.addf %81, %82 : vector<8x128xf32>
    %84 = arith.truncf %83 : vector<8x128xf32> to vector<8x128xbf16>
    %85 = arith.index_cast %c1_i32 : i32 to index
    %c0_28 = arith.constant 0 : index
    %c0_29 = arith.constant 0 : index
    %86 = vector.load %arg14[%85, %c0_28, %c0_29] : memref<8x8x128xbf16, #tpu.memory_space<vmem>>, vector<1x8x128xbf16>
    %87 = vector.shape_cast %86 : vector<1x8x128xbf16> to vector<8x128xbf16>
    %88 = vector.shape_cast %84 : vector<8x128xbf16> to vector<1x8x128xbf16>
    tpu.vector_store %arg14[%85, %c0_28, %c0_29], %88 {strides = array<i32>} : memref<8x8x128xbf16, #tpu.memory_space<vmem>>, vector<1x8x128xbf16>,
    %c2_i32 = arith.constant 2 : i32
    %89 = arith.truncf %83 : vector<8x128xf32> to vector<8x128xbf16>
    %cst_30 = arith.constant dense<0.000000e+00> : vector<8x384xf32>
    %90 = tpu.matmul %89, %10, %cst_30 {dimension_numbers = #tpu.dot_dimension_numbers<[1], [0], [0], [1], [0, 0, 1, 1], [], []>} : vector<8x128xbf16>, vector<128x384xbf16>, vector<8x384xf32> -> vector<8x384xf32>
    %91 = vector.broadcast %11 : vector<1x384xf32> to vector<8x384xf32>
    %92 = arith.addf %90, %91 : vector<8x384xf32>
    %93 = arith.index_cast %c2_i32 : i32 to index
    %c0_31 = arith.constant 0 : index
    %c0_32 = arith.constant 0 : index
    %94 = vector.load %arg13[%93, %c0_31, %c0_32] : memref<8x8x384xf32, #tpu.memory_space<vmem>>, vector<1x8x384xf32>
    %95 = vector.shape_cast %94 : vector<1x8x384xf32> to vector<8x384xf32>
    %96 = vector.extract_strided_slice %95 {offsets = [0, 0], sizes = [8, 128], strides = [1, 1]} : vector<8x384xf32> to vector<8x128xf32>
    %97 = vector.extract_strided_slice %92 {offsets = [0, 0], sizes = [8, 128], strides = [1, 1]} : vector<8x384xf32> to vector<8x128xf32>
    %98 = arith.addf %96, %97 : vector<8x128xf32>
    %99 = arith.negf %98 : vector<8x128xf32>
    %100 = math.exp %99 : vector<8x128xf32>
    %cst_33 = arith.constant 1.000000e+00 : f32
    %101 = vector.broadcast %cst_33 : f32 to vector<8x128xf32>
    %102 = arith.addf %101, %100 : vector<8x128xf32>
    %103 = arith.divf %101, %102 : vector<8x128xf32>
    %104 = vector.extract_strided_slice %95 {offsets = [0, 128], sizes = [8, 128], strides = [1, 1]} : vector<8x384xf32> to vector<8x128xf32>
    %105 = vector.extract_strided_slice %92 {offsets = [0, 128], sizes = [8, 128], strides = [1, 1]} : vector<8x384xf32> to vector<8x128xf32>
    %106 = arith.addf %104, %105 : vector<8x128xf32>
    %107 = arith.negf %106 : vector<8x128xf32>
    %108 = math.exp %107 : vector<8x128xf32>
    %cst_34 = arith.constant 1.000000e+00 : f32
    %109 = vector.broadcast %cst_34 : f32 to vector<8x128xf32>
    %110 = arith.addf %109, %108 : vector<8x128xf32>
    %111 = arith.divf %109, %110 : vector<8x128xf32>
    %112 = vector.extract_strided_slice %95 {offsets = [0, 256], sizes = [8, 128], strides = [1, 1]} : vector<8x384xf32> to vector<8x128xf32>
    %113 = vector.extract_strided_slice %92 {offsets = [0, 256], sizes = [8, 128], strides = [1, 1]} : vector<8x384xf32> to vector<8x128xf32>
    %114 = arith.mulf %103, %113 : vector<8x128xf32>
    %115 = arith.addf %112, %114 : vector<8x128xf32>
    %116 = math.tanh %115 : vector<8x128xf32>
    %cst_35 = arith.constant 1.000000e+00 : f32
    %117 = vector.broadcast %cst_35 : f32 to vector<8x128xf32>
    %118 = arith.subf %117, %111 : vector<8x128xf32>
    %119 = arith.mulf %118, %116 : vector<8x128xf32>
    %120 = arith.mulf %111, %83 : vector<8x128xf32>
    %121 = arith.addf %119, %120 : vector<8x128xf32>
    %122 = arith.truncf %121 : vector<8x128xf32> to vector<8x128xbf16>
    %123 = arith.index_cast %c2_i32 : i32 to index
    %c0_36 = arith.constant 0 : index
    %c0_37 = arith.constant 0 : index
    %124 = vector.load %arg14[%123, %c0_36, %c0_37] : memref<8x8x128xbf16, #tpu.memory_space<vmem>>, vector<1x8x128xbf16>
    %125 = vector.shape_cast %124 : vector<1x8x128xbf16> to vector<8x128xbf16>
    %126 = vector.shape_cast %122 : vector<8x128xbf16> to vector<1x8x128xbf16>
    tpu.vector_store %arg14[%123, %c0_36, %c0_37], %126 {strides = array<i32>} : memref<8x8x128xbf16, #tpu.memory_space<vmem>>, vector<1x8x128xbf16>,
    %c3_i32 = arith.constant 3 : i32
    %127 = arith.truncf %121 : vector<8x128xf32> to vector<8x128xbf16>
    %cst_38 = arith.constant dense<0.000000e+00> : vector<8x384xf32>
    %128 = tpu.matmul %127, %10, %cst_38 {dimension_numbers = #tpu.dot_dimension_numbers<[1], [0], [0], [1], [0, 0, 1, 1], [], []>} : vector<8x128xbf16>, vector<128x384xbf16>, vector<8x384xf32> -> vector<8x384xf32>
    %129 = vector.broadcast %11 : vector<1x384xf32> to vector<8x384xf32>
    %130 = arith.addf %128, %129 : vector<8x384xf32>
    %131 = arith.index_cast %c3_i32 : i32 to index
    %c0_39 = arith.constant 0 : index
    %c0_40 = arith.constant 0 : index
    %132 = vector.load %arg13[%131, %c0_39, %c0_40] : memref<8x8x384xf32, #tpu.memory_space<vmem>>, vector<1x8x384xf32>
    %133 = vector.shape_cast %132 : vector<1x8x384xf32> to vector<8x384xf32>
    %134 = vector.extract_strided_slice %133 {offsets = [0, 0], sizes = [8, 128], strides = [1, 1]} : vector<8x384xf32> to vector<8x128xf32>
    %135 = vector.extract_strided_slice %130 {offsets = [0, 0], sizes = [8, 128], strides = [1, 1]} : vector<8x384xf32> to vector<8x128xf32>
    %136 = arith.addf %134, %135 : vector<8x128xf32>
    %137 = arith.negf %136 : vector<8x128xf32>
    %138 = math.exp %137 : vector<8x128xf32>
    %cst_41 = arith.constant 1.000000e+00 : f32
    %139 = vector.broadcast %cst_41 : f32 to vector<8x128xf32>
    %140 = arith.addf %139, %138 : vector<8x128xf32>
    %141 = arith.divf %139, %140 : vector<8x128xf32>
    %142 = vector.extract_strided_slice %133 {offsets = [0, 128], sizes = [8, 128], strides = [1, 1]} : vector<8x384xf32> to vector<8x128xf32>
    %143 = vector.extract_strided_slice %130 {offsets = [0, 128], sizes = [8, 128], strides = [1, 1]} : vector<8x384xf32> to vector<8x128xf32>
    %144 = arith.addf %142, %143 : vector<8x128xf32>
    %145 = arith.negf %144 : vector<8x128xf32>
    %146 = math.exp %145 : vector<8x128xf32>
    %cst_42 = arith.constant 1.000000e+00 : f32
    %147 = vector.broadcast %cst_42 : f32 to vector<8x128xf32>
    %148 = arith.addf %147, %146 : vector<8x128xf32>
    %149 = arith.divf %147, %148 : vector<8x128xf32>
    %150 = vector.extract_strided_slice %133 {offsets = [0, 256], sizes = [8, 128], strides = [1, 1]} : vector<8x384xf32> to vector<8x128xf32>
    %151 = vector.extract_strided_slice %130 {offsets = [0, 256], sizes = [8, 128], strides = [1, 1]} : vector<8x384xf32> to vector<8x128xf32>
    %152 = arith.mulf %141, %151 : vector<8x128xf32>
    %153 = arith.addf %150, %152 : vector<8x128xf32>
    %154 = math.tanh %153 : vector<8x128xf32>
    %cst_43 = arith.constant 1.000000e+00 : f32
    %155 = vector.broadcast %cst_43 : f32 to vector<8x128xf32>
    %156 = arith.subf %155, %149 : vector<8x128xf32>
    %157 = arith.mulf %156, %154 : vector<8x128xf32>
    %158 = arith.mulf %149, %121 : vector<8x128xf32>
    %159 = arith.addf %157, %158 : vector<8x128xf32>
    %160 = arith.truncf %159 : vector<8x128xf32> to vector<8x128xbf16>
    %161 = arith.index_cast %c3_i32 : i32 to index
    %c0_44 = arith.constant 0 : index
    %c0_45 = arith.constant 0 : index
    %162 = vector.load %arg14[%161, %c0_44, %c0_45] : memref<8x8x128xbf16, #tpu.memory_space<vmem>>, vector<1x8x128xbf16>
    %163 = vector.shape_cast %162 : vector<1x8x128xbf16> to vector<8x128xbf16>
    %164 = vector.shape_cast %160 : vector<8x128xbf16> to vector<1x8x128xbf16>
    tpu.vector_store %arg14[%161, %c0_44, %c0_45], %164 {strides = array<i32>} : memref<8x8x128xbf16, #tpu.memory_space<vmem>>, vector<1x8x128xbf16>,
    %c4_i32 = arith.constant 4 : i32
    %165 = arith.truncf %159 : vector<8x128xf32> to vector<8x128xbf16>
    %cst_46 = arith.constant dense<0.000000e+00> : vector<8x384xf32>
    %166 = tpu.matmul %165, %10, %cst_46 {dimension_numbers = #tpu.dot_dimension_numbers<[1], [0], [0], [1], [0, 0, 1, 1], [], []>} : vector<8x128xbf16>, vector<128x384xbf16>, vector<8x384xf32> -> vector<8x384xf32>
    %167 = vector.broadcast %11 : vector<1x384xf32> to vector<8x384xf32>
    %168 = arith.addf %166, %167 : vector<8x384xf32>
    %169 = arith.index_cast %c4_i32 : i32 to index
    %c0_47 = arith.constant 0 : index
    %c0_48 = arith.constant 0 : index
    %170 = vector.load %arg13[%169, %c0_47, %c0_48] : memref<8x8x384xf32, #tpu.memory_space<vmem>>, vector<1x8x384xf32>
    %171 = vector.shape_cast %170 : vector<1x8x384xf32> to vector<8x384xf32>
    %172 = vector.extract_strided_slice %171 {offsets = [0, 0], sizes = [8, 128], strides = [1, 1]} : vector<8x384xf32> to vector<8x128xf32>
    %173 = vector.extract_strided_slice %168 {offsets = [0, 0], sizes = [8, 128], strides = [1, 1]} : vector<8x384xf32> to vector<8x128xf32>
    %174 = arith.addf %172, %173 : vector<8x128xf32>
    %175 = arith.negf %174 : vector<8x128xf32>
    %176 = math.exp %175 : vector<8x128xf32>
    %cst_49 = arith.constant 1.000000e+00 : f32
    %177 = vector.broadcast %cst_49 : f32 to vector<8x128xf32>
    %178 = arith.addf %177, %176 : vector<8x128xf32>
    %179 = arith.divf %177, %178 : vector<8x128xf32>
    %180 = vector.extract_strided_slice %171 {offsets = [0, 128], sizes = [8, 128], strides = [1, 1]} : vector<8x384xf32> to vector<8x128xf32>
    %181 = vector.extract_strided_slice %168 {offsets = [0, 128], sizes = [8, 128], strides = [1, 1]} : vector<8x384xf32> to vector<8x128xf32>
    %182 = arith.addf %180, %181 : vector<8x128xf32>
    %183 = arith.negf %182 : vector<8x128xf32>
    %184 = math.exp %183 : vector<8x128xf32>
    %cst_50 = arith.constant 1.000000e+00 : f32
    %185 = vector.broadcast %cst_50 : f32 to vector<8x128xf32>
    %186 = arith.addf %185, %184 : vector<8x128xf32>
    %187 = arith.divf %185, %186 : vector<8x128xf32>
    %188 = vector.extract_strided_slice %171 {offsets = [0, 256], sizes = [8, 128], strides = [1, 1]} : vector<8x384xf32> to vector<8x128xf32>
    %189 = vector.extract_strided_slice %168 {offsets = [0, 256], sizes = [8, 128], strides = [1, 1]} : vector<8x384xf32> to vector<8x128xf32>
    %190 = arith.mulf %179, %189 : vector<8x128xf32>
    %191 = arith.addf %188, %190 : vector<8x128xf32>
    %192 = math.tanh %191 : vector<8x128xf32>
    %cst_51 = arith.constant 1.000000e+00 : f32
    %193 = vector.broadcast %cst_51 : f32 to vector<8x128xf32>
    %194 = arith.subf %193, %187 : vector<8x128xf32>
    %195 = arith.mulf %194, %192 : vector<8x128xf32>
    %196 = arith.mulf %187, %159 : vector<8x128xf32>
    %197 = arith.addf %195, %196 : vector<8x128xf32>
    %198 = arith.truncf %197 : vector<8x128xf32> to vector<8x128xbf16>
    %199 = arith.index_cast %c4_i32 : i32 to index
    %c0_52 = arith.constant 0 : index
    %c0_53 = arith.constant 0 : index
    %200 = vector.load %arg14[%199, %c0_52, %c0_53] : memref<8x8x128xbf16, #tpu.memory_space<vmem>>, vector<1x8x128xbf16>
    %201 = vector.shape_cast %200 : vector<1x8x128xbf16> to vector<8x128xbf16>
    %202 = vector.shape_cast %198 : vector<8x128xbf16> to vector<1x8x128xbf16>
    tpu.vector_store %arg14[%199, %c0_52, %c0_53], %202 {strides = array<i32>} : memref<8x8x128xbf16, #tpu.memory_space<vmem>>, vector<1x8x128xbf16>,
    %c5_i32 = arith.constant 5 : i32
    %203 = arith.truncf %197 : vector<8x128xf32> to vector<8x128xbf16>
    %cst_54 = arith.constant dense<0.000000e+00> : vector<8x384xf32>
    %204 = tpu.matmul %203, %10, %cst_54 {dimension_numbers = #tpu.dot_dimension_numbers<[1], [0], [0], [1], [0, 0, 1, 1], [], []>} : vector<8x128xbf16>, vector<128x384xbf16>, vector<8x384xf32> -> vector<8x384xf32>
    %205 = vector.broadcast %11 : vector<1x384xf32> to vector<8x384xf32>
    %206 = arith.addf %204, %205 : vector<8x384xf32>
    %207 = arith.index_cast %c5_i32 : i32 to index
    %c0_55 = arith.constant 0 : index
    %c0_56 = arith.constant 0 : index
    %208 = vector.load %arg13[%207, %c0_55, %c0_56] : memref<8x8x384xf32, #tpu.memory_space<vmem>>, vector<1x8x384xf32>
    %209 = vector.shape_cast %208 : vector<1x8x384xf32> to vector<8x384xf32>
    %210 = vector.extract_strided_slice %209 {offsets = [0, 0], sizes = [8, 128], strides = [1, 1]} : vector<8x384xf32> to vector<8x128xf32>
    %211 = vector.extract_strided_slice %206 {offsets = [0, 0], sizes = [8, 128], strides = [1, 1]} : vector<8x384xf32> to vector<8x128xf32>
    %212 = arith.addf %210, %211 : vector<8x128xf32>
    %213 = arith.negf %212 : vector<8x128xf32>
    %214 = math.exp %213 : vector<8x128xf32>
    %cst_57 = arith.constant 1.000000e+00 : f32
    %215 = vector.broadcast %cst_57 : f32 to vector<8x128xf32>
    %216 = arith.addf %215, %214 : vector<8x128xf32>
    %217 = arith.divf %215, %216 : vector<8x128xf32>
    %218 = vector.extract_strided_slice %209 {offsets = [0, 128], sizes = [8, 128], strides = [1, 1]} : vector<8x384xf32> to vector<8x128xf32>
    %219 = vector.extract_strided_slice %206 {offsets = [0, 128], sizes = [8, 128], strides = [1, 1]} : vector<8x384xf32> to vector<8x128xf32>
    %220 = arith.addf %218, %219 : vector<8x128xf32>
    %221 = arith.negf %220 : vector<8x128xf32>
    %222 = math.exp %221 : vector<8x128xf32>
    %cst_58 = arith.constant 1.000000e+00 : f32
    %223 = vector.broadcast %cst_58 : f32 to vector<8x128xf32>
    %224 = arith.addf %223, %222 : vector<8x128xf32>
    %225 = arith.divf %223, %224 : vector<8x128xf32>
    %226 = vector.extract_strided_slice %209 {offsets = [0, 256], sizes = [8, 128], strides = [1, 1]} : vector<8x384xf32> to vector<8x128xf32>
    %227 = vector.extract_strided_slice %206 {offsets = [0, 256], sizes = [8, 128], strides = [1, 1]} : vector<8x384xf32> to vector<8x128xf32>
    %228 = arith.mulf %217, %227 : vector<8x128xf32>
    %229 = arith.addf %226, %228 : vector<8x128xf32>
    %230 = math.tanh %229 : vector<8x128xf32>
    %cst_59 = arith.constant 1.000000e+00 : f32
    %231 = vector.broadcast %cst_59 : f32 to vector<8x128xf32>
    %232 = arith.subf %231, %225 : vector<8x128xf32>
    %233 = arith.mulf %232, %230 : vector<8x128xf32>
    %234 = arith.mulf %225, %197 : vector<8x128xf32>
    %235 = arith.addf %233, %234 : vector<8x128xf32>
    %236 = arith.truncf %235 : vector<8x128xf32> to vector<8x128xbf16>
    %237 = arith.index_cast %c5_i32 : i32 to index
    %c0_60 = arith.constant 0 : index
    %c0_61 = arith.constant 0 : index
    %238 = vector.load %arg14[%237, %c0_60, %c0_61] : memref<8x8x128xbf16, #tpu.memory_space<vmem>>, vector<1x8x128xbf16>
    %239 = vector.shape_cast %238 : vector<1x8x128xbf16> to vector<8x128xbf16>
    %240 = vector.shape_cast %236 : vector<8x128xbf16> to vector<1x8x128xbf16>
    tpu.vector_store %arg14[%237, %c0_60, %c0_61], %240 {strides = array<i32>} : memref<8x8x128xbf16, #tpu.memory_space<vmem>>, vector<1x8x128xbf16>,
    %c6_i32 = arith.constant 6 : i32
    %241 = arith.truncf %235 : vector<8x128xf32> to vector<8x128xbf16>
    %cst_62 = arith.constant dense<0.000000e+00> : vector<8x384xf32>
    %242 = tpu.matmul %241, %10, %cst_62 {dimension_numbers = #tpu.dot_dimension_numbers<[1], [0], [0], [1], [0, 0, 1, 1], [], []>} : vector<8x128xbf16>, vector<128x384xbf16>, vector<8x384xf32> -> vector<8x384xf32>
    %243 = vector.broadcast %11 : vector<1x384xf32> to vector<8x384xf32>
    %244 = arith.addf %242, %243 : vector<8x384xf32>
    %245 = arith.index_cast %c6_i32 : i32 to index
    %c0_63 = arith.constant 0 : index
    %c0_64 = arith.constant 0 : index
    %246 = vector.load %arg13[%245, %c0_63, %c0_64] : memref<8x8x384xf32, #tpu.memory_space<vmem>>, vector<1x8x384xf32>
    %247 = vector.shape_cast %246 : vector<1x8x384xf32> to vector<8x384xf32>
    %248 = vector.extract_strided_slice %247 {offsets = [0, 0], sizes = [8, 128], strides = [1, 1]} : vector<8x384xf32> to vector<8x128xf32>
    %249 = vector.extract_strided_slice %244 {offsets = [0, 0], sizes = [8, 128], strides = [1, 1]} : vector<8x384xf32> to vector<8x128xf32>
    %250 = arith.addf %248, %249 : vector<8x128xf32>
    %251 = arith.negf %250 : vector<8x128xf32>
    %252 = math.exp %251 : vector<8x128xf32>
    %cst_65 = arith.constant 1.000000e+00 : f32
    %253 = vector.broadcast %cst_65 : f32 to vector<8x128xf32>
    %254 = arith.addf %253, %252 : vector<8x128xf32>
    %255 = arith.divf %253, %254 : vector<8x128xf32>
    %256 = vector.extract_strided_slice %247 {offsets = [0, 128], sizes = [8, 128], strides = [1, 1]} : vector<8x384xf32> to vector<8x128xf32>
    %257 = vector.extract_strided_slice %244 {offsets = [0, 128], sizes = [8, 128], strides = [1, 1]} : vector<8x384xf32> to vector<8x128xf32>
    %258 = arith.addf %256, %257 : vector<8x128xf32>
    %259 = arith.negf %258 : vector<8x128xf32>
    %260 = math.exp %259 : vector<8x128xf32>
    %cst_66 = arith.constant 1.000000e+00 : f32
    %261 = vector.broadcast %cst_66 : f32 to vector<8x128xf32>
    %262 = arith.addf %261, %260 : vector<8x128xf32>
    %263 = arith.divf %261, %262 : vector<8x128xf32>
    %264 = vector.extract_strided_slice %247 {offsets = [0, 256], sizes = [8, 128], strides = [1, 1]} : vector<8x384xf32> to vector<8x128xf32>
    %265 = vector.extract_strided_slice %244 {offsets = [0, 256], sizes = [8, 128], strides = [1, 1]} : vector<8x384xf32> to vector<8x128xf32>
    %266 = arith.mulf %255, %265 : vector<8x128xf32>
    %267 = arith.addf %264, %266 : vector<8x128xf32>
    %268 = math.tanh %267 : vector<8x128xf32>
    %cst_67 = arith.constant 1.000000e+00 : f32
    %269 = vector.broadcast %cst_67 : f32 to vector<8x128xf32>
    %270 = arith.subf %269, %263 : vector<8x128xf32>
    %271 = arith.mulf %270, %268 : vector<8x128xf32>
    %272 = arith.mulf %263, %235 : vector<8x128xf32>
    %273 = arith.addf %271, %272 : vector<8x128xf32>
    %274 = arith.truncf %273 : vector<8x128xf32> to vector<8x128xbf16>
    %275 = arith.index_cast %c6_i32 : i32 to index
    %c0_68 = arith.constant 0 : index
    %c0_69 = arith.constant 0 : index
    %276 = vector.load %arg14[%275, %c0_68, %c0_69] : memref<8x8x128xbf16, #tpu.memory_space<vmem>>, vector<1x8x128xbf16>
    %277 = vector.shape_cast %276 : vector<1x8x128xbf16> to vector<8x128xbf16>
    %278 = vector.shape_cast %274 : vector<8x128xbf16> to vector<1x8x128xbf16>
    tpu.vector_store %arg14[%275, %c0_68, %c0_69], %278 {strides = array<i32>} : memref<8x8x128xbf16, #tpu.memory_space<vmem>>, vector<1x8x128xbf16>,
    %c7_i32 = arith.constant 7 : i32
    %279 = arith.truncf %273 : vector<8x128xf32> to vector<8x128xbf16>
    %cst_70 = arith.constant dense<0.000000e+00> : vector<8x384xf32>
    %280 = tpu.matmul %279, %10, %cst_70 {dimension_numbers = #tpu.dot_dimension_numbers<[1], [0], [0], [1], [0, 0, 1, 1], [], []>} : vector<8x128xbf16>, vector<128x384xbf16>, vector<8x384xf32> -> vector<8x384xf32>
    %281 = vector.broadcast %11 : vector<1x384xf32> to vector<8x384xf32>
    %282 = arith.addf %280, %281 : vector<8x384xf32>
    %283 = arith.index_cast %c7_i32 : i32 to index
    %c0_71 = arith.constant 0 : index
    %c0_72 = arith.constant 0 : index
    %284 = vector.load %arg13[%283, %c0_71, %c0_72] : memref<8x8x384xf32, #tpu.memory_space<vmem>>, vector<1x8x384xf32>
    %285 = vector.shape_cast %284 : vector<1x8x384xf32> to vector<8x384xf32>
    %286 = vector.extract_strided_slice %285 {offsets = [0, 0], sizes = [8, 128], strides = [1, 1]} : vector<8x384xf32> to vector<8x128xf32>
    %287 = vector.extract_strided_slice %282 {offsets = [0, 0], sizes = [8, 128], strides = [1, 1]} : vector<8x384xf32> to vector<8x128xf32>
    %288 = arith.addf %286, %287 : vector<8x128xf32>
    %289 = arith.negf %288 : vector<8x128xf32>
    %290 = math.exp %289 : vector<8x128xf32>
    %cst_73 = arith.constant 1.000000e+00 : f32
    %291 = vector.broadcast %cst_73 : f32 to vector<8x128xf32>
    %292 = arith.addf %291, %290 : vector<8x128xf32>
    %293 = arith.divf %291, %292 : vector<8x128xf32>
    %294 = vector.extract_strided_slice %285 {offsets = [0, 128], sizes = [8, 128], strides = [1, 1]} : vector<8x384xf32> to vector<8x128xf32>
    %295 = vector.extract_strided_slice %282 {offsets = [0, 128], sizes = [8, 128], strides = [1, 1]} : vector<8x384xf32> to vector<8x128xf32>
    %296 = arith.addf %294, %295 : vector<8x128xf32>
    %297 = arith.negf %296 : vector<8x128xf32>
    %298 = math.exp %297 : vector<8x128xf32>
    %cst_74 = arith.constant 1.000000e+00 : f32
    %299 = vector.broadcast %cst_74 : f32 to vector<8x128xf32>
    %300 = arith.addf %299, %298 : vector<8x128xf32>
    %301 = arith.divf %299, %300 : vector<8x128xf32>
    %302 = vector.extract_strided_slice %285 {offsets = [0, 256], sizes = [8, 128], strides = [1, 1]} : vector<8x384xf32> to vector<8x128xf32>
    %303 = vector.extract_strided_slice %282 {offsets = [0, 256], sizes = [8, 128], strides = [1, 1]} : vector<8x384xf32> to vector<8x128xf32>
    %304 = arith.mulf %293, %303 : vector<8x128xf32>
    %305 = arith.addf %302, %304 : vector<8x128xf32>
    %306 = math.tanh %305 : vector<8x128xf32>
    %cst_75 = arith.constant 1.000000e+00 : f32
    %307 = vector.broadcast %cst_75 : f32 to vector<8x128xf32>
    %308 = arith.subf %307, %301 : vector<8x128xf32>
    %309 = arith.mulf %308, %306 : vector<8x128xf32>
    %310 = arith.mulf %301, %273 : vector<8x128xf32>
    %311 = arith.addf %309, %310 : vector<8x128xf32>
    %312 = arith.truncf %311 : vector<8x128xf32> to vector<8x128xbf16>
    %313 = arith.index_cast %c7_i32 : i32 to index
    %c0_76 = arith.constant 0 : index
    %c0_77 = arith.constant 0 : index
    %314 = vector.load %arg14[%313, %c0_76, %c0_77] : memref<8x8x128xbf16, #tpu.memory_space<vmem>>, vector<1x8x128xbf16>
    %315 = vector.shape_cast %314 : vector<1x8x128xbf16> to vector<8x128xbf16>
    %316 = vector.shape_cast %312 : vector<8x128xbf16> to vector<1x8x128xbf16>
    tpu.vector_store %arg14[%313, %c0_76, %c0_77], %316 {strides = array<i32>} : memref<8x8x128xbf16, #tpu.memory_space<vmem>>, vector<1x8x128xbf16>,
    %c8_i32 = arith.constant 8 : i32
    %c0_78 = arith.constant 0 : index
    %c0_79 = arith.constant 0 : index
    %c0_80 = arith.constant 0 : index
    %317 = vector.load %arg14[%c0_78, %c0_79, %c0_80] : memref<8x8x128xbf16, #tpu.memory_space<vmem>>, vector<8x8x128xbf16>
    %318 = vector.shape_cast %317 : vector<8x8x128xbf16> to vector<64x128xbf16>
    %c0_81 = arith.constant 0 : index
    %c0_82 = arith.constant 0 : index
    %319 = vector.load %arg6[%c0_81, %c0_82] : memref<128x384xbf16, #tpu.memory_space<vmem>>, vector<128x384xbf16>
    %cst_83 = arith.constant dense<0.000000e+00> : vector<64x384xf32>
    %320 = tpu.matmul %318, %319, %cst_83 {dimension_numbers = #tpu.dot_dimension_numbers<[1], [0], [0], [1], [0, 0, 1, 1], [], []>} : vector<64x128xbf16>, vector<128x384xbf16>, vector<64x384xf32> -> vector<64x384xf32>
    %c0_84 = arith.constant 0 : index
    %c0_85 = arith.constant 0 : index
    %321 = vector.load %arg8[%c0_84, %c0_85] : memref<1x384xf32, #tpu.memory_space<vmem>>, vector<1x384xf32>
    %322 = vector.broadcast %321 : vector<1x384xf32> to vector<64x384xf32>
    %323 = arith.addf %320, %322 : vector<64x384xf32>
    %324 = vector.shape_cast %323 : vector<64x384xf32> to vector<8x8x384xf32>
    %c0_86 = arith.constant 0 : index
    %c0_87 = arith.constant 0 : index
    %c0_88 = arith.constant 0 : index
    %325 = vector.load %arg13[%c0_86, %c0_87, %c0_88] : memref<8x8x384xf32, #tpu.memory_space<vmem>>, vector<8x8x384xf32>
    tpu.vector_store %arg13[%c0_86, %c0_87, %c0_88], %324 {strides = array<i32>} : memref<8x8x384xf32, #tpu.memory_space<vmem>>, vector<8x8x384xf32>,
    %c0_89 = arith.constant 0 : index
    %c0_90 = arith.constant 0 : index
    %326 = vector.load %arg7[%c0_89, %c0_90] : memref<128x384xbf16, #tpu.memory_space<vmem>>, vector<128x384xbf16>
    %c0_91 = arith.constant 0 : index
    %c0_92 = arith.constant 0 : index
    %327 = vector.load %arg9[%c0_91, %c0_92] : memref<1x384xf32, #tpu.memory_space<vmem>>, vector<1x384xf32>
    %cst_93 = arith.constant 0.000000e+00 : f32
    %328 = vector.broadcast %cst_93 : f32 to vector<8x128xf32>
    %c0_i32_94 = arith.constant 0 : i32
    %329 = arith.truncf %328 : vector<8x128xf32> to vector<8x128xbf16>
    %cst_95 = arith.constant dense<0.000000e+00> : vector<8x384xf32>
    %330 = tpu.matmul %329, %326, %cst_95 {dimension_numbers = #tpu.dot_dimension_numbers<[1], [0], [0], [1], [0, 0, 1, 1], [], []>} : vector<8x128xbf16>, vector<128x384xbf16>, vector<8x384xf32> -> vector<8x384xf32>
    %331 = vector.broadcast %327 : vector<1x384xf32> to vector<8x384xf32>
    %332 = arith.addf %330, %331 : vector<8x384xf32>
    %333 = arith.index_cast %c0_i32_94 : i32 to index
    %c0_96 = arith.constant 0 : index
    %c0_97 = arith.constant 0 : index
    %334 = vector.load %arg13[%333, %c0_96, %c0_97] : memref<8x8x384xf32, #tpu.memory_space<vmem>>, vector<1x8x384xf32>
    %335 = vector.shape_cast %334 : vector<1x8x384xf32> to vector<8x384xf32>
    %336 = vector.extract_strided_slice %335 {offsets = [0, 0], sizes = [8, 128], strides = [1, 1]} : vector<8x384xf32> to vector<8x128xf32>
    %337 = vector.extract_strided_slice %332 {offsets = [0, 0], sizes = [8, 128], strides = [1, 1]} : vector<8x384xf32> to vector<8x128xf32>
    %338 = arith.addf %336, %337 : vector<8x128xf32>
    %339 = arith.negf %338 : vector<8x128xf32>
    %340 = math.exp %339 : vector<8x128xf32>
    %cst_98 = arith.constant 1.000000e+00 : f32
    %341 = vector.broadcast %cst_98 : f32 to vector<8x128xf32>
    %342 = arith.addf %341, %340 : vector<8x128xf32>
    %343 = arith.divf %341, %342 : vector<8x128xf32>
    %344 = vector.extract_strided_slice %335 {offsets = [0, 128], sizes = [8, 128], strides = [1, 1]} : vector<8x384xf32> to vector<8x128xf32>
    %345 = vector.extract_strided_slice %332 {offsets = [0, 128], sizes = [8, 128], strides = [1, 1]} : vector<8x384xf32> to vector<8x128xf32>
    %346 = arith.addf %344, %345 : vector<8x128xf32>
    %347 = arith.negf %346 : vector<8x128xf32>
    %348 = math.exp %347 : vector<8x128xf32>
    %cst_99 = arith.constant 1.000000e+00 : f32
    %349 = vector.broadcast %cst_99 : f32 to vector<8x128xf32>
    %350 = arith.addf %349, %348 : vector<8x128xf32>
    %351 = arith.divf %349, %350 : vector<8x128xf32>
    %352 = vector.extract_strided_slice %335 {offsets = [0, 256], sizes = [8, 128], strides = [1, 1]} : vector<8x384xf32> to vector<8x128xf32>
    %353 = vector.extract_strided_slice %332 {offsets = [0, 256], sizes = [8, 128], strides = [1, 1]} : vector<8x384xf32> to vector<8x128xf32>
    %354 = arith.mulf %343, %353 : vector<8x128xf32>
    %355 = arith.addf %352, %354 : vector<8x128xf32>
    %356 = math.tanh %355 : vector<8x128xf32>
    %cst_100 = arith.constant 1.000000e+00 : f32
    %357 = vector.broadcast %cst_100 : f32 to vector<8x128xf32>
    %358 = arith.subf %357, %351 : vector<8x128xf32>
    %359 = arith.mulf %358, %356 : vector<8x128xf32>
    %360 = arith.mulf %351, %328 : vector<8x128xf32>
    %361 = arith.addf %359, %360 : vector<8x128xf32>
    %c1_i32_101 = arith.constant 1 : i32
    %362 = arith.truncf %361 : vector<8x128xf32> to vector<8x128xbf16>
    %cst_102 = arith.constant dense<0.000000e+00> : vector<8x384xf32>
    %363 = tpu.matmul %362, %326, %cst_102 {dimension_numbers = #tpu.dot_dimension_numbers<[1], [0], [0], [1], [0, 0, 1, 1], [], []>} : vector<8x128xbf16>, vector<128x384xbf16>, vector<8x384xf32> -> vector<8x384xf32>
    %364 = vector.broadcast %327 : vector<1x384xf32> to vector<8x384xf32>
    %365 = arith.addf %363, %364 : vector<8x384xf32>
    %366 = arith.index_cast %c1_i32_101 : i32 to index
    %c0_103 = arith.constant 0 : index
    %c0_104 = arith.constant 0 : index
    %367 = vector.load %arg13[%366, %c0_103, %c0_104] : memref<8x8x384xf32, #tpu.memory_space<vmem>>, vector<1x8x384xf32>
    %368 = vector.shape_cast %367 : vector<1x8x384xf32> to vector<8x384xf32>
    %369 = vector.extract_strided_slice %368 {offsets = [0, 0], sizes = [8, 128], strides = [1, 1]} : vector<8x384xf32> to vector<8x128xf32>
    %370 = vector.extract_strided_slice %365 {offsets = [0, 0], sizes = [8, 128], strides = [1, 1]} : vector<8x384xf32> to vector<8x128xf32>
    %371 = arith.addf %369, %370 : vector<8x128xf32>
    %372 = arith.negf %371 : vector<8x128xf32>
    %373 = math.exp %372 : vector<8x128xf32>
    %cst_105 = arith.constant 1.000000e+00 : f32
    %374 = vector.broadcast %cst_105 : f32 to vector<8x128xf32>
    %375 = arith.addf %374, %373 : vector<8x128xf32>
    %376 = arith.divf %374, %375 : vector<8x128xf32>
    %377 = vector.extract_strided_slice %368 {offsets = [0, 128], sizes = [8, 128], strides = [1, 1]} : vector<8x384xf32> to vector<8x128xf32>
    %378 = vector.extract_strided_slice %365 {offsets = [0, 128], sizes = [8, 128], strides = [1, 1]} : vector<8x384xf32> to vector<8x128xf32>
    %379 = arith.addf %377, %378 : vector<8x128xf32>
    %380 = arith.negf %379 : vector<8x128xf32>
    %381 = math.exp %380 : vector<8x128xf32>
    %cst_106 = arith.constant 1.000000e+00 : f32
    %382 = vector.broadcast %cst_106 : f32 to vector<8x128xf32>
    %383 = arith.addf %382, %381 : vector<8x128xf32>
    %384 = arith.divf %382, %383 : vector<8x128xf32>
    %385 = vector.extract_strided_slice %368 {offsets = [0, 256], sizes = [8, 128], strides = [1, 1]} : vector<8x384xf32> to vector<8x128xf32>
    %386 = vector.extract_strided_slice %365 {offsets = [0, 256], sizes = [8, 128], strides = [1, 1]} : vector<8x384xf32> to vector<8x128xf32>
    %387 = arith.mulf %376, %386 : vector<8x128xf32>
    %388 = arith.addf %385, %387 : vector<8x128xf32>
    %389 = math.tanh %388 : vector<8x128xf32>
    %cst_107 = arith.constant 1.000000e+00 : f32
    %390 = vector.broadcast %cst_107 : f32 to vector<8x128xf32>
    %391 = arith.subf %390, %384 : vector<8x128xf32>
    %392 = arith.mulf %391, %389 : vector<8x128xf32>
    %393 = arith.mulf %384, %361 : vector<8x128xf32>
    %394 = arith.addf %392, %393 : vector<8x128xf32>
    %c2_i32_108 = arith.constant 2 : i32
    %395 = arith.truncf %394 : vector<8x128xf32> to vector<8x128xbf16>
    %cst_109 = arith.constant dense<0.000000e+00> : vector<8x384xf32>
    %396 = tpu.matmul %395, %326, %cst_109 {dimension_numbers = #tpu.dot_dimension_numbers<[1], [0], [0], [1], [0, 0, 1, 1], [], []>} : vector<8x128xbf16>, vector<128x384xbf16>, vector<8x384xf32> -> vector<8x384xf32>
    %397 = vector.broadcast %327 : vector<1x384xf32> to vector<8x384xf32>
    %398 = arith.addf %396, %397 : vector<8x384xf32>
    %399 = arith.index_cast %c2_i32_108 : i32 to index
    %c0_110 = arith.constant 0 : index
    %c0_111 = arith.constant 0 : index
    %400 = vector.load %arg13[%399, %c0_110, %c0_111] : memref<8x8x384xf32, #tpu.memory_space<vmem>>, vector<1x8x384xf32>
    %401 = vector.shape_cast %400 : vector<1x8x384xf32> to vector<8x384xf32>
    %402 = vector.extract_strided_slice %401 {offsets = [0, 0], sizes = [8, 128], strides = [1, 1]} : vector<8x384xf32> to vector<8x128xf32>
    %403 = vector.extract_strided_slice %398 {offsets = [0, 0], sizes = [8, 128], strides = [1, 1]} : vector<8x384xf32> to vector<8x128xf32>
    %404 = arith.addf %402, %403 : vector<8x128xf32>
    %405 = arith.negf %404 : vector<8x128xf32>
    %406 = math.exp %405 : vector<8x128xf32>
    %cst_112 = arith.constant 1.000000e+00 : f32
    %407 = vector.broadcast %cst_112 : f32 to vector<8x128xf32>
    %408 = arith.addf %407, %406 : vector<8x128xf32>
    %409 = arith.divf %407, %408 : vector<8x128xf32>
    %410 = vector.extract_strided_slice %401 {offsets = [0, 128], sizes = [8, 128], strides = [1, 1]} : vector<8x384xf32> to vector<8x128xf32>
    %411 = vector.extract_strided_slice %398 {offsets = [0, 128], sizes = [8, 128], strides = [1, 1]} : vector<8x384xf32> to vector<8x128xf32>
    %412 = arith.addf %410, %411 : vector<8x128xf32>
    %413 = arith.negf %412 : vector<8x128xf32>
    %414 = math.exp %413 : vector<8x128xf32>
    %cst_113 = arith.constant 1.000000e+00 : f32
    %415 = vector.broadcast %cst_113 : f32 to vector<8x128xf32>
    %416 = arith.addf %415, %414 : vector<8x128xf32>
    %417 = arith.divf %415, %416 : vector<8x128xf32>
    %418 = vector.extract_strided_slice %401 {offsets = [0, 256], sizes = [8, 128], strides = [1, 1]} : vector<8x384xf32> to vector<8x128xf32>
    %419 = vector.extract_strided_slice %398 {offsets = [0, 256], sizes = [8, 128], strides = [1, 1]} : vector<8x384xf32> to vector<8x128xf32>
    %420 = arith.mulf %409, %419 : vector<8x128xf32>
    %421 = arith.addf %418, %420 : vector<8x128xf32>
    %422 = math.tanh %421 : vector<8x128xf32>
    %cst_114 = arith.constant 1.000000e+00 : f32
    %423 = vector.broadcast %cst_114 : f32 to vector<8x128xf32>
    %424 = arith.subf %423, %417 : vector<8x128xf32>
    %425 = arith.mulf %424, %422 : vector<8x128xf32>
    %426 = arith.mulf %417, %394 : vector<8x128xf32>
    %427 = arith.addf %425, %426 : vector<8x128xf32>
    %c3_i32_115 = arith.constant 3 : i32
    %428 = arith.truncf %427 : vector<8x128xf32> to vector<8x128xbf16>
    %cst_116 = arith.constant dense<0.000000e+00> : vector<8x384xf32>
    %429 = tpu.matmul %428, %326, %cst_116 {dimension_numbers = #tpu.dot_dimension_numbers<[1], [0], [0], [1], [0, 0, 1, 1], [], []>} : vector<8x128xbf16>, vector<128x384xbf16>, vector<8x384xf32> -> vector<8x384xf32>
    %430 = vector.broadcast %327 : vector<1x384xf32> to vector<8x384xf32>
    %431 = arith.addf %429, %430 : vector<8x384xf32>
    %432 = arith.index_cast %c3_i32_115 : i32 to index
    %c0_117 = arith.constant 0 : index
    %c0_118 = arith.constant 0 : index
    %433 = vector.load %arg13[%432, %c0_117, %c0_118] : memref<8x8x384xf32, #tpu.memory_space<vmem>>, vector<1x8x384xf32>
    %434 = vector.shape_cast %433 : vector<1x8x384xf32> to vector<8x384xf32>
    %435 = vector.extract_strided_slice %434 {offsets = [0, 0], sizes = [8, 128], strides = [1, 1]} : vector<8x384xf32> to vector<8x128xf32>
    %436 = vector.extract_strided_slice %431 {offsets = [0, 0], sizes = [8, 128], strides = [1, 1]} : vector<8x384xf32> to vector<8x128xf32>
    %437 = arith.addf %435, %436 : vector<8x128xf32>
    %438 = arith.negf %437 : vector<8x128xf32>
    %439 = math.exp %438 : vector<8x128xf32>
    %cst_119 = arith.constant 1.000000e+00 : f32
    %440 = vector.broadcast %cst_119 : f32 to vector<8x128xf32>
    %441 = arith.addf %440, %439 : vector<8x128xf32>
    %442 = arith.divf %440, %441 : vector<8x128xf32>
    %443 = vector.extract_strided_slice %434 {offsets = [0, 128], sizes = [8, 128], strides = [1, 1]} : vector<8x384xf32> to vector<8x128xf32>
    %444 = vector.extract_strided_slice %431 {offsets = [0, 128], sizes = [8, 128], strides = [1, 1]} : vector<8x384xf32> to vector<8x128xf32>
    %445 = arith.addf %443, %444 : vector<8x128xf32>
    %446 = arith.negf %445 : vector<8x128xf32>
    %447 = math.exp %446 : vector<8x128xf32>
    %cst_120 = arith.constant 1.000000e+00 : f32
    %448 = vector.broadcast %cst_120 : f32 to vector<8x128xf32>
    %449 = arith.addf %448, %447 : vector<8x128xf32>
    %450 = arith.divf %448, %449 : vector<8x128xf32>
    %451 = vector.extract_strided_slice %434 {offsets = [0, 256], sizes = [8, 128], strides = [1, 1]} : vector<8x384xf32> to vector<8x128xf32>
    %452 = vector.extract_strided_slice %431 {offsets = [0, 256], sizes = [8, 128], strides = [1, 1]} : vector<8x384xf32> to vector<8x128xf32>
    %453 = arith.mulf %442, %452 : vector<8x128xf32>
    %454 = arith.addf %451, %453 : vector<8x128xf32>
    %455 = math.tanh %454 : vector<8x128xf32>
    %cst_121 = arith.constant 1.000000e+00 : f32
    %456 = vector.broadcast %cst_121 : f32 to vector<8x128xf32>
    %457 = arith.subf %456, %450 : vector<8x128xf32>
    %458 = arith.mulf %457, %455 : vector<8x128xf32>
    %459 = arith.mulf %450, %427 : vector<8x128xf32>
    %460 = arith.addf %458, %459 : vector<8x128xf32>
    %c4_i32_122 = arith.constant 4 : i32
    %461 = arith.truncf %460 : vector<8x128xf32> to vector<8x128xbf16>
    %cst_123 = arith.constant dense<0.000000e+00> : vector<8x384xf32>
    %462 = tpu.matmul %461, %326, %cst_123 {dimension_numbers = #tpu.dot_dimension_numbers<[1], [0], [0], [1], [0, 0, 1, 1], [], []>} : vector<8x128xbf16>, vector<128x384xbf16>, vector<8x384xf32> -> vector<8x384xf32>
    %463 = vector.broadcast %327 : vector<1x384xf32> to vector<8x384xf32>
    %464 = arith.addf %462, %463 : vector<8x384xf32>
    %465 = arith.index_cast %c4_i32_122 : i32 to index
    %c0_124 = arith.constant 0 : index
    %c0_125 = arith.constant 0 : index
    %466 = vector.load %arg13[%465, %c0_124, %c0_125] : memref<8x8x384xf32, #tpu.memory_space<vmem>>, vector<1x8x384xf32>
    %467 = vector.shape_cast %466 : vector<1x8x384xf32> to vector<8x384xf32>
    %468 = vector.extract_strided_slice %467 {offsets = [0, 0], sizes = [8, 128], strides = [1, 1]} : vector<8x384xf32> to vector<8x128xf32>
    %469 = vector.extract_strided_slice %464 {offsets = [0, 0], sizes = [8, 128], strides = [1, 1]} : vector<8x384xf32> to vector<8x128xf32>
    %470 = arith.addf %468, %469 : vector<8x128xf32>
    %471 = arith.negf %470 : vector<8x128xf32>
    %472 = math.exp %471 : vector<8x128xf32>
    %cst_126 = arith.constant 1.000000e+00 : f32
    %473 = vector.broadcast %cst_126 : f32 to vector<8x128xf32>
    %474 = arith.addf %473, %472 : vector<8x128xf32>
    %475 = arith.divf %473, %474 : vector<8x128xf32>
    %476 = vector.extract_strided_slice %467 {offsets = [0, 128], sizes = [8, 128], strides = [1, 1]} : vector<8x384xf32> to vector<8x128xf32>
    %477 = vector.extract_strided_slice %464 {offsets = [0, 128], sizes = [8, 128], strides = [1, 1]} : vector<8x384xf32> to vector<8x128xf32>
    %478 = arith.addf %476, %477 : vector<8x128xf32>
    %479 = arith.negf %478 : vector<8x128xf32>
    %480 = math.exp %479 : vector<8x128xf32>
    %cst_127 = arith.constant 1.000000e+00 : f32
    %481 = vector.broadcast %cst_127 : f32 to vector<8x128xf32>
    %482 = arith.addf %481, %480 : vector<8x128xf32>
    %483 = arith.divf %481, %482 : vector<8x128xf32>
    %484 = vector.extract_strided_slice %467 {offsets = [0, 256], sizes = [8, 128], strides = [1, 1]} : vector<8x384xf32> to vector<8x128xf32>
    %485 = vector.extract_strided_slice %464 {offsets = [0, 256], sizes = [8, 128], strides = [1, 1]} : vector<8x384xf32> to vector<8x128xf32>
    %486 = arith.mulf %475, %485 : vector<8x128xf32>
    %487 = arith.addf %484, %486 : vector<8x128xf32>
    %488 = math.tanh %487 : vector<8x128xf32>
    %cst_128 = arith.constant 1.000000e+00 : f32
    %489 = vector.broadcast %cst_128 : f32 to vector<8x128xf32>
    %490 = arith.subf %489, %483 : vector<8x128xf32>
    %491 = arith.mulf %490, %488 : vector<8x128xf32>
    %492 = arith.mulf %483, %460 : vector<8x128xf32>
    %493 = arith.addf %491, %492 : vector<8x128xf32>
    %c5_i32_129 = arith.constant 5 : i32
    %494 = arith.truncf %493 : vector<8x128xf32> to vector<8x128xbf16>
    %cst_130 = arith.constant dense<0.000000e+00> : vector<8x384xf32>
    %495 = tpu.matmul %494, %326, %cst_130 {dimension_numbers = #tpu.dot_dimension_numbers<[1], [0], [0], [1], [0, 0, 1, 1], [], []>} : vector<8x128xbf16>, vector<128x384xbf16>, vector<8x384xf32> -> vector<8x384xf32>
    %496 = vector.broadcast %327 : vector<1x384xf32> to vector<8x384xf32>
    %497 = arith.addf %495, %496 : vector<8x384xf32>
    %498 = arith.index_cast %c5_i32_129 : i32 to index
    %c0_131 = arith.constant 0 : index
    %c0_132 = arith.constant 0 : index
    %499 = vector.load %arg13[%498, %c0_131, %c0_132] : memref<8x8x384xf32, #tpu.memory_space<vmem>>, vector<1x8x384xf32>
    %500 = vector.shape_cast %499 : vector<1x8x384xf32> to vector<8x384xf32>
    %501 = vector.extract_strided_slice %500 {offsets = [0, 0], sizes = [8, 128], strides = [1, 1]} : vector<8x384xf32> to vector<8x128xf32>
    %502 = vector.extract_strided_slice %497 {offsets = [0, 0], sizes = [8, 128], strides = [1, 1]} : vector<8x384xf32> to vector<8x128xf32>
    %503 = arith.addf %501, %502 : vector<8x128xf32>
    %504 = arith.negf %503 : vector<8x128xf32>
    %505 = math.exp %504 : vector<8x128xf32>
    %cst_133 = arith.constant 1.000000e+00 : f32
    %506 = vector.broadcast %cst_133 : f32 to vector<8x128xf32>
    %507 = arith.addf %506, %505 : vector<8x128xf32>
    %508 = arith.divf %506, %507 : vector<8x128xf32>
    %509 = vector.extract_strided_slice %500 {offsets = [0, 128], sizes = [8, 128], strides = [1, 1]} : vector<8x384xf32> to vector<8x128xf32>
    %510 = vector.extract_strided_slice %497 {offsets = [0, 128], sizes = [8, 128], strides = [1, 1]} : vector<8x384xf32> to vector<8x128xf32>
    %511 = arith.addf %509, %510 : vector<8x128xf32>
    %512 = arith.negf %511 : vector<8x128xf32>
    %513 = math.exp %512 : vector<8x128xf32>
    %cst_134 = arith.constant 1.000000e+00 : f32
    %514 = vector.broadcast %cst_134 : f32 to vector<8x128xf32>
    %515 = arith.addf %514, %513 : vector<8x128xf32>
    %516 = arith.divf %514, %515 : vector<8x128xf32>
    %517 = vector.extract_strided_slice %500 {offsets = [0, 256], sizes = [8, 128], strides = [1, 1]} : vector<8x384xf32> to vector<8x128xf32>
    %518 = vector.extract_strided_slice %497 {offsets = [0, 256], sizes = [8, 128], strides = [1, 1]} : vector<8x384xf32> to vector<8x128xf32>
    %519 = arith.mulf %508, %518 : vector<8x128xf32>
    %520 = arith.addf %517, %519 : vector<8x128xf32>
    %521 = math.tanh %520 : vector<8x128xf32>
    %cst_135 = arith.constant 1.000000e+00 : f32
    %522 = vector.broadcast %cst_135 : f32 to vector<8x128xf32>
    %523 = arith.subf %522, %516 : vector<8x128xf32>
    %524 = arith.mulf %523, %521 : vector<8x128xf32>
    %525 = arith.mulf %516, %493 : vector<8x128xf32>
    %526 = arith.addf %524, %525 : vector<8x128xf32>
    %c6_i32_136 = arith.constant 6 : i32
    %527 = arith.truncf %526 : vector<8x128xf32> to vector<8x128xbf16>
    %cst_137 = arith.constant dense<0.000000e+00> : vector<8x384xf32>
    %528 = tpu.matmul %527, %326, %cst_137 {dimension_numbers = #tpu.dot_dimension_numbers<[1], [0], [0], [1], [0, 0, 1, 1], [], []>} : vector<8x128xbf16>, vector<128x384xbf16>, vector<8x384xf32> -> vector<8x384xf32>
    %529 = vector.broadcast %327 : vector<1x384xf32> to vector<8x384xf32>
    %530 = arith.addf %528, %529 : vector<8x384xf32>
    %531 = arith.index_cast %c6_i32_136 : i32 to index
    %c0_138 = arith.constant 0 : index
    %c0_139 = arith.constant 0 : index
    %532 = vector.load %arg13[%531, %c0_138, %c0_139] : memref<8x8x384xf32, #tpu.memory_space<vmem>>, vector<1x8x384xf32>
    %533 = vector.shape_cast %532 : vector<1x8x384xf32> to vector<8x384xf32>
    %534 = vector.extract_strided_slice %533 {offsets = [0, 0], sizes = [8, 128], strides = [1, 1]} : vector<8x384xf32> to vector<8x128xf32>
    %535 = vector.extract_strided_slice %530 {offsets = [0, 0], sizes = [8, 128], strides = [1, 1]} : vector<8x384xf32> to vector<8x128xf32>
    %536 = arith.addf %534, %535 : vector<8x128xf32>
    %537 = arith.negf %536 : vector<8x128xf32>
    %538 = math.exp %537 : vector<8x128xf32>
    %cst_140 = arith.constant 1.000000e+00 : f32
    %539 = vector.broadcast %cst_140 : f32 to vector<8x128xf32>
    %540 = arith.addf %539, %538 : vector<8x128xf32>
    %541 = arith.divf %539, %540 : vector<8x128xf32>
    %542 = vector.extract_strided_slice %533 {offsets = [0, 128], sizes = [8, 128], strides = [1, 1]} : vector<8x384xf32> to vector<8x128xf32>
    %543 = vector.extract_strided_slice %530 {offsets = [0, 128], sizes = [8, 128], strides = [1, 1]} : vector<8x384xf32> to vector<8x128xf32>
    %544 = arith.addf %542, %543 : vector<8x128xf32>
    %545 = arith.negf %544 : vector<8x128xf32>
    %546 = math.exp %545 : vector<8x128xf32>
    %cst_141 = arith.constant 1.000000e+00 : f32
    %547 = vector.broadcast %cst_141 : f32 to vector<8x128xf32>
    %548 = arith.addf %547, %546 : vector<8x128xf32>
    %549 = arith.divf %547, %548 : vector<8x128xf32>
    %550 = vector.extract_strided_slice %533 {offsets = [0, 256], sizes = [8, 128], strides = [1, 1]} : vector<8x384xf32> to vector<8x128xf32>
    %551 = vector.extract_strided_slice %530 {offsets = [0, 256], sizes = [8, 128], strides = [1, 1]} : vector<8x384xf32> to vector<8x128xf32>
    %552 = arith.mulf %541, %551 : vector<8x128xf32>
    %553 = arith.addf %550, %552 : vector<8x128xf32>
    %554 = math.tanh %553 : vector<8x128xf32>
    %cst_142 = arith.constant 1.000000e+00 : f32
    %555 = vector.broadcast %cst_142 : f32 to vector<8x128xf32>
    %556 = arith.subf %555, %549 : vector<8x128xf32>
    %557 = arith.mulf %556, %554 : vector<8x128xf32>
    %558 = arith.mulf %549, %526 : vector<8x128xf32>
    %559 = arith.addf %557, %558 : vector<8x128xf32>
    %c7_i32_143 = arith.constant 7 : i32
    %560 = arith.truncf %559 : vector<8x128xf32> to vector<8x128xbf16>
    %cst_144 = arith.constant dense<0.000000e+00> : vector<8x384xf32>
    %561 = tpu.matmul %560, %326, %cst_144 {dimension_numbers = #tpu.dot_dimension_numbers<[1], [0], [0], [1], [0, 0, 1, 1], [], []>} : vector<8x128xbf16>, vector<128x384xbf16>, vector<8x384xf32> -> vector<8x384xf32>
    %562 = vector.broadcast %327 : vector<1x384xf32> to vector<8x384xf32>
    %563 = arith.addf %561, %562 : vector<8x384xf32>
    %564 = arith.index_cast %c7_i32_143 : i32 to index
    %c0_145 = arith.constant 0 : index
    %c0_146 = arith.constant 0 : index
    %565 = vector.load %arg13[%564, %c0_145, %c0_146] : memref<8x8x384xf32, #tpu.memory_space<vmem>>, vector<1x8x384xf32>
    %566 = vector.shape_cast %565 : vector<1x8x384xf32> to vector<8x384xf32>
    %567 = vector.extract_strided_slice %566 {offsets = [0, 0], sizes = [8, 128], strides = [1, 1]} : vector<8x384xf32> to vector<8x128xf32>
    %568 = vector.extract_strided_slice %563 {offsets = [0, 0], sizes = [8, 128], strides = [1, 1]} : vector<8x384xf32> to vector<8x128xf32>
    %569 = arith.addf %567, %568 : vector<8x128xf32>
    %570 = arith.negf %569 : vector<8x128xf32>
    %571 = math.exp %570 : vector<8x128xf32>
    %cst_147 = arith.constant 1.000000e+00 : f32
    %572 = vector.broadcast %cst_147 : f32 to vector<8x128xf32>
    %573 = arith.addf %572, %571 : vector<8x128xf32>
    %574 = arith.divf %572, %573 : vector<8x128xf32>
    %575 = vector.extract_strided_slice %566 {offsets = [0, 128], sizes = [8, 128], strides = [1, 1]} : vector<8x384xf32> to vector<8x128xf32>
    %576 = vector.extract_strided_slice %563 {offsets = [0, 128], sizes = [8, 128], strides = [1, 1]} : vector<8x384xf32> to vector<8x128xf32>
    %577 = arith.addf %575, %576 : vector<8x128xf32>
    %578 = arith.negf %577 : vector<8x128xf32>
    %579 = math.exp %578 : vector<8x128xf32>
    %cst_148 = arith.constant 1.000000e+00 : f32
    %580 = vector.broadcast %cst_148 : f32 to vector<8x128xf32>
    %581 = arith.addf %580, %579 : vector<8x128xf32>
    %582 = arith.divf %580, %581 : vector<8x128xf32>
    %583 = vector.extract_strided_slice %566 {offsets = [0, 256], sizes = [8, 128], strides = [1, 1]} : vector<8x384xf32> to vector<8x128xf32>
    %584 = vector.extract_strided_slice %563 {offsets = [0, 256], sizes = [8, 128], strides = [1, 1]} : vector<8x384xf32> to vector<8x128xf32>
    %585 = arith.mulf %574, %584 : vector<8x128xf32>
    %586 = arith.addf %583, %585 : vector<8x128xf32>
    %587 = math.tanh %586 : vector<8x128xf32>
    %cst_149 = arith.constant 1.000000e+00 : f32
    %588 = vector.broadcast %cst_149 : f32 to vector<8x128xf32>
    %589 = arith.subf %588, %582 : vector<8x128xf32>
    %590 = arith.mulf %589, %587 : vector<8x128xf32>
    %591 = arith.mulf %582, %559 : vector<8x128xf32>
    %592 = arith.addf %590, %591 : vector<8x128xf32>
    %c8_i32_150 = arith.constant 8 : i32
    %593 = arith.truncf %592 : vector<8x128xf32> to vector<8x128xbf16>
    %c0_151 = arith.constant 0 : index
    %c0_152 = arith.constant 0 : index
    %594 = vector.load %arg10[%c0_151, %c0_152] : memref<128x128xbf16, #tpu.memory_space<vmem>>, vector<128x128xbf16>
    %cst_153 = arith.constant dense<0.000000e+00> : vector<8x128xf32>
    %595 = tpu.matmul %593, %594, %cst_153 {dimension_numbers = #tpu.dot_dimension_numbers<[1], [0], [0], [1], [0, 0, 1, 1], [], []>} : vector<8x128xbf16>, vector<128x128xbf16>, vector<8x128xf32> -> vector<8x128xf32>
    %c0_154 = arith.constant 0 : index
    %c0_155 = arith.constant 0 : index
    %596 = vector.load %arg11[%c0_154, %c0_155] : memref<1x128xf32, #tpu.memory_space<vmem>>, vector<1x128xf32>
    %597 = vector.broadcast %596 : vector<1x128xf32> to vector<8x128xf32>
    %598 = arith.addf %595, %597 : vector<8x128xf32>
    %c0_156 = arith.constant 0 : index
    %c0_157 = arith.constant 0 : index
    %599 = vector.load %arg12[%c0_156, %c0_157] : memref<8x128xf32, #tpu.memory_space<vmem>>, vector<8x128xf32>
    tpu.vector_store %arg12[%c0_156, %c0_157], %598 {strides = array<i32>} : memref<8x128xf32, #tpu.memory_space<vmem>>, vector<8x128xf32>,
    return
  }
  func.func @transform_0(%arg0: i32) -> (i32, i32, i32) {
    %c0_i32 = arith.constant 0 : i32
    %c0_i32_0 = arith.constant 0 : i32
    %c0_i32_1 = arith.constant 0 : i32
    return %c0_i32, %arg0, %c0_i32_0 : i32, i32, i32
  }
  func.func @transform_1(%arg0: i32) -> (i32, i32) {
    %c0_i32 = arith.constant 0 : i32
    %c0_i32_0 = arith.constant 0 : i32
    %c0_i32_1 = arith.constant 0 : i32
    return %c0_i32, %c0_i32_0 : i32, i32
  }
  func.func @transform_2(%arg0: i32) -> (i32, i32) {
    %c0_i32 = arith.constant 0 : i32
    %c0_i32_0 = arith.constant 0 : i32
    %c0_i32_1 = arith.constant 0 : i32
    return %c0_i32, %c0_i32_0 : i32, i32
  }
  func.func @transform_3(%arg0: i32) -> (i32, i32) {
    %c0_i32 = arith.constant 0 : i32
    %c0_i32_0 = arith.constant 0 : i32
    %c0_i32_1 = arith.constant 0 : i32
    return %c0_i32, %c0_i32_0 : i32, i32
  }
  func.func @transform_4(%arg0: i32) -> (i32, i32) {
    %c0_i32 = arith.constant 0 : i32
    %c0_i32_0 = arith.constant 0 : i32
    %c0_i32_1 = arith.constant 0 : i32
    return %c0_i32, %c0_i32_0 : i32, i32
  }
  func.func @transform_5(%arg0: i32) -> (i32, i32) {
    %c0_i32 = arith.constant 0 : i32
    %c0_i32_0 = arith.constant 0 : i32
    %c0_i32_1 = arith.constant 0 : i32
    return %c0_i32, %c0_i32_0 : i32, i32
  }
  func.func @transform_6(%arg0: i32) -> (i32, i32) {
    %c0_i32 = arith.constant 0 : i32
    %c0_i32_0 = arith.constant 0 : i32
    %c0_i32_1 = arith.constant 0 : i32
    return %c0_i32, %c0_i32_0 : i32, i32
  }
  func.func @transform_7(%arg0: i32) -> (i32, i32) {
    %c0_i32 = arith.constant 0 : i32
    %c0_i32_0 = arith.constant 0 : i32
    %c0_i32_1 = arith.constant 0 : i32
    return %c0_i32, %c0_i32_0 : i32, i32
  }
  func.func @transform_8(%arg0: i32) -> (i32, i32) {
    %c0_i32 = arith.constant 0 : i32
    %c0_i32_0 = arith.constant 0 : i32
    %c0_i32_1 = arith.constant 0 : i32
    return %c0_i32, %c0_i32_0 : i32, i32
  }
  func.func @transform_9(%arg0: i32) -> (i32, i32) {
    %c0_i32 = arith.constant 0 : i32
    %c0_i32_0 = arith.constant 0 : i32
    %c0_i32_1 = arith.constant 0 : i32
    return %c0_i32, %c0_i32_0 : i32, i32
  }
  func.func @transform_10(%arg0: i32) -> (i32, i32) {
    %c0_i32 = arith.constant 0 : i32
    %c0_i32_0 = arith.constant 0 : i32
    %c0_i32_1 = arith.constant 0 : i32
    return %c0_i32, %c0_i32_0 : i32, i32
  }
  func.func @transform_11(%arg0: i32) -> (i32, i32) {
    %c0_i32 = arith.constant 0 : i32
    %c0_i32_0 = arith.constant 0 : i32
    return %arg0, %c0_i32 : i32, i32
  }
}

</mosaic_0001>

<llo_original>
// kernel: tpu_custom_call.1
$region0: #{tpu_custom_call.1}
  #allocation0 [shape = 'u32[]', space=smem, size = 0x4, offset = 0x4, fixed_abs, tag = 'smem constant byte address 0x4 - core index']
  #allocation1 [shape = 'u32[144,128]{1,0:T(1,128)}', space=vmem, size = 0x12000, scoped, tag = 'internal scratch']
  #allocation2 [shape = 'f32[8,8,384]{2,1,0:T(8,128)}', space=vmem, size = 0x18000, scoped, tag = 'scratch operand']
  #allocation3 [shape = 'bf16[8,8,128]{2,1,0:T(8,128)(2,1)}', space=vmem, size = 0x4000, scoped, tag = 'scratch operand']
  %s0 = inlined_call_operand.hbm [shape: f32[8,8,128], index: 0, kind: input, shape index: {}]
  %s1 = inlined_call_operand.hbm [shape: bf16[128,384], index: 1, kind: input, shape index: {}]
  %s2 = inlined_call_operand.hbm [shape: bf16[128,384], index: 2, kind: input, shape index: {}]
  %s3 = inlined_call_operand.vmem [shape: f32[1,384], index: 3, kind: input, shape index: {}]
  %s4 = inlined_call_operand.vmem [shape: f32[1,384], index: 4, kind: input, shape index: {}]
  %s5 = inlined_call_operand.hbm [shape: bf16[128,384], index: 5, kind: input, shape index: {}]
  %s6 = inlined_call_operand.hbm [shape: bf16[128,384], index: 6, kind: input, shape index: {}]
  %s7 = inlined_call_operand.vmem [shape: f32[1,384], index: 7, kind: input, shape index: {}]
  %s8 = inlined_call_operand.vmem [shape: f32[1,384], index: 8, kind: input, shape index: {}]
  %s9 = inlined_call_operand.hbm [shape: bf16[128,128], index: 9, kind: input, shape index: {}]
  %s10 = inlined_call_operand.vmem [shape: f32[1,128], index: 10, kind: input, shape index: {}]
  %s11 = inlined_call_operand.hbm [shape: f32[8,128], index: 11, kind: output, shape index: {}]
  %s12 = sld [smem:[#allocation0]]
  $region78: #{tpu_custom_call.1} parent=0
    _
  %s14 = ssub.s32 1, %s12
  %s15 = scalar_select 0, %s14, %s12
  $region1: #{tpu_custom_call.1} parent=0
    #allocation4 [shape = 'u8[32768]{0}', space=vmem, size = 0x8000, scoped, tag = 'input window, operand 0, single buffered']
    #allocation5 [shape = 's32[1]{0}', space=sflag, size = 0x4, scoped, tag = 'scoped memory for tpu_custom_call.1']
    #allocation6 [shape = 's32[1]{0}', space=sflag, size = 0x4, scoped, tag = 'scoped memory for tpu_custom_call.1']
    #allocation7 [shape = 'u8[98304]{0}', space=vmem, size = 0x18000, scoped, tag = 'input window, operand 1, single buffered']
    #allocation8 [shape = 's32[1]{0}', space=sflag, size = 0x4, scoped, tag = 'scoped memory for tpu_custom_call.1']
    #allocation9 [shape = 'u8[98304]{0}', space=vmem, size = 0x18000, scoped, tag = 'input window, operand 2, single buffered']
    #allocation10 [shape = 'u8[98304]{0}', space=vmem, size = 0x18000, scoped, tag = 'input window, operand 5, single buffered']
    #allocation11 [shape = 's32[1]{0}', space=sflag, size = 0x4, scoped, tag = 'scoped memory for tpu_custom_call.1']
    #allocation12 [shape = 'u8[98304]{0}', space=vmem, size = 0x18000, scoped, tag = 'input window, operand 6, single buffered']
    #allocation13 [shape = 'u8[32768]{0}', space=vmem, size = 0x8000, scoped, tag = 'input window, operand 9, single buffered']
    #allocation14 [shape = 's32[1]{0}', space=sflag, size = 0x4, scoped, tag = 'scoped memory for tpu_custom_call.1']
    #allocation15 [shape = 'u8[4096]{0}', space=vmem, size = 0x1000, scoped, tag = 'output window, operand 0, single buffered']
    %16 = vsyncpa [#allocation5], 0
    %17 = vsyncpa [#allocation8], 0
    %18 = vsyncpa [#allocation11], 0
    %19 = vsyncpa [#allocation14], 0
    %20 = vsyncpa [#allocation6], 0
    // Predicated region
    $region2: #{tpu_custom_call.1} parent=1 // pred_check
      _
    $region3: #{tpu_custom_call.1} parent=1 // pred_check_branch
      %22 = sbr.rel (0) target = $region5
    $region4: #{tpu_custom_call.1} parent=1 // pred_region
      %s24 = ssub.s32 1024, 1024
      %25 = vsyncadd [#allocation5], %s24
      %s26 = sshll.u32 [#allocation4], 4
      %s27 = int_to_ptr.vmem [resolvable:$true] %s26
      %32 = dma.hbm_to_vmem [thread:$0]  %s0, 1024, %s27, [#allocation5], 128, 128, 8
    $region5: #{tpu_custom_call.1} parent=1 // pred_fallthru
      _
    // Predicated region
    $region6: #{tpu_custom_call.1} parent=1 // pred_check
      _
    $region7: #{tpu_custom_call.1} parent=1 // pred_check_branch
      %34 = sbr.rel (0) target = $region9
    $region8: #{tpu_custom_call.1} parent=1 // pred_region
      %s36 = ssub.s32 3072, 3072
      %37 = vsyncadd [#allocation8], %s36
      %s38 = sshll.u32 [#allocation7], 4
      %s39 = int_to_ptr.vmem [resolvable:$true] %s38
      %44 = dma.hbm_to_vmem [thread:$0]  %s1, 3072, %s39, [#allocation8], 192, 192, 12
    $region9: #{tpu_custom_call.1} parent=1 // pred_fallthru
      _
    // Predicated region
    $region10: #{tpu_custom_call.1} parent=1 // pred_check
      _
    $region11: #{tpu_custom_call.1} parent=1 // pred_check_branch
      %46 = sbr.rel (0) target = $region13
    $region12: #{tpu_custom_call.1} parent=1 // pred_region
      %s48 = ssub.s32 3072, 3072
      %49 = vsyncadd [#allocation8], %s48
      %s50 = sshll.u32 [#allocation9], 4
      %s51 = int_to_ptr.vmem [resolvable:$true] %s50
      %56 = dma.hbm_to_vmem [thread:$0]  %s2, 3072, %s51, [#allocation8], 192, 192, 12
    $region13: #{tpu_custom_call.1} parent=1 // pred_fallthru
      _
    // Predicated region
    $region14: #{tpu_custom_call.1} parent=1 // pred_check
      _
    $region15: #{tpu_custom_call.1} parent=1 // pred_check_branch
      %58 = sbr.rel (0) target = $region17
    $region16: #{tpu_custom_call.1} parent=1 // pred_region
      _
    $region17: #{tpu_custom_call.1} parent=1 // pred_fallthru
      _
    // Predicated region
    $region18: #{tpu_custom_call.1} parent=1 // pred_check
      _
    $region19: #{tpu_custom_call.1} parent=1 // pred_check_branch
      %60 = sbr.rel (0) target = $region21
    $region20: #{tpu_custom_call.1} parent=1 // pred_region
      _
    $region21: #{tpu_custom_call.1} parent=1 // pred_fallthru
      _
    // Predicated region
    $region22: #{tpu_custom_call.1} parent=1 // pred_check
      _
    $region23: #{tpu_custom_call.1} parent=1 // pred_check_branch
      %62 = sbr.rel (0) target = $region25
    $region24: #{tpu_custom_call.1} parent=1 // pred_region
      %s64 = ssub.s32 3072, 3072
      %65 = vsyncadd [#allocation11], %s64
      %s66 = sshll.u32 [#allocation10], 4
      %s67 = int_to_ptr.vmem [resolvable:$true] %s66
      %72 = dma.hbm_to_vmem [thread:$0]  %s5, 3072, %s67, [#allocation11], 192, 192, 12
    $region25: #{tpu_custom_call.1} parent=1 // pred_fallthru
      _
    // Predicated region
    $region26: #{tpu_custom_call.1} parent=1 // pred_check
      _
    $region27: #{tpu_custom_call.1} parent=1 // pred_check_branch
      %74 = sbr.rel (0) target = $region29
    $region28: #{tpu_custom_call.1} parent=1 // pred_region
      %s76 = ssub.s32 3072, 3072
      %77 = vsyncadd [#allocation11], %s76
      %s78 = sshll.u32 [#allocation12], 4
      %s79 = int_to_ptr.vmem [resolvable:$true] %s78
      %84 = dma.hbm_to_vmem [thread:$0]  %s6, 3072, %s79, [#allocation11], 192, 192, 12
    $region29: #{tpu_custom_call.1} parent=1 // pred_fallthru
      _
    // Predicated region
    $region30: #{tpu_custom_call.1} parent=1 // pred_check
      _
    $region31: #{tpu_custom_call.1} parent=1 // pred_check_branch
      %86 = sbr.rel (0) target = $region33
    $region32: #{tpu_custom_call.1} parent=1 // pred_region
      _
    $region33: #{tpu_custom_call.1} parent=1 // pred_fallthru
      _
    // Predicated region
    $region34: #{tpu_custom_call.1} parent=1 // pred_check
      _
    $region35: #{tpu_custom_call.1} parent=1 // pred_check_branch
      %88 = sbr.rel (0) target = $region37
    $region36: #{tpu_custom_call.1} parent=1 // pred_region
      _
    $region37: #{tpu_custom_call.1} parent=1 // pred_fallthru
      _
    // Predicated region
    $region38: #{tpu_custom_call.1} parent=1 // pred_check
      _
    $region39: #{tpu_custom_call.1} parent=1 // pred_check_branch
      %90 = sbr.rel (0) target = $region41
    $region40: #{tpu_custom_call.1} parent=1 // pred_region
      %s92 = ssub.s32 1024, 1024
      %93 = vsyncadd [#allocation14], %s92
      %s94 = sshll.u32 [#allocation13], 4
      %s95 = int_to_ptr.vmem [resolvable:$true] %s94
      %100 = dma.hbm_to_vmem [thread:$0]  %s9, 1024, %s95, [#allocation14], 64, 64, 4
    $region41: #{tpu_custom_call.1} parent=1 // pred_fallthru
      _
    // Predicated region
    $region42: #{tpu_custom_call.1} parent=1 // pred_check
      _
    $region43: #{tpu_custom_call.1} parent=1 // pred_check_branch
      %102 = sbr.rel (0) target = $region45
    $region44: #{tpu_custom_call.1} parent=1 // pred_region
      _
    $region45: #{tpu_custom_call.1} parent=1 // pred_fallthru
      _
    // Predicated region
    $region46: #{tpu_custom_call.1} parent=1 // pred_check
      _
    $region47: #{tpu_custom_call.1} parent=1 // pred_check_branch
      %104 = sbr.rel (0) target = $region49
    $region48: #{tpu_custom_call.1} parent=1 // pred_region
      %105 = dma.done [#allocation5], 1024
    $region49: #{tpu_custom_call.1} parent=1 // pred_fallthru
      _
    // Predicated region
    $region50: #{tpu_custom_call.1} parent=1 // pred_check
      _
    $region51: #{tpu_custom_call.1} parent=1 // pred_check_branch
      %107 = sbr.rel (0) target = $region53
    $region52: #{tpu_custom_call.1} parent=1 // pred_region
      %108 = dma.done [#allocation8], 3072
    $region53: #{tpu_custom_call.1} parent=1 // pred_fallthru
      _
    // Predicated region
    $region54: #{tpu_custom_call.1} parent=1 // pred_check
      _
    $region55: #{tpu_custom_call.1} parent=1 // pred_check_branch
      %110 = sbr.rel (0) target = $region57
    $region56: #{tpu_custom_call.1} parent=1 // pred_region
      %111 = dma.done [#allocation8], 3072
    $region57: #{tpu_custom_call.1} parent=1 // pred_fallthru
      _
    // Predicated region
    $region58: #{tpu_custom_call.1} parent=1 // pred_check
      _
    $region59: #{tpu_custom_call.1} parent=1 // pred_check_branch
      %113 = sbr.rel (0) target = $region61
    $region60: #{tpu_custom_call.1} parent=1 // pred_region
      %114 = dma.done [#allocation11], 3072
    $region61: #{tpu_custom_call.1} parent=1 // pred_fallthru
      _
    // Predicated region
    $region62: #{tpu_custom_call.1} parent=1 // pred_check
      _
    $region63: #{tpu_custom_call.1} parent=1 // pred_check_branch
      %116 = sbr.rel (0) target = $region65
    $region64: #{tpu_custom_call.1} parent=1 // pred_region
      %117 = dma.done [#allocation11], 3072
    $region65: #{tpu_custom_call.1} parent=1 // pred_fallthru
      _
    // Predicated region
    $region66: #{tpu_custom_call.1} parent=1 // pred_check
      _
    $region67: #{tpu_custom_call.1} parent=1 // pred_check_branch
      %119 = sbr.rel (0) target = $region69
    $region68: #{tpu_custom_call.1} parent=1 // pred_region
      %120 = dma.done [#allocation14], 1024
    $region69: #{tpu_custom_call.1} parent=1 // pred_fallthru
      _
    %v122 = vld [vmem:[#allocation4] sm:$0xff]
    %v123 = vld [vmem:[#allocation4 + $0x8] sm:$0xff]
    %v124 = vld [vmem:[#allocation4 + $0x10] sm:$0xff]
    %v125 = vld [vmem:[#allocation4 + $0x18] sm:$0xff]
    %v126 = vld [vmem:[#allocation4 + $0x20] sm:$0xff]
    %v127 = vld [vmem:[#allocation4 + $0x28] sm:$0xff]
    %v128 = vld [vmem:[#allocation4 + $0x30] sm:$0xff]
    %v129 = vld [vmem:[#allocation4 + $0x38] sm:$0xff]
    %v130 = vpack.c.bf16 %v123, %v122
    %v131 = vpack.c.bf16 %v125, %v124
    %v132 = vpack.c.bf16 %v127, %v126
    %v133 = vpack.c.bf16 %v129, %v128
    %v134 = vld [vmem:[#allocation7] sm:$0xff]
    %v135 = vld [vmem:[#allocation7 + $0x8] sm:$0xf]
    %v136 = vld [vmem:[#allocation7 + $0xc] sm:$0xff]
    %v137 = vld [vmem:[#allocation7 + $0x14] sm:$0xf]
    %v138 = vld [vmem:[#allocation7 + $0x18] sm:$0xff]
    %v139 = vld [vmem:[#allocation7 + $0x20] sm:$0xf]
    %v140 = vld [vmem:[#allocation7 + $0x24] sm:$0xff]
    %v141 = vld [vmem:[#allocation7 + $0x2c] sm:$0xf]
    %v142 = vld [vmem:[#allocation7 + $0x30] sm:$0xff]
    %v143 = vld [vmem:[#allocation7 + $0x38] sm:$0xf]
    %v144 = vld [vmem:[#allocation7 + $0x3c] sm:$0xff]
    %v145 = vld [vmem:[#allocation7 + $0x44] sm:$0xf]
    %v146 = vld [vmem:[#allocation7 + $0x48] sm:$0xff]
    %v147 = vld [vmem:[#allocation7 + $0x50] sm:$0xf]
    %v148 = vld [vmem:[#allocation7 + $0x54] sm:$0xff]
    %v149 = vld [vmem:[#allocation7 + $0x5c] sm:$0xf]
    %v150 = vld [vmem:[#allocation7 + $0x60] sm:$0xff]
    %v151 = vld [vmem:[#allocation7 + $0x68] sm:$0xf]
    %v152 = vld [vmem:[#allocation7 + $0x6c] sm:$0xff]
    %v153 = vld [vmem:[#allocation7 + $0x74] sm:$0xf]
    %v154 = vld [vmem:[#allocation7 + $0x78] sm:$0xff]
    %v155 = vld [vmem:[#allocation7 + $0x80] sm:$0xf]
    %v156 = vld [vmem:[#allocation7 + $0x84] sm:$0xff]
    %v157 = vld [vmem:[#allocation7 + $0x8c] sm:$0xf]
    %v158 = vld [vmem:[#allocation7 + $0x90] sm:$0xff]
    %v159 = vld [vmem:[#allocation7 + $0x98] sm:$0xf]
    %v160 = vld [vmem:[#allocation7 + $0x9c] sm:$0xff]
    %v161 = vld [vmem:[#allocation7 + $0xa4] sm:$0xf]
    %v162 = vld [vmem:[#allocation7 + $0xa8] sm:$0xff]
    %v163 = vld [vmem:[#allocation7 + $0xb0] sm:$0xf]
    %v164 = vld [vmem:[#allocation7 + $0xb4] sm:$0xff]
    %v165 = vld [vmem:[#allocation7 + $0xbc] sm:$0xf]
    %v166 = vld [vmem:[%s3] sm:$0x7]
    %v168 = vlaneseq
    %v169 = vshrl.u32 %v168, 7
    %v170 = vsub.s32 0, %v169
    %v171 = vrot.slane %v166, %v170
    %v172 = vlaneseq
    %v173 = vshrl.u32 %v172, 7
    %v174 = vsub.s32 1, %v173
    %v175 = vrot.slane %v166, %v174
    %v176 = vlaneseq
    %v177 = vshrl.u32 %v176, 7
    %v178 = vsub.s32 2, %v177
    %v179 = vrot.slane %v166, %v178
    %v215 = vunpack.c.l.b16 %v134
    %v216 = vunpack.c.h.b16 %v134
    %v217 = vunpack.c.l.b16 %v135
    %v218 = vunpack.c.l.b16 %v136
    %v219 = vunpack.c.h.b16 %v136
    %v220 = vunpack.c.l.b16 %v137
    %v221 = vunpack.c.l.b16 %v138
    %v222 = vunpack.c.h.b16 %v138
    %v223 = vunpack.c.l.b16 %v139
    %v224 = vunpack.c.l.b16 %v140
    %v225 = vunpack.c.h.b16 %v140
    %v226 = vunpack.c.l.b16 %v141
    %v227 = vunpack.c.l.b16 %v142
    %v228 = vunpack.c.h.b16 %v142
    %v229 = vunpack.c.l.b16 %v143
    %v230 = vunpack.c.l.b16 %v144
    %v231 = vunpack.c.h.b16 %v144
    %v232 = vunpack.c.l.b16 %v145
    %v233 = vunpack.c.l.b16 %v146
    %v234 = vunpack.c.h.b16 %v146
    %v235 = vunpack.c.l.b16 %v147
    %v236 = vunpack.c.l.b16 %v148
    %v237 = vunpack.c.h.b16 %v148
    %v238 = vunpack.c.l.b16 %v149
    %v239 = vunpack.c.l.b16 %v150
    %v240 = vunpack.c.h.b16 %v150
    %v241 = vunpack.c.l.b16 %v151
    %v242 = vunpack.c.l.b16 %v152
    %v243 = vunpack.c.h.b16 %v152
    %v244 = vunpack.c.l.b16 %v153
    %v245 = vunpack.c.l.b16 %v154
    %v246 = vunpack.c.h.b16 %v154
    %v247 = vunpack.c.l.b16 %v155
    %v248 = vunpack.c.l.b16 %v156
    %v249 = vunpack.c.h.b16 %v156
    %v250 = vunpack.c.l.b16 %v157
    %v251 = vunpack.c.l.b16 %v158
    %v252 = vunpack.c.h.b16 %v158
    %v253 = vunpack.c.l.b16 %v159
    %v254 = vunpack.c.l.b16 %v160
    %v255 = vunpack.c.h.b16 %v160
    %v256 = vunpack.c.l.b16 %v161
    %v257 = vunpack.c.l.b16 %v162
    %v258 = vunpack.c.h.b16 %v162
    %v259 = vunpack.c.l.b16 %v163
    %v260 = vunpack.c.l.b16 %v164
    %v261 = vunpack.c.h.b16 %v164
    %v262 = vunpack.c.l.b16 %v165
    %v263 = vpack.c.b16 %v218, %v215
    %v264 = vpack.c.b16 %v219, %v216
    %v265 = vpack.c.b16 %v220, %v217
    %v266 = vpack.c.b16 %v224, %v221
    %v267 = vpack.c.b16 %v225, %v222
    %v268 = vpack.c.b16 %v226, %v223
    %v269 = vpack.c.b16 %v230, %v227
    %v270 = vpack.c.b16 %v231, %v228
    %v271 = vpack.c.b16 %v232, %v229
    %v272 = vpack.c.b16 %v236, %v233
    %v273 = vpack.c.b16 %v237, %v234
    %v274 = vpack.c.b16 %v238, %v235
    %v275 = vpack.c.b16 %v242, %v239
    %v276 = vpack.c.b16 %v243, %v240
    %v277 = vpack.c.b16 %v244, %v241
    %v278 = vpack.c.b16 %v248, %v245
    %v279 = vpack.c.b16 %v249, %v246
    %v280 = vpack.c.b16 %v250, %v247
    %v281 = vpack.c.b16 %v254, %v251
    %v282 = vpack.c.b16 %v255, %v252
    %v283 = vpack.c.b16 %v256, %v253
    %v284 = vpack.c.b16 %v260, %v257
    %v285 = vpack.c.b16 %v261, %v258
    %v286 = vpack.c.b16 %v262, %v259
    %311 = vmatprep.subr.bf16.mxu0 %v264
    %312 = vmatpush1.bf16.msra.mxu0 %v263
    %313 = vmatprep.subr.bf16.mxu0 %v267
    %314 = vmatpush1.bf16.msra.mxu0 %v266
    %315 = vmatprep.subr.bf16.mxu0 %v270
    %316 = vmatpush1.bf16.msra.mxu0 %v269
    %317 = vmatprep.subr.bf16.mxu0 %v273
    %318 = vmatpush1.bf16.msra.mxu0 %v272
    %319 = vmatprep.subr.bf16.mxu0 %v276
    %320 = vmatpush1.bf16.msra.mxu0 %v275
    %321 = vmatprep.subr.bf16.mxu0 %v279
    %322 = vmatpush1.bf16.msra.mxu0 %v278
    %323 = vmatprep.subr.bf16.mxu0 %v282
    %324 = vmatpush1.bf16.msra.mxu0 %v281
    %325 = vmatprep.subr.bf16.mxu0 %v285
    %326 = vmatpush1.bf16.msra.mxu0 %v284
    %327 = vmatprep.subr.bf16.mxu0 0
    %328 = vmatpush1.bf16.msra.mxu0 0
    %329 = vmatprep.subr.bf16.mxu0 0
    %330 = vmatpush1.bf16.msra.mxu0 0
    %331 = vmatprep.subr.bf16.mxu0 0
    %332 = vmatpush1.bf16.msra.mxu0 0
    %333 = vmatprep.subr.bf16.mxu0 0
    %334 = vmatpush1.bf16.msra.mxu0 0
    %335 = vmatprep.subr.bf16.mxu0 0
    %336 = vmatpush1.bf16.msra.mxu0 0
    %337 = vmatprep.subr.bf16.mxu0 0
    %338 = vmatpush1.bf16.msra.mxu0 0
    %339 = vmatprep.subr.bf16.mxu0 0
    %340 = vmatpush1.bf16.msra.mxu0 0
    %341 = vmatprep.subr.bf16.mxu0 0
    %342 = vmatpush1.bf16.msra.mxu0 0
    %343 = vmatprep.mubr.bf16.mxu0 0
    %344 = vmatmul.mubr.bf16.gmra.mrb[0].mxu0 %v130
    %v345 = vpop.f32.mrb[0].mxu0
    %v346 = vadd.f32 %v171, %v345
    %v347 = vpop.f32.mrb[0].mxu0
    %v348 = vadd.f32 %v175, %v347
    %v349 = vpop.f32.mrb[0].mxu0
    %v350 = vadd.f32 %v171, %v349
    %v351 = vpop.f32.mrb[0].mxu0
    %v352 = vadd.f32 %v175, %v351
    %353 = vmatprep.mubr.bf16.mxu0 0
    %354 = vmatmul.mubr.bf16.gmra.mrb[0].mxu0 %v131
    %v355 = vpop.f32.mrb[0].mxu0
    %v356 = vadd.f32 %v171, %v355
    %v357 = vpop.f32.mrb[0].mxu0
    %v358 = vadd.f32 %v175, %v357
    %v359 = vpop.f32.mrb[0].mxu0
    %v360 = vadd.f32 %v171, %v359
    %v361 = vpop.f32.mrb[0].mxu0
    %v362 = vadd.f32 %v175, %v361
    %363 = vmatprep.mubr.bf16.mxu0 0
    %364 = vmatmul.mubr.bf16.gmra.mrb[0].mxu0 %v132
    %v365 = vpop.f32.mrb[0].mxu0
    %v366 = vadd.f32 %v171, %v365
    %v367 = vpop.f32.mrb[0].mxu0
    %v368 = vadd.f32 %v175, %v367
    %v369 = vpop.f32.mrb[0].mxu0
    %v370 = vadd.f32 %v171, %v369
    %v371 = vpop.f32.mrb[0].mxu0
    %v372 = vadd.f32 %v175, %v371
    %373 = vmatprep.mubr.bf16.mxu0 0
    %374 = vmatmul.mubr.bf16.gmra.mrb[0].mxu0 %v133
    %v375 = vpop.f32.mrb[0].mxu0
    %v376 = vadd.f32 %v171, %v375
    %v377 = vpop.f32.mrb[0].mxu0
    %v378 = vadd.f32 %v175, %v377
    %v379 = vpop.f32.mrb[0].mxu0
    %v380 = vadd.f32 %v171, %v379
    %v381 = vpop.f32.mrb[0].mxu0
    %v382 = vadd.f32 %v175, %v381
    %383 = vdwg.mxu0
    %384 = vmatprep.subr.bf16.mxu0 0
    %385 = vmatpush1.bf16.msra.mxu0 %v265
    %386 = vmatprep.subr.bf16.mxu0 0
    %387 = vmatpush1.bf16.msra.mxu0 %v268
    %388 = vmatprep.subr.bf16.mxu0 0
    %389 = vmatpush1.bf16.msra.mxu0 %v271
    %390 = vmatprep.subr.bf16.mxu0 0
    %391 = vmatpush1.bf16.msra.mxu0 %v274
    %392 = vmatprep.subr.bf16.mxu0 0
    %393 = vmatpush1.bf16.msra.mxu0 %v277
    %394 = vmatprep.subr.bf16.mxu0 0
    %395 = vmatpush1.bf16.msra.mxu0 %v280
    %396 = vmatprep.subr.bf16.mxu0 0
    %397 = vmatpush1.bf16.msra.mxu0 %v283
    %398 = vmatprep.subr.bf16.mxu0 0
    %399 = vmatpush1.bf16.msra.mxu0 %v286
    %400 = vmatprep.subr.bf16.mxu0 0
    %401 = vmatpush1.bf16.msra.mxu0 0
    %402 = vmatprep.subr.bf16.mxu0 0
    %403 = vmatpush1.bf16.msra.mxu0 0
    %404 = vmatprep.subr.bf16.mxu0 0
    %405 = vmatpush1.bf16.msra.mxu0 0
    %406 = vmatprep.subr.bf16.mxu0 0
    %407 = vmatpush1.bf16.msra.mxu0 0
    %408 = vmatprep.subr.bf16.mxu0 0
    %409 = vmatpush1.bf16.msra.mxu0 0
    %410 = vmatprep.subr.bf16.mxu0 0
    %411 = vmatpush1.bf16.msra.mxu0 0
    %412 = vmatprep.subr.bf16.mxu0 0
    %413 = vmatpush1.bf16.msra.mxu0 0
    %414 = vmatprep.subr.bf16.mxu0 0
    %415 = vmatpush1.bf16.msra.mxu0 0
    %416 = vmatprep.mubr.bf16.mxu0 0
    %417 = vmatmul.mubr.bf16.gmra.mrb[0].mxu0 %v130
    %v418 = vpop.f32.mrb[0].mxu0
    %v419 = vadd.f32 %v179, %v418
    %v420 = vpop.f32.mrb[0].mxu0
    %v421 = vpop.f32.mrb[0].mxu0
    %v422 = vadd.f32 %v179, %v421
    %v423 = vpop.f32.mrb[0].mxu0
    %424 = vmatprep.mubr.bf16.mxu0 0
    %425 = vmatmul.mubr.bf16.gmra.mrb[0].mxu0 %v131
    %v426 = vpop.f32.mrb[0].mxu0
    %v427 = vadd.f32 %v179, %v426
    %v428 = vpop.f32.mrb[0].mxu0
    %v429 = vpop.f32.mrb[0].mxu0
    %v430 = vadd.f32 %v179, %v429
    %v431 = vpop.f32.mrb[0].mxu0
    %432 = vmatprep.mubr.bf16.mxu0 0
    %433 = vmatmul.mubr.bf16.gmra.mrb[0].mxu0 %v132
    %v434 = vpop.f32.mrb[0].mxu0
    %v435 = vadd.f32 %v179, %v434
    %v436 = vpop.f32.mrb[0].mxu0
    %v437 = vpop.f32.mrb[0].mxu0
    %v438 = vadd.f32 %v179, %v437
    %v439 = vpop.f32.mrb[0].mxu0
    %440 = vmatprep.mubr.bf16.mxu0 0
    %441 = vmatmul.mubr.bf16.gmra.mrb[0].mxu0 %v133
    %v442 = vpop.f32.mrb[0].mxu0
    %v443 = vadd.f32 %v179, %v442
    %v444 = vpop.f32.mrb[0].mxu0
    %v445 = vpop.f32.mrb[0].mxu0
    %v446 = vadd.f32 %v179, %v445
    %v447 = vpop.f32.mrb[0].mxu0
    %448 = vdwg.mxu0
    %449 = vst [vmem:[#allocation2] sm:$0xff] %v346
    %450 = vst [vmem:[#allocation2 + $0x8] sm:$0xff] %v348
    %451 = vst [vmem:[#allocation2 + $0x10] sm:$0xff] %v419
    %452 = vst [vmem:[#allocation2 + $0x18] sm:$0xff] %v350
    %453 = vst [vmem:[#allocation2 + $0x20] sm:$0xff] %v352
    %454 = vst [vmem:[#allocation2 + $0x28] sm:$0xff] %v422
    %455 = vst [vmem:[#allocation2 + $0x30] sm:$0xff] %v356
    %456 = vst [vmem:[#allocation2 + $0x38] sm:$0xff] %v358
    %457 = vst [vmem:[#allocation2 + $0x40] sm:$0xff] %v427
    %458 = vst [vmem:[#allocation2 + $0x48] sm:$0xff] %v360
    %459 = vst [vmem:[#allocation2 + $0x50] sm:$0xff] %v362
    %460 = vst [vmem:[#allocation2 + $0x58] sm:$0xff] %v430
    %461 = vst [vmem:[#allocation2 + $0x60] sm:$0xff] %v366
    %462 = vst [vmem:[#allocation2 + $0x68] sm:$0xff] %v368
    %463 = vst [vmem:[#allocation2 + $0x70] sm:$0xff] %v435
    %464 = vst [vmem:[#allocation2 + $0x78] sm:$0xff] %v370
    %465 = vst [vmem:[#allocation2 + $0x80] sm:$0xff] %v372
    %466 = vst [vmem:[#allocation2 + $0x88] sm:$0xff] %v438
    %467 = vst [vmem:[#allocation2 + $0x90] sm:$0xff] %v376
    %468 = vst [vmem:[#allocation2 + $0x98] sm:$0xff] %v378
    %469 = vst [vmem:[#allocation2 + $0xa0] sm:$0xff] %v443
    %470 = vst [vmem:[#allocation2 + $0xa8] sm:$0xff] %v380
    %471 = vst [vmem:[#allocation2 + $0xb0] sm:$0xff] %v382
    %472 = vst [vmem:[#allocation2 + $0xb8] sm:$0xff] %v446
    %v473 = vld [vmem:[#allocation9] sm:$0xff]
    %v474 = vld [vmem:[#allocation9 + $0x8] sm:$0xf]
    %v475 = vld [vmem:[#allocation9 + $0xc] sm:$0xff]
    %v476 = vld [vmem:[#allocation9 + $0x14] sm:$0xf]
    %v477 = vld [vmem:[#allocation9 + $0x18] sm:$0xff]
    %v478 = vld [vmem:[#allocation9 + $0x20] sm:$0xf]
    %v479 = vld [vmem:[#allocation9 + $0x24] sm:$0xff]
    %v480 = vld [vmem:[#allocation9 + $0x2c] sm:$0xf]
    %v481 = vld [vmem:[#allocation9 + $0x30] sm:$0xff]
    %v482 = vld [vmem:[#allocation9 + $0x38] sm:$0xf]
    %v483 = vld [vmem:[#allocation9 + $0x3c] sm:$0xff]
    %v484 = vld [vmem:[#allocation9 + $0x44] sm:$0xf]
    %v485 = vld [vmem:[#allocation9 + $0x48] sm:$0xff]
    %v486 = vld [vmem:[#allocation9 + $0x50] sm:$0xf]
    %v487 = vld [vmem:[#allocation9 + $0x54] sm:$0xff]
    %v488 = vld [vmem:[#allocation9 + $0x5c] sm:$0xf]
    %v489 = vld [vmem:[#allocation9 + $0x60] sm:$0xff]
    %v490 = vld [vmem:[#allocation9 + $0x68] sm:$0xf]
    %v491 = vld [vmem:[#allocation9 + $0x6c] sm:$0xff]
    %v492 = vld [vmem:[#allocation9 + $0x74] sm:$0xf]
    %v493 = vld [vmem:[#allocation9 + $0x78] sm:$0xff]
    %v494 = vld [vmem:[#allocation9 + $0x80] sm:$0xf]
    %v495 = vld [vmem:[#allocation9 + $0x84] sm:$0xff]
    %v496 = vld [vmem:[#allocation9 + $0x8c] sm:$0xf]
    %v497 = vld [vmem:[#allocation9 + $0x90] sm:$0xff]
    %v498 = vld [vmem:[#allocation9 + $0x98] sm:$0xf]
    %v499 = vld [vmem:[#allocation9 + $0x9c] sm:$0xff]
    %v500 = vld [vmem:[#allocation9 + $0xa4] sm:$0xf]
    %v501 = vld [vmem:[#allocation9 + $0xa8] sm:$0xff]
    %v502 = vld [vmem:[#allocation9 + $0xb0] sm:$0xf]
    %v503 = vld [vmem:[#allocation9 + $0xb4] sm:$0xff]
    %v504 = vld [vmem:[#allocation9 + $0xbc] sm:$0xf]
    %v505 = vld [vmem:[%s4] sm:$0x7]
    %v507 = vlaneseq
    %v508 = vshrl.u32 %v507, 7
    %v509 = vsub.s32 0, %v508
    %v510 = vrot.slane %v505, %v509
    %v511 = vlaneseq
    %v512 = vshrl.u32 %v511, 7
    %v513 = vsub.s32 1, %v512
    %v514 = vrot.slane %v505, %v513
    %v515 = vlaneseq
    %v516 = vshrl.u32 %v515, 7
    %v517 = vsub.s32 2, %v516
    %v518 = vrot.slane %v505, %v517
    %v554 = vunpack.c.l.b16 %v473
    %v555 = vunpack.c.h.b16 %v473
    %v556 = vunpack.c.l.b16 %v474
    %v557 = vunpack.c.l.b16 %v475
    %v558 = vunpack.c.h.b16 %v475
    %v559 = vunpack.c.l.b16 %v476
    %v560 = vunpack.c.l.b16 %v477
    %v561 = vunpack.c.h.b16 %v477
    %v562 = vunpack.c.l.b16 %v478
    %v563 = vunpack.c.l.b16 %v479
    %v564 = vunpack.c.h.b16 %v479
    %v565 = vunpack.c.l.b16 %v480
    %v566 = vunpack.c.l.b16 %v481
    %v567 = vunpack.c.h.b16 %v481
    %v568 = vunpack.c.l.b16 %v482
    %v569 = vunpack.c.l.b16 %v483
    %v570 = vunpack.c.h.b16 %v483
    %v571 = vunpack.c.l.b16 %v484
    %v572 = vunpack.c.l.b16 %v485
    %v573 = vunpack.c.h.b16 %v485
    %v574 = vunpack.c.l.b16 %v486
    %v575 = vunpack.c.l.b16 %v487
    %v576 = vunpack.c.h.b16 %v487
    %v577 = vunpack.c.l.b16 %v488
    %v578 = vunpack.c.l.b16 %v489
    %v579 = vunpack.c.h.b16 %v489
    %v580 = vunpack.c.l.b16 %v490
    %v581 = vunpack.c.l.b16 %v491
    %v582 = vunpack.c.h.b16 %v491
    %v583 = vunpack.c.l.b16 %v492
    %v584 = vunpack.c.l.b16 %v493
    %v585 = vunpack.c.h.b16 %v493
    %v586 = vunpack.c.l.b16 %v494
    %v587 = vunpack.c.l.b16 %v495
    %v588 = vunpack.c.h.b16 %v495
    %v589 = vunpack.c.l.b16 %v496
    %v590 = vunpack.c.l.b16 %v497
    %v591 = vunpack.c.h.b16 %v497
    %v592 = vunpack.c.l.b16 %v498
    %v593 = vunpack.c.l.b16 %v499
    %v594 = vunpack.c.h.b16 %v499
    %v595 = vunpack.c.l.b16 %v500
    %v596 = vunpack.c.l.b16 %v501
    %v597 = vunpack.c.h.b16 %v501
    %v598 = vunpack.c.l.b16 %v502
    %v599 = vunpack.c.l.b16 %v503
    %v600 = vunpack.c.h.b16 %v503
    %v601 = vunpack.c.l.b16 %v504
    %v602 = vpack.c.b16 %v557, %v554
    %v603 = vpack.c.b16 %v558, %v555
    %v604 = vpack.c.b16 %v559, %v556
    %v605 = vpack.c.b16 %v563, %v560
    %v606 = vpack.c.b16 %v564, %v561
    %v607 = vpack.c.b16 %v565, %v562
    %v608 = vpack.c.b16 %v569, %v566
    %v609 = vpack.c.b16 %v570, %v567
    %v610 = vpack.c.b16 %v571, %v568
    %v611 = vpack.c.b16 %v575, %v572
    %v612 = vpack.c.b16 %v576, %v573
    %v613 = vpack.c.b16 %v577, %v574
    %v614 = vpack.c.b16 %v581, %v578
    %v615 = vpack.c.b16 %v582, %v579
    %v616 = vpack.c.b16 %v583, %v580
    %v617 = vpack.c.b16 %v587, %v584
    %v618 = vpack.c.b16 %v588, %v585
    %v619 = vpack.c.b16 %v589, %v586
    %v620 = vpack.c.b16 %v593, %v590
    %v621 = vpack.c.b16 %v594, %v591
    %v622 = vpack.c.b16 %v595, %v592
    %v623 = vpack.c.b16 %v599, %v596
    %v624 = vpack.c.b16 %v600, %v597
    %v625 = vpack.c.b16 %v601, %v598
    %650 = vmatprep.subr.bf16.mxu0 %v603
    %651 = vmatpush1.bf16.msra.mxu0 %v602
    %652 = vmatprep.subr.bf16.mxu0 %v606
    %653 = vmatpush1.bf16.msra.mxu0 %v605
    %654 = vmatprep.subr.bf16.mxu0 %v609
    %655 = vmatpush1.bf16.msra.mxu0 %v608
    %656 = vmatprep.subr.bf16.mxu0 %v612
    %657 = vmatpush1.bf16.msra.mxu0 %v611
    %658 = vmatprep.subr.bf16.mxu0 %v615
    %659 = vmatpush1.bf16.msra.mxu0 %v614
    %660 = vmatprep.subr.bf16.mxu0 %v618
    %661 = vmatpush1.bf16.msra.mxu0 %v617
    %662 = vmatprep.subr.bf16.mxu0 %v621
    %663 = vmatpush1.bf16.msra.mxu0 %v620
    %664 = vmatprep.subr.bf16.mxu0 %v624
    %665 = vmatpush1.bf16.msra.mxu0 %v623
    %666 = vmatprep.subr.bf16.mxu0 0
    %667 = vmatpush1.bf16.msra.mxu0 0
    %668 = vmatprep.subr.bf16.mxu0 0
    %669 = vmatpush1.bf16.msra.mxu0 0
    %670 = vmatprep.subr.bf16.mxu0 0
    %671 = vmatpush1.bf16.msra.mxu0 0
    %672 = vmatprep.subr.bf16.mxu0 0
    %673 = vmatpush1.bf16.msra.mxu0 0
    %674 = vmatprep.subr.bf16.mxu0 0
    %675 = vmatpush1.bf16.msra.mxu0 0
    %676 = vmatprep.subr.bf16.mxu0 0
    %677 = vmatpush1.bf16.msra.mxu0 0
    %678 = vmatprep.subr.bf16.mxu0 0
    %679 = vmatpush1.bf16.msra.mxu0 0
    %680 = vmatprep.subr.bf16.mxu0 0
    %681 = vmatpush1.bf16.msra.mxu0 0
    %682 = vmatprep.mubr.bf16.mxu0 0
    %683 = vmatmul.mubr.bf16.gmra.mrb[0].mxu0 0
    %v684 = vpop.f32.mrb[0].mxu0
    %v685 = vadd.f32 %v510, %v684
    %v686 = vpop.f32.mrb[0].mxu0
    %v687 = vadd.f32 %v514, %v686
    %v688 = vpop.f32.mrb[0].mxu0
    %v689 = vpop.f32.mrb[0].mxu0
    %690 = vdwg.mxu0
    %691 = vmatprep.subr.bf16.mxu0 0
    %692 = vmatpush1.bf16.msra.mxu0 %v604
    %693 = vmatprep.subr.bf16.mxu0 0
    %694 = vmatpush1.bf16.msra.mxu0 %v607
    %695 = vmatprep.subr.bf16.mxu0 0
    %696 = vmatpush1.bf16.msra.mxu0 %v610
    %697 = vmatprep.subr.bf16.mxu0 0
    %698 = vmatpush1.bf16.msra.mxu0 %v613
    %699 = vmatprep.subr.bf16.mxu0 0
    %700 = vmatpush1.bf16.msra.mxu0 %v616
    %701 = vmatprep.subr.bf16.mxu0 0
    %702 = vmatpush1.bf16.msra.mxu0 %v619
    %703 = vmatprep.subr.bf16.mxu0 0
    %704 = vmatpush1.bf16.msra.mxu0 %v622
    %705 = vmatprep.subr.bf16.mxu0 0
    %706 = vmatpush1.bf16.msra.mxu0 %v625
    %707 = vmatprep.subr.bf16.mxu0 0
    %708 = vmatpush1.bf16.msra.mxu0 0
    %709 = vmatprep.subr.bf16.mxu0 0
    %710 = vmatpush1.bf16.msra.mxu0 0
    %711 = vmatprep.subr.bf16.mxu0 0
    %712 = vmatpush1.bf16.msra.mxu0 0
    %713 = vmatprep.subr.bf16.mxu0 0
    %714 = vmatpush1.bf16.msra.mxu0 0
    %715 = vmatprep.subr.bf16.mxu0 0
    %716 = vmatpush1.bf16.msra.mxu0 0
    %717 = vmatprep.subr.bf16.mxu0 0
    %718 = vmatpush1.bf16.msra.mxu0 0
    %719 = vmatprep.subr.bf16.mxu0 0
    %720 = vmatpush1.bf16.msra.mxu0 0
    %721 = vmatprep.subr.bf16.mxu0 0
    %722 = vmatpush1.bf16.msra.mxu0 0
    %723 = vmatprep.mubr.bf16.mxu0 0
    %724 = vmatmul.mubr.bf16.gmra.mrb[0].mxu0 0
    %v725 = vpop.f32.mrb[0].mxu0
    %v726 = vadd.f32 %v518, %v725
    %v727 = vpop.f32.mrb[0].mxu0
    %v728 = vpop.f32.mrb[0].mxu0
    %v729 = vpop.f32.mrb[0].mxu0
    %730 = vdwg.mxu0
    %v731 = vld [vmem:[#allocation2] sm:$0xff]
    %v732 = vld [vmem:[#allocation2 + $0x8] sm:$0xff]
    %v733 = vld [vmem:[#allocation2 + $0x10] sm:$0xff]
    %v734 = vadd.f32 %v731, %v685
    %v735 = vxor.u32 %v734, 2147483648
    %v736 = vmul.f32 %v735, 1.442695
    %v737 = vpow.pop %v736
    %v738 = vadd.f32 %v737, 1.0
    %v739 = vrcp.pop %v738
    %v740 = vmul.f32 1.0, %v739
    %v741 = vadd.f32 %v732, %v687
    %v742 = vxor.u32 %v741, 2147483648
    %v743 = vmul.f32 %v742, 1.442695
    %v744 = vpow.pop %v743
    %v745 = vadd.f32 %v744, 1.0
    %v746 = vrcp.pop %v745
    %v747 = vmul.f32 1.0, %v746
    %v748 = vmul.f32 %v740, %v726
    %v749 = vadd.f32 %v733, %v748
    %v750 = vtanh.pop %v749
    %v751 = vsub.f32 1.0, %v747
    %v752 = vmul.f32 %v751, %v750
    %v753 = vmul.f32 %v747, 0.0
    %v754 = vadd.f32 %v752, %v753
    %v755 = vpack.c.bf16 %v754, %v754
    %756 = vst [vmem:[#allocation3] sm:$0xf] %v755
    %757 = vmatprep.subr.bf16.mxu0 %v603
    %758 = vmatpush1.bf16.msra.mxu0 %v602
    %759 = vmatprep.subr.bf16.mxu0 %v606
    %760 = vmatpush1.bf16.msra.mxu0 %v605
    %761 = vmatprep.subr.bf16.mxu0 %v609
    %762 = vmatpush1.bf16.msra.mxu0 %v608
    %763 = vmatprep.subr.bf16.mxu0 %v612
    %764 = vmatpush1.bf16.msra.mxu0 %v611
    %765 = vmatprep.subr.bf16.mxu0 %v615
    %766 = vmatpush1.bf16.msra.mxu0 %v614
    %767 = vmatprep.subr.bf16.mxu0 %v618
    %768 = vmatpush1.bf16.msra.mxu0 %v617
    %769 = vmatprep.subr.bf16.mxu0 %v621
    %770 = vmatpush1.bf16.msra.mxu0 %v620
    %771 = vmatprep.subr.bf16.mxu0 %v624
    %772 = vmatpush1.bf16.msra.mxu0 %v623
    %773 = vmatprep.subr.bf16.mxu0 0
    %774 = vmatpush1.bf16.msra.mxu0 0
    %775 = vmatprep.subr.bf16.mxu0 0
    %776 = vmatpush1.bf16.msra.mxu0 0
    %777 = vmatprep.subr.bf16.mxu0 0
    %778 = vmatpush1.bf16.msra.mxu0 0
    %779 = vmatprep.subr.bf16.mxu0 0
    %780 = vmatpush1.bf16.msra.mxu0 0
    %781 = vmatprep.subr.bf16.mxu0 0
    %782 = vmatpush1.bf16.msra.mxu0 0
    %783 = vmatprep.subr.bf16.mxu0 0
    %784 = vmatpush1.bf16.msra.mxu0 0
    %785 = vmatprep.subr.bf16.mxu0 0
    %786 = vmatpush1.bf16.msra.mxu0 0
    %787 = vmatprep.subr.bf16.mxu0 0
    %788 = vmatpush1.bf16.msra.mxu0 0
    %789 = vmatprep.mubr.bf16.mxu0 0
    %790 = vmatmul.mubr.bf16.gmra.mrb[0].mxu0 %v755
    %v791 = vpop.f32.mrb[0].mxu0
    %v792 = vadd.f32 %v510, %v791
    %v793 = vpop.f32.mrb[0].mxu0
    %v794 = vadd.f32 %v514, %v793
    %v795 = vpop.f32.mrb[0].mxu0
    %v796 = vpop.f32.mrb[0].mxu0
    %797 = vdwg.mxu0
    %798 = vmatprep.subr.bf16.mxu0 0
    %799 = vmatpush1.bf16.msra.mxu0 %v604
    %800 = vmatprep.subr.bf16.mxu0 0
    %801 = vmatpush1.bf16.msra.mxu0 %v607
    %802 = vmatprep.subr.bf16.mxu0 0
    %803 = vmatpush1.bf16.msra.mxu0 %v610
    %804 = vmatprep.subr.bf16.mxu0 0
    %805 = vmatpush1.bf16.msra.mxu0 %v613
    %806 = vmatprep.subr.bf16.mxu0 0
    %807 = vmatpush1.bf16.msra.mxu0 %v616
    %808 = vmatprep.subr.bf16.mxu0 0
    %809 = vmatpush1.bf16.msra.mxu0 %v619
    %810 = vmatprep.subr.bf16.mxu0 0
    %811 = vmatpush1.bf16.msra.mxu0 %v622
    %812 = vmatprep.subr.bf16.mxu0 0
    %813 = vmatpush1.bf16.msra.mxu0 %v625
    %814 = vmatprep.subr.bf16.mxu0 0
    %815 = vmatpush1.bf16.msra.mxu0 0
    %816 = vmatprep.subr.bf16.mxu0 0
    %817 = vmatpush1.bf16.msra.mxu0 0
    %818 = vmatprep.subr.bf16.mxu0 0
    %819 = vmatpush1.bf16.msra.mxu0 0
    %820 = vmatprep.subr.bf16.mxu0 0
    %821 = vmatpush1.bf16.msra.mxu0 0
    %822 = vmatprep.subr.bf16.mxu0 0
    %823 = vmatpush1.bf16.msra.mxu0 0
    %824 = vmatprep.subr.bf16.mxu0 0
    %825 = vmatpush1.bf16.msra.mxu0 0
    %826 = vmatprep.subr.bf16.mxu0 0
    %827 = vmatpush1.bf16.msra.mxu0 0
    %828 = vmatprep.subr.bf16.mxu0 0
    %829 = vmatpush1.bf16.msra.mxu0 0
    %830 = vmatprep.mubr.bf16.mxu0 0
    %831 = vmatmul.mubr.bf16.gmra.mrb[0].mxu0 %v755
    %v832 = vpop.f32.mrb[0].mxu0
    %v833 = vadd.f32 %v518, %v832
    %v834 = vpop.f32.mrb[0].mxu0
    %v835 = vpop.f32.mrb[0].mxu0
    %v836 = vpop.f32.mrb[0].mxu0
    %837 = vdwg.mxu0
    %s838 = scalar_lea.vmem [#allocation2], 24
    %v839 = vld [vmem:[%s838] sm:$0xff]
    %v840 = vld [vmem:[%s838 + $0x8] sm:$0xff]
    %v841 = vld [vmem:[%s838 + $0x10] sm:$0xff]
    %v842 = vadd.f32 %v839, %v792
    %v843 = vxor.u32 %v842, 2147483648
    %v844 = vmul.f32 %v843, 1.442695
    %v845 = vpow.pop %v844
    %v846 = vadd.f32 %v845, 1.0
    %v847 = vrcp.pop %v846
    %v848 = vmul.f32 1.0, %v847
    %v849 = vadd.f32 %v840, %v794
    %v850 = vxor.u32 %v849, 2147483648
    %v851 = vmul.f32 %v850, 1.442695
    %v852 = vpow.pop %v851
    %v853 = vadd.f32 %v852, 1.0
    %v854 = vrcp.pop %v853
    %v855 = vmul.f32 1.0, %v854
    %v856 = vmul.f32 %v848, %v833
    %v857 = vadd.f32 %v841, %v856
    %v858 = vtanh.pop %v857
    %v859 = vsub.f32 1.0, %v855
    %v860 = vmul.f32 %v859, %v858
    %v861 = vmul.f32 %v855, %v754
    %v862 = vadd.f32 %v860, %v861
    %v863 = vpack.c.bf16 %v862, %v862
    %s864 = scalar_lea.vmem [#allocation3], 4
    %865 = vst [vmem:[%s864] sm:$0xf] %v863
    %866 = vmatprep.subr.bf16.mxu0 %v603
    %867 = vmatpush1.bf16.msra.mxu0 %v602
    %868 = vmatprep.subr.bf16.mxu0 %v606
    %869 = vmatpush1.bf16.msra.mxu0 %v605
    %870 = vmatprep.subr.bf16.mxu0 %v609
    %871 = vmatpush1.bf16.msra.mxu0 %v608
    %872 = vmatprep.subr.bf16.mxu0 %v612
    %873 = vmatpush1.bf16.msra.mxu0 %v611
    %874 = vmatprep.subr.bf16.mxu0 %v615
    %875 = vmatpush1.bf16.msra.mxu0 %v614
    %876 = vmatprep.subr.bf16.mxu0 %v618
    %877 = vmatpush1.bf16.msra.mxu0 %v617
    %878 = vmatprep.subr.bf16.mxu0 %v621
    %879 = vmatpush1.bf16.msra.mxu0 %v620
    %880 = vmatprep.subr.bf16.mxu0 %v624
    %881 = vmatpush1.bf16.msra.mxu0 %v623
    %882 = vmatprep.subr.bf16.mxu0 0
    %883 = vmatpush1.bf16.msra.mxu0 0
    %884 = vmatprep.subr.bf16.mxu0 0
    %885 = vmatpush1.bf16.msra.mxu0 0
    %886 = vmatprep.subr.bf16.mxu0 0
    %887 = vmatpush1.bf16.msra.mxu0 0
    %888 = vmatprep.subr.bf16.mxu0 0
    %889 = vmatpush1.bf16.msra.mxu0 0
    %890 = vmatprep.subr.bf16.mxu0 0
    %891 = vmatpush1.bf16.msra.mxu0 0
    %892 = vmatprep.subr.bf16.mxu0 0
    %893 = vmatpush1.bf16.msra.mxu0 0
    %894 = vmatprep.subr.bf16.mxu0 0
    %895 = vmatpush1.bf16.msra.mxu0 0
    %896 = vmatprep.subr.bf16.mxu0 0
    %897 = vmatpush1.bf16.msra.mxu0 0
    %898 = vmatprep.mubr.bf16.mxu0 0
    %899 = vmatmul.mubr.bf16.gmra.mrb[0].mxu0 %v863
    %v900 = vpop.f32.mrb[0].mxu0
    %v901 = vadd.f32 %v510, %v900
    %v902 = vpop.f32.mrb[0].mxu0
    %v903 = vadd.f32 %v514, %v902
    %v904 = vpop.f32.mrb[0].mxu0
    %v905 = vpop.f32.mrb[0].mxu0
    %906 = vdwg.mxu0
    %907 = vmatprep.subr.bf16.mxu0 0
    %908 = vmatpush1.bf16.msra.mxu0 %v604
    %909 = vmatprep.subr.bf16.mxu0 0
    %910 = vmatpush1.bf16.msra.mxu0 %v607
    %911 = vmatprep.subr.bf16.mxu0 0
    %912 = vmatpush1.bf16.msra.mxu0 %v610
    %913 = vmatprep.subr.bf16.mxu0 0
    %914 = vmatpush1.bf16.msra.mxu0 %v613
    %915 = vmatprep.subr.bf16.mxu0 0
    %916 = vmatpush1.bf16.msra.mxu0 %v616
    %917 = vmatprep.subr.bf16.mxu0 0
    %918 = vmatpush1.bf16.msra.mxu0 %v619
    %919 = vmatprep.subr.bf16.mxu0 0
    %920 = vmatpush1.bf16.msra.mxu0 %v622
    %921 = vmatprep.subr.bf16.mxu0 0
    %922 = vmatpush1.bf16.msra.mxu0 %v625
    %923 = vmatprep.subr.bf16.mxu0 0
    %924 = vmatpush1.bf16.msra.mxu0 0
    %925 = vmatprep.subr.bf16.mxu0 0
    %926 = vmatpush1.bf16.msra.mxu0 0
    %927 = vmatprep.subr.bf16.mxu0 0
    %928 = vmatpush1.bf16.msra.mxu0 0
    %929 = vmatprep.subr.bf16.mxu0 0
    %930 = vmatpush1.bf16.msra.mxu0 0
    %931 = vmatprep.subr.bf16.mxu0 0
    %932 = vmatpush1.bf16.msra.mxu0 0
    %933 = vmatprep.subr.bf16.mxu0 0
    %934 = vmatpush1.bf16.msra.mxu0 0
    %935 = vmatprep.subr.bf16.mxu0 0
    %936 = vmatpush1.bf16.msra.mxu0 0
    %937 = vmatprep.subr.bf16.mxu0 0
    %938 = vmatpush1.bf16.msra.mxu0 0
    %939 = vmatprep.mubr.bf16.mxu0 0
    %940 = vmatmul.mubr.bf16.gmra.mrb[0].mxu0 %v863
    %v941 = vpop.f32.mrb[0].mxu0
    %v942 = vadd.f32 %v518, %v941
    %v943 = vpop.f32.mrb[0].mxu0
    %v944 = vpop.f32.mrb[0].mxu0
    %v945 = vpop.f32.mrb[0].mxu0
    %946 = vdwg.mxu0
    %s947 = scalar_lea.vmem [#allocation2], 48
    %v948 = vld [vmem:[%s947] sm:$0xff]
    %v949 = vld [vmem:[%s947 + $0x8] sm:$0xff]
    %v950 = vld [vmem:[%s947 + $0x10] sm:$0xff]
    %v951 = vadd.f32 %v948, %v901
    %v952 = vxor.u32 %v951, 2147483648
    %v953 = vmul.f32 %v952, 1.442695
    %v954 = vpow.pop %v953
    %v955 = vadd.f32 %v954, 1.0
    %v956 = vrcp.pop %v955
    %v957 = vmul.f32 1.0, %v956
    %v958 = vadd.f32 %v949, %v903
    %v959 = vxor.u32 %v958, 2147483648
    %v960 = vmul.f32 %v959, 1.442695
    %v961 = vpow.pop %v960
    %v962 = vadd.f32 %v961, 1.0
    %v963 = vrcp.pop %v962
    %v964 = vmul.f32 1.0, %v963
    %v965 = vmul.f32 %v957, %v942
    %v966 = vadd.f32 %v950, %v965
    %v967 = vtanh.pop %v966
    %v968 = vsub.f32 1.0, %v964
    %v969 = vmul.f32 %v968, %v967
    %v970 = vmul.f32 %v964, %v862
    %v971 = vadd.f32 %v969, %v970
    %v972 = vpack.c.bf16 %v971, %v971
    %s973 = scalar_lea.vmem [#allocation3], 8
    %974 = vst [vmem:[%s973] sm:$0xf] %v972
    %975 = vmatprep.subr.bf16.mxu0 %v603
    %976 = vmatpush1.bf16.msra.mxu0 %v602
    %977 = vmatprep.subr.bf16.mxu0 %v606
    %978 = vmatpush1.bf16.msra.mxu0 %v605
    %979 = vmatprep.subr.bf16.mxu0 %v609
    %980 = vmatpush1.bf16.msra.mxu0 %v608
    %981 = vmatprep.subr.bf16.mxu0 %v612
    %982 = vmatpush1.bf16.msra.mxu0 %v611
    %983 = vmatprep.subr.bf16.mxu0 %v615
    %984 = vmatpush1.bf16.msra.mxu0 %v614
    %985 = vmatprep.subr.bf16.mxu0 %v618
    %986 = vmatpush1.bf16.msra.mxu0 %v617
    %987 = vmatprep.subr.bf16.mxu0 %v621
    %988 = vmatpush1.bf16.msra.mxu0 %v620
    %989 = vmatprep.subr.bf16.mxu0 %v624
    %990 = vmatpush1.bf16.msra.mxu0 %v623
    %991 = vmatprep.subr.bf16.mxu0 0
    %992 = vmatpush1.bf16.msra.mxu0 0
    %993 = vmatprep.subr.bf16.mxu0 0
    %994 = vmatpush1.bf16.msra.mxu0 0
    %995 = vmatprep.subr.bf16.mxu0 0
    %996 = vmatpush1.bf16.msra.mxu0 0
    %997 = vmatprep.subr.bf16.mxu0 0
    %998 = vmatpush1.bf16.msra.mxu0 0
    %999 = vmatprep.subr.bf16.mxu0 0
    %1000 = vmatpush1.bf16.msra.mxu0 0
    %1001 = vmatprep.subr.bf16.mxu0 0
    %1002 = vmatpush1.bf16.msra.mxu0 0
    %1003 = vmatprep.subr.bf16.mxu0 0
    %1004 = vmatpush1.bf16.msra.mxu0 0
    %1005 = vmatprep.subr.bf16.mxu0 0
    %1006 = vmatpush1.bf16.msra.mxu0 0
    %1007 = vmatprep.mubr.bf16.mxu0 0
    %1008 = vmatmul.mubr.bf16.gmra.mrb[0].mxu0 %v972
    %v1009 = vpop.f32.mrb[0].mxu0
    %v1010 = vadd.f32 %v510, %v1009
    %v1011 = vpop.f32.mrb[0].mxu0
    %v1012 = vadd.f32 %v514, %v1011
    %v1013 = vpop.f32.mrb[0].mxu0
    %v1014 = vpop.f32.mrb[0].mxu0
    %1015 = vdwg.mxu0
    %1016 = vmatprep.subr.bf16.mxu0 0
    %1017 = vmatpush1.bf16.msra.mxu0 %v604
    %1018 = vmatprep.subr.bf16.mxu0 0
    %1019 = vmatpush1.bf16.msra.mxu0 %v607
    %1020 = vmatprep.subr.bf16.mxu0 0
    %1021 = vmatpush1.bf16.msra.mxu0 %v610
    %1022 = vmatprep.subr.bf16.mxu0 0
    %1023 = vmatpush1.bf16.msra.mxu0 %v613
    %1024 = vmatprep.subr.bf16.mxu0 0
    %1025 = vmatpush1.bf16.msra.mxu0 %v616
    %1026 = vmatprep.subr.bf16.mxu0 0
    %1027 = vmatpush1.bf16.msra.mxu0 %v619
    %1028 = vmatprep.subr.bf16.mxu0 0
    %1029 = vmatpush1.bf16.msra.mxu0 %v622
    %1030 = vmatprep.subr.bf16.mxu0 0
    %1031 = vmatpush1.bf16.msra.mxu0 %v625
    %1032 = vmatprep.subr.bf16.mxu0 0
    %1033 = vmatpush1.bf16.msra.mxu0 0
    %1034 = vmatprep.subr.bf16.mxu0 0
    %1035 = vmatpush1.bf16.msra.mxu0 0
    %1036 = vmatprep.subr.bf16.mxu0 0
    %1037 = vmatpush1.bf16.msra.mxu0 0
    %1038 = vmatprep.subr.bf16.mxu0 0
    %1039 = vmatpush1.bf16.msra.mxu0 0
    %1040 = vmatprep.subr.bf16.mxu0 0
    %1041 = vmatpush1.bf16.msra.mxu0 0
    %1042 = vmatprep.subr.bf16.mxu0 0
    %1043 = vmatpush1.bf16.msra.mxu0 0
    %1044 = vmatprep.subr.bf16.mxu0 0
    %1045 = vmatpush1.bf16.msra.mxu0 0
    %1046 = vmatprep.subr.bf16.mxu0 0
    %1047 = vmatpush1.bf16.msra.mxu0 0
    %1048 = vmatprep.mubr.bf16.mxu0 0
    %1049 = vmatmul.mubr.bf16.gmra.mrb[0].mxu0 %v972
    %v1050 = vpop.f32.mrb[0].mxu0
    %v1051 = vadd.f32 %v518, %v1050
    %v1052 = vpop.f32.mrb[0].mxu0
    %v1053 = vpop.f32.mrb[0].mxu0
    %v1054 = vpop.f32.mrb[0].mxu0
    %1055 = vdwg.mxu0
    %s1056 = scalar_lea.vmem [#allocation2], 72
    %v1057 = vld [vmem:[%s1056] sm:$0xff]
    %v1058 = vld [vmem:[%s1056 + $0x8] sm:$0xff]
    %v1059 = vld [vmem:[%s1056 + $0x10] sm:$0xff]
    %v1060 = vadd.f32 %v1057, %v1010
    %v1061 = vxor.u32 %v1060, 2147483648
    %v1062 = vmul.f32 %v1061, 1.442695
    %v1063 = vpow.pop %v1062
    %v1064 = vadd.f32 %v1063, 1.0
    %v1065 = vrcp.pop %v1064
    %v1066 = vmul.f32 1.0, %v1065
    %v1067 = vadd.f32 %v1058, %v1012
    %v1068 = vxor.u32 %v1067, 2147483648
    %v1069 = vmul.f32 %v1068, 1.442695
    %v1070 = vpow.pop %v1069
    %v1071 = vadd.f32 %v1070, 1.0
    %v1072 = vrcp.pop %v1071
    %v1073 = vmul.f32 1.0, %v1072
    %v1074 = vmul.f32 %v1066, %v1051
    %v1075 = vadd.f32 %v1059, %v1074
    %v1076 = vtanh.pop %v1075
    %v1077 = vsub.f32 1.0, %v1073
    %v1078 = vmul.f32 %v1077, %v1076
    %v1079 = vmul.f32 %v1073, %v971
    %v1080 = vadd.f32 %v1078, %v1079
    %v1081 = vpack.c.bf16 %v1080, %v1080
    %s1082 = scalar_lea.vmem [#allocation3], 12
    %1083 = vst [vmem:[%s1082] sm:$0xf] %v1081
    %1084 = vmatprep.subr.bf16.mxu0 %v603
    %1085 = vmatpush1.bf16.msra.mxu0 %v602
    %1086 = vmatprep.subr.bf16.mxu0 %v606
    %1087 = vmatpush1.bf16.msra.mxu0 %v605
    %1088 = vmatprep.subr.bf16.mxu0 %v609
    %1089 = vmatpush1.bf16.msra.mxu0 %v608
    %1090 = vmatprep.subr.bf16.mxu0 %v612
    %1091 = vmatpush1.bf16.msra.mxu0 %v611
    %1092 = vmatprep.subr.bf16.mxu0 %v615
    %1093 = vmatpush1.bf16.msra.mxu0 %v614
    %1094 = vmatprep.subr.bf16.mxu0 %v618
    %1095 = vmatpush1.bf16.msra.mxu0 %v617
    %1096 = vmatprep.subr.bf16.mxu0 %v621
    %1097 = vmatpush1.bf16.msra.mxu0 %v620
    %1098 = vmatprep.subr.bf16.mxu0 %v624
    %1099 = vmatpush1.bf16.msra.mxu0 %v623
    %1100 = vmatprep.subr.bf16.mxu0 0
    %1101 = vmatpush1.bf16.msra.mxu0 0
    %1102 = vmatprep.subr.bf16.mxu0 0
    %1103 = vmatpush1.bf16.msra.mxu0 0
    %1104 = vmatprep.subr.bf16.mxu0 0
    %1105 = vmatpush1.bf16.msra.mxu0 0
    %1106 = vmatprep.subr.bf16.mxu0 0
    %1107 = vmatpush1.bf16.msra.mxu0 0
    %1108 = vmatprep.subr.bf16.mxu0 0
    %1109 = vmatpush1.bf16.msra.mxu0 0
    %1110 = vmatprep.subr.bf16.mxu0 0
    %1111 = vmatpush1.bf16.msra.mxu0 0
    %1112 = vmatprep.subr.bf16.mxu0 0
    %1113 = vmatpush1.bf16.msra.mxu0 0
    %1114 = vmatprep.subr.bf16.mxu0 0
    %1115 = vmatpush1.bf16.msra.mxu0 0
    %1116 = vmatprep.mubr.bf16.mxu0 0
    %1117 = vmatmul.mubr.bf16.gmra.mrb[0].mxu0 %v1081
    %v1118 = vpop.f32.mrb[0].mxu0
    %v1119 = vadd.f32 %v510, %v1118
    %v1120 = vpop.f32.mrb[0].mxu0
    %v1121 = vadd.f32 %v514, %v1120
    %v1122 = vpop.f32.mrb[0].mxu0
    %v1123 = vpop.f32.mrb[0].mxu0
    %1124 = vdwg.mxu0
    %1125 = vmatprep.subr.bf16.mxu0 0
    %1126 = vmatpush1.bf16.msra.mxu0 %v604
    %1127 = vmatprep.subr.bf16.mxu0 0
    %1128 = vmatpush1.bf16.msra.mxu0 %v607
    %1129 = vmatprep.subr.bf16.mxu0 0
    %1130 = vmatpush1.bf16.msra.mxu0 %v610
    %1131 = vmatprep.subr.bf16.mxu0 0
    %1132 = vmatpush1.bf16.msra.mxu0 %v613
    %1133 = vmatprep.subr.bf16.mxu0 0
    %1134 = vmatpush1.bf16.msra.mxu0 %v616
    %1135 = vmatprep.subr.bf16.mxu0 0
    %1136 = vmatpush1.bf16.msra.mxu0 %v619
    %1137 = vmatprep.subr.bf16.mxu0 0
    %1138 = vmatpush1.bf16.msra.mxu0 %v622
    %1139 = vmatprep.subr.bf16.mxu0 0
    %1140 = vmatpush1.bf16.msra.mxu0 %v625
    %1141 = vmatprep.subr.bf16.mxu0 0
    %1142 = vmatpush1.bf16.msra.mxu0 0
    %1143 = vmatprep.subr.bf16.mxu0 0
    %1144 = vmatpush1.bf16.msra.mxu0 0
    %1145 = vmatprep.subr.bf16.mxu0 0
    %1146 = vmatpush1.bf16.msra.mxu0 0
    %1147 = vmatprep.subr.bf16.mxu0 0
    %1148 = vmatpush1.bf16.msra.mxu0 0
    %1149 = vmatprep.subr.bf16.mxu0 0
    %1150 = vmatpush1.bf16.msra.mxu0 0
    %1151 = vmatprep.subr.bf16.mxu0 0
    %1152 = vmatpush1.bf16.msra.mxu0 0
    %1153 = vmatprep.subr.bf16.mxu0 0
    %1154 = vmatpush1.bf16.msra.mxu0 0
    %1155 = vmatprep.subr.bf16.mxu0 0
    %1156 = vmatpush1.bf16.msra.mxu0 0
    %1157 = vmatprep.mubr.bf16.mxu0 0
    %1158 = vmatmul.mubr.bf16.gmra.mrb[0].mxu0 %v1081
    %v1159 = vpop.f32.mrb[0].mxu0
    %v1160 = vadd.f32 %v518, %v1159
    %v1161 = vpop.f32.mrb[0].mxu0
    %v1162 = vpop.f32.mrb[0].mxu0
    %v1163 = vpop.f32.mrb[0].mxu0
    %1164 = vdwg.mxu0
    %s1165 = scalar_lea.vmem [#allocation2], 96
    %v1166 = vld [vmem:[%s1165] sm:$0xff]
    %v1167 = vld [vmem:[%s1165 + $0x8] sm:$0xff]
    %v1168 = vld [vmem:[%s1165 + $0x10] sm:$0xff]
    %v1169 = vadd.f32 %v1166, %v1119
    %v1170 = vxor.u32 %v1169, 2147483648
    %v1171 = vmul.f32 %v1170, 1.442695
    %v1172 = vpow.pop %v1171
    %v1173 = vadd.f32 %v1172, 1.0
    %v1174 = vrcp.pop %v1173
    %v1175 = vmul.f32 1.0, %v1174
    %v1176 = vadd.f32 %v1167, %v1121
    %v1177 = vxor.u32 %v1176, 2147483648
    %v1178 = vmul.f32 %v1177, 1.442695
    %v1179 = vpow.pop %v1178
    %v1180 = vadd.f32 %v1179, 1.0
    %v1181 = vrcp.pop %v1180
    %v1182 = vmul.f32 1.0, %v1181
    %v1183 = vmul.f32 %v1175, %v1160
    %v1184 = vadd.f32 %v1168, %v1183
    %v1185 = vtanh.pop %v1184
    %v1186 = vsub.f32 1.0, %v1182
    %v1187 = vmul.f32 %v1186, %v1185
    %v1188 = vmul.f32 %v1182, %v1080
    %v1189 = vadd.f32 %v1187, %v1188
    %v1190 = vpack.c.bf16 %v1189, %v1189
    %s1191 = scalar_lea.vmem [#allocation3], 16
    %1192 = vst [vmem:[%s1191] sm:$0xf] %v1190
    %1193 = vmatprep.subr.bf16.mxu0 %v603
    %1194 = vmatpush1.bf16.msra.mxu0 %v602
    %1195 = vmatprep.subr.bf16.mxu0 %v606
    %1196 = vmatpush1.bf16.msra.mxu0 %v605
    %1197 = vmatprep.subr.bf16.mxu0 %v609
    %1198 = vmatpush1.bf16.msra.mxu0 %v608
    %1199 = vmatprep.subr.bf16.mxu0 %v612
    %1200 = vmatpush1.bf16.msra.mxu0 %v611
    %1201 = vmatprep.subr.bf16.mxu0 %v615
    %1202 = vmatpush1.bf16.msra.mxu0 %v614
    %1203 = vmatprep.subr.bf16.mxu0 %v618
    %1204 = vmatpush1.bf16.msra.mxu0 %v617
    %1205 = vmatprep.subr.bf16.mxu0 %v621
    %1206 = vmatpush1.bf16.msra.mxu0 %v620
    %1207 = vmatprep.subr.bf16.mxu0 %v624
    %1208 = vmatpush1.bf16.msra.mxu0 %v623
    %1209 = vmatprep.subr.bf16.mxu0 0
    %1210 = vmatpush1.bf16.msra.mxu0 0
    %1211 = vmatprep.subr.bf16.mxu0 0
    %1212 = vmatpush1.bf16.msra.mxu0 0
    %1213 = vmatprep.subr.bf16.mxu0 0
    %1214 = vmatpush1.bf16.msra.mxu0 0
    %1215 = vmatprep.subr.bf16.mxu0 0
    %1216 = vmatpush1.bf16.msra.mxu0 0
    %1217 = vmatprep.subr.bf16.mxu0 0
    %1218 = vmatpush1.bf16.msra.mxu0 0
    %1219 = vmatprep.subr.bf16.mxu0 0
    %1220 = vmatpush1.bf16.msra.mxu0 0
    %1221 = vmatprep.subr.bf16.mxu0 0
    %1222 = vmatpush1.bf16.msra.mxu0 0
    %1223 = vmatprep.subr.bf16.mxu0 0
    %1224 = vmatpush1.bf16.msra.mxu0 0
    %1225 = vmatprep.mubr.bf16.mxu0 0
    %1226 = vmatmul.mubr.bf16.gmra.mrb[0].mxu0 %v1190
    %v1227 = vpop.f32.mrb[0].mxu0
    %v1228 = vadd.f32 %v510, %v1227
    %v1229 = vpop.f32.mrb[0].mxu0
    %v1230 = vadd.f32 %v514, %v1229
    %v1231 = vpop.f32.mrb[0].mxu0
    %v1232 = vpop.f32.mrb[0].mxu0
    %1233 = vdwg.mxu0
    %1234 = vmatprep.subr.bf16.mxu0 0
    %1235 = vmatpush1.bf16.msra.mxu0 %v604
    %1236 = vmatprep.subr.bf16.mxu0 0
    %1237 = vmatpush1.bf16.msra.mxu0 %v607
    %1238 = vmatprep.subr.bf16.mxu0 0
    %1239 = vmatpush1.bf16.msra.mxu0 %v610
    %1240 = vmatprep.subr.bf16.mxu0 0
    %1241 = vmatpush1.bf16.msra.mxu0 %v613
    %1242 = vmatprep.subr.bf16.mxu0 0
    %1243 = vmatpush1.bf16.msra.mxu0 %v616
    %1244 = vmatprep.subr.bf16.mxu0 0
    %1245 = vmatpush1.bf16.msra.mxu0 %v619
    %1246 = vmatprep.subr.bf16.mxu0 0
    %1247 = vmatpush1.bf16.msra.mxu0 %v622
    %1248 = vmatprep.subr.bf16.mxu0 0
    %1249 = vmatpush1.bf16.msra.mxu0 %v625
    %1250 = vmatprep.subr.bf16.mxu0 0
    %1251 = vmatpush1.bf16.msra.mxu0 0
    %1252 = vmatprep.subr.bf16.mxu0 0
    %1253 = vmatpush1.bf16.msra.mxu0 0
    %1254 = vmatprep.subr.bf16.mxu0 0
    %1255 = vmatpush1.bf16.msra.mxu0 0
    %1256 = vmatprep.subr.bf16.mxu0 0
    %1257 = vmatpush1.bf16.msra.mxu0 0
    %1258 = vmatprep.subr.bf16.mxu0 0
    %1259 = vmatpush1.bf16.msra.mxu0 0
    %1260 = vmatprep.subr.bf16.mxu0 0
    %1261 = vmatpush1.bf16.msra.mxu0 0
    %1262 = vmatprep.subr.bf16.mxu0 0
    %1263 = vmatpush1.bf16.msra.mxu0 0
    %1264 = vmatprep.subr.bf16.mxu0 0
    %1265 = vmatpush1.bf16.msra.mxu0 0
    %1266 = vmatprep.mubr.bf16.mxu0 0
    %1267 = vmatmul.mubr.bf16.gmra.mrb[0].mxu0 %v1190
    %v1268 = vpop.f32.mrb[0].mxu0
    %v1269 = vadd.f32 %v518, %v1268
    %v1270 = vpop.f32.mrb[0].mxu0
    %v1271 = vpop.f32.mrb[0].mxu0
    %v1272 = vpop.f32.mrb[0].mxu0
    %1273 = vdwg.mxu0
    %s1274 = scalar_lea.vmem [#allocation2], 120
    %v1275 = vld [vmem:[%s1274] sm:$0xff]
    %v1276 = vld [vmem:[%s1274 + $0x8] sm:$0xff]
    %v1277 = vld [vmem:[%s1274 + $0x10] sm:$0xff]
    %v1278 = vadd.f32 %v1275, %v1228
    %v1279 = vxor.u32 %v1278, 2147483648
    %v1280 = vmul.f32 %v1279, 1.442695
    %v1281 = vpow.pop %v1280
    %v1282 = vadd.f32 %v1281, 1.0
    %v1283 = vrcp.pop %v1282
    %v1284 = vmul.f32 1.0, %v1283
    %v1285 = vadd.f32 %v1276, %v1230
    %v1286 = vxor.u32 %v1285, 2147483648
    %v1287 = vmul.f32 %v1286, 1.442695
    %v1288 = vpow.pop %v1287
    %v1289 = vadd.f32 %v1288, 1.0
    %v1290 = vrcp.pop %v1289
    %v1291 = vmul.f32 1.0, %v1290
    %v1292 = vmul.f32 %v1284, %v1269
    %v1293 = vadd.f32 %v1277, %v1292
    %v1294 = vtanh.pop %v1293
    %v1295 = vsub.f32 1.0, %v1291
    %v1296 = vmul.f32 %v1295, %v1294
    %v1297 = vmul.f32 %v1291, %v1189
    %v1298 = vadd.f32 %v1296, %v1297
    %v1299 = vpack.c.bf16 %v1298, %v1298
    %s1300 = scalar_lea.vmem [#allocation3], 20
    %1301 = vst [vmem:[%s1300] sm:$0xf] %v1299
    %1302 = vmatprep.subr.bf16.mxu0 %v603
    %1303 = vmatpush1.bf16.msra.mxu0 %v602
    %1304 = vmatprep.subr.bf16.mxu0 %v606
    %1305 = vmatpush1.bf16.msra.mxu0 %v605
    %1306 = vmatprep.subr.bf16.mxu0 %v609
    %1307 = vmatpush1.bf16.msra.mxu0 %v608
    %1308 = vmatprep.subr.bf16.mxu0 %v612
    %1309 = vmatpush1.bf16.msra.mxu0 %v611
    %1310 = vmatprep.subr.bf16.mxu0 %v615
    %1311 = vmatpush1.bf16.msra.mxu0 %v614
    %1312 = vmatprep.subr.bf16.mxu0 %v618
    %1313 = vmatpush1.bf16.msra.mxu0 %v617
    %1314 = vmatprep.subr.bf16.mxu0 %v621
    %1315 = vmatpush1.bf16.msra.mxu0 %v620
    %1316 = vmatprep.subr.bf16.mxu0 %v624
    %1317 = vmatpush1.bf16.msra.mxu0 %v623
    %1318 = vmatprep.subr.bf16.mxu0 0
    %1319 = vmatpush1.bf16.msra.mxu0 0
    %1320 = vmatprep.subr.bf16.mxu0 0
    %1321 = vmatpush1.bf16.msra.mxu0 0
    %1322 = vmatprep.subr.bf16.mxu0 0
    %1323 = vmatpush1.bf16.msra.mxu0 0
    %1324 = vmatprep.subr.bf16.mxu0 0
    %1325 = vmatpush1.bf16.msra.mxu0 0
    %1326 = vmatprep.subr.bf16.mxu0 0
    %1327 = vmatpush1.bf16.msra.mxu0 0
    %1328 = vmatprep.subr.bf16.mxu0 0
    %1329 = vmatpush1.bf16.msra.mxu0 0
    %1330 = vmatprep.subr.bf16.mxu0 0
    %1331 = vmatpush1.bf16.msra.mxu0 0
    %1332 = vmatprep.subr.bf16.mxu0 0
    %1333 = vmatpush1.bf16.msra.mxu0 0
    %1334 = vmatprep.mubr.bf16.mxu0 0
    %1335 = vmatmul.mubr.bf16.gmra.mrb[0].mxu0 %v1299
    %v1336 = vpop.f32.mrb[0].mxu0
    %v1337 = vadd.f32 %v510, %v1336
    %v1338 = vpop.f32.mrb[0].mxu0
    %v1339 = vadd.f32 %v514, %v1338
    %v1340 = vpop.f32.mrb[0].mxu0
    %v1341 = vpop.f32.mrb[0].mxu0
    %1342 = vdwg.mxu0
    %1343 = vmatprep.subr.bf16.mxu0 0
    %1344 = vmatpush1.bf16.msra.mxu0 %v604
    %1345 = vmatprep.subr.bf16.mxu0 0
    %1346 = vmatpush1.bf16.msra.mxu0 %v607
    %1347 = vmatprep.subr.bf16.mxu0 0
    %1348 = vmatpush1.bf16.msra.mxu0 %v610
    %1349 = vmatprep.subr.bf16.mxu0 0
    %1350 = vmatpush1.bf16.msra.mxu0 %v613
    %1351 = vmatprep.subr.bf16.mxu0 0
    %1352 = vmatpush1.bf16.msra.mxu0 %v616
    %1353 = vmatprep.subr.bf16.mxu0 0
    %1354 = vmatpush1.bf16.msra.mxu0 %v619
    %1355 = vmatprep.subr.bf16.mxu0 0
    %1356 = vmatpush1.bf16.msra.mxu0 %v622
    %1357 = vmatprep.subr.bf16.mxu0 0
    %1358 = vmatpush1.bf16.msra.mxu0 %v625
    %1359 = vmatprep.subr.bf16.mxu0 0
    %1360 = vmatpush1.bf16.msra.mxu0 0
    %1361 = vmatprep.subr.bf16.mxu0 0
    %1362 = vmatpush1.bf16.msra.mxu0 0
    %1363 = vmatprep.subr.bf16.mxu0 0
    %1364 = vmatpush1.bf16.msra.mxu0 0
    %1365 = vmatprep.subr.bf16.mxu0 0
    %1366 = vmatpush1.bf16.msra.mxu0 0
    %1367 = vmatprep.subr.bf16.mxu0 0
    %1368 = vmatpush1.bf16.msra.mxu0 0
    %1369 = vmatprep.subr.bf16.mxu0 0
    %1370 = vmatpush1.bf16.msra.mxu0 0
    %1371 = vmatprep.subr.bf16.mxu0 0
    %1372 = vmatpush1.bf16.msra.mxu0 0
    %1373 = vmatprep.subr.bf16.mxu0 0
    %1374 = vmatpush1.bf16.msra.mxu0 0
    %1375 = vmatprep.mubr.bf16.mxu0 0
    %1376 = vmatmul.mubr.bf16.gmra.mrb[0].mxu0 %v1299
    %v1377 = vpop.f32.mrb[0].mxu0
    %v1378 = vadd.f32 %v518, %v1377
    %v1379 = vpop.f32.mrb[0].mxu0
    %v1380 = vpop.f32.mrb[0].mxu0
    %v1381 = vpop.f32.mrb[0].mxu0
    %1382 = vdwg.mxu0
    %s1383 = scalar_lea.vmem [#allocation2], 144
    %v1384 = vld [vmem:[%s1383] sm:$0xff]
    %v1385 = vld [vmem:[%s1383 + $0x8] sm:$0xff]
    %v1386 = vld [vmem:[%s1383 + $0x10] sm:$0xff]
    %v1387 = vadd.f32 %v1384, %v1337
    %v1388 = vxor.u32 %v1387, 2147483648
    %v1389 = vmul.f32 %v1388, 1.442695
    %v1390 = vpow.pop %v1389
    %v1391 = vadd.f32 %v1390, 1.0
    %v1392 = vrcp.pop %v1391
    %v1393 = vmul.f32 1.0, %v1392
    %v1394 = vadd.f32 %v1385, %v1339
    %v1395 = vxor.u32 %v1394, 2147483648
    %v1396 = vmul.f32 %v1395, 1.442695
    %v1397 = vpow.pop %v1396
    %v1398 = vadd.f32 %v1397, 1.0
    %v1399 = vrcp.pop %v1398
    %v1400 = vmul.f32 1.0, %v1399
    %v1401 = vmul.f32 %v1393, %v1378
    %v1402 = vadd.f32 %v1386, %v1401
    %v1403 = vtanh.pop %v1402
    %v1404 = vsub.f32 1.0, %v1400
    %v1405 = vmul.f32 %v1404, %v1403
    %v1406 = vmul.f32 %v1400, %v1298
    %v1407 = vadd.f32 %v1405, %v1406
    %v1408 = vpack.c.bf16 %v1407, %v1407
    %s1409 = scalar_lea.vmem [#allocation3], 24
    %1410 = vst [vmem:[%s1409] sm:$0xf] %v1408
    %1411 = vmatprep.subr.bf16.mxu0 %v603
    %1412 = vmatpush1.bf16.msra.mxu0 %v602
    %1413 = vmatprep.subr.bf16.mxu0 %v606
    %1414 = vmatpush1.bf16.msra.mxu0 %v605
    %1415 = vmatprep.subr.bf16.mxu0 %v609
    %1416 = vmatpush1.bf16.msra.mxu0 %v608
    %1417 = vmatprep.subr.bf16.mxu0 %v612
    %1418 = vmatpush1.bf16.msra.mxu0 %v611
    %1419 = vmatprep.subr.bf16.mxu0 %v615
    %1420 = vmatpush1.bf16.msra.mxu0 %v614
    %1421 = vmatprep.subr.bf16.mxu0 %v618
    %1422 = vmatpush1.bf16.msra.mxu0 %v617
    %1423 = vmatprep.subr.bf16.mxu0 %v621
    %1424 = vmatpush1.bf16.msra.mxu0 %v620
    %1425 = vmatprep.subr.bf16.mxu0 %v624
    %1426 = vmatpush1.bf16.msra.mxu0 %v623
    %1427 = vmatprep.subr.bf16.mxu0 0
    %1428 = vmatpush1.bf16.msra.mxu0 0
    %1429 = vmatprep.subr.bf16.mxu0 0
    %1430 = vmatpush1.bf16.msra.mxu0 0
    %1431 = vmatprep.subr.bf16.mxu0 0
    %1432 = vmatpush1.bf16.msra.mxu0 0
    %1433 = vmatprep.subr.bf16.mxu0 0
    %1434 = vmatpush1.bf16.msra.mxu0 0
    %1435 = vmatprep.subr.bf16.mxu0 0
    %1436 = vmatpush1.bf16.msra.mxu0 0
    %1437 = vmatprep.subr.bf16.mxu0 0
    %1438 = vmatpush1.bf16.msra.mxu0 0
    %1439 = vmatprep.subr.bf16.mxu0 0
    %1440 = vmatpush1.bf16.msra.mxu0 0
    %1441 = vmatprep.subr.bf16.mxu0 0
    %1442 = vmatpush1.bf16.msra.mxu0 0
    %1443 = vmatprep.mubr.bf16.mxu0 0
    %1444 = vmatmul.mubr.bf16.gmra.mrb[0].mxu0 %v1408
    %v1445 = vpop.f32.mrb[0].mxu0
    %v1446 = vadd.f32 %v510, %v1445
    %v1447 = vpop.f32.mrb[0].mxu0
    %v1448 = vadd.f32 %v514, %v1447
    %v1449 = vpop.f32.mrb[0].mxu0
    %v1450 = vpop.f32.mrb[0].mxu0
    %1451 = vdwg.mxu0
    %1452 = vmatprep.subr.bf16.mxu0 0
    %1453 = vmatpush1.bf16.msra.mxu0 %v604
    %1454 = vmatprep.subr.bf16.mxu0 0
    %1455 = vmatpush1.bf16.msra.mxu0 %v607
    %1456 = vmatprep.subr.bf16.mxu0 0
    %1457 = vmatpush1.bf16.msra.mxu0 %v610
    %1458 = vmatprep.subr.bf16.mxu0 0
    %1459 = vmatpush1.bf16.msra.mxu0 %v613
    %1460 = vmatprep.subr.bf16.mxu0 0
    %1461 = vmatpush1.bf16.msra.mxu0 %v616
    %1462 = vmatprep.subr.bf16.mxu0 0
    %1463 = vmatpush1.bf16.msra.mxu0 %v619
    %1464 = vmatprep.subr.bf16.mxu0 0
    %1465 = vmatpush1.bf16.msra.mxu0 %v622
    %1466 = vmatprep.subr.bf16.mxu0 0
    %1467 = vmatpush1.bf16.msra.mxu0 %v625
    %1468 = vmatprep.subr.bf16.mxu0 0
    %1469 = vmatpush1.bf16.msra.mxu0 0
    %1470 = vmatprep.subr.bf16.mxu0 0
    %1471 = vmatpush1.bf16.msra.mxu0 0
    %1472 = vmatprep.subr.bf16.mxu0 0
    %1473 = vmatpush1.bf16.msra.mxu0 0
    %1474 = vmatprep.subr.bf16.mxu0 0
    %1475 = vmatpush1.bf16.msra.mxu0 0
    %1476 = vmatprep.subr.bf16.mxu0 0
    %1477 = vmatpush1.bf16.msra.mxu0 0
    %1478 = vmatprep.subr.bf16.mxu0 0
    %1479 = vmatpush1.bf16.msra.mxu0 0
    %1480 = vmatprep.subr.bf16.mxu0 0
    %1481 = vmatpush1.bf16.msra.mxu0 0
    %1482 = vmatprep.subr.bf16.mxu0 0
    %1483 = vmatpush1.bf16.msra.mxu0 0
    %1484 = vmatprep.mubr.bf16.mxu0 0
    %1485 = vmatmul.mubr.bf16.gmra.mrb[0].mxu0 %v1408
    %v1486 = vpop.f32.mrb[0].mxu0
    %v1487 = vadd.f32 %v518, %v1486
    %v1488 = vpop.f32.mrb[0].mxu0
    %v1489 = vpop.f32.mrb[0].mxu0
    %v1490 = vpop.f32.mrb[0].mxu0
    %1491 = vdwg.mxu0
    %s1492 = scalar_lea.vmem [#allocation2], 168
    %v1493 = vld [vmem:[%s1492] sm:$0xff]
    %v1494 = vld [vmem:[%s1492 + $0x8] sm:$0xff]
    %v1495 = vld [vmem:[%s1492 + $0x10] sm:$0xff]
    %v1496 = vadd.f32 %v1493, %v1446
    %v1497 = vxor.u32 %v1496, 2147483648
    %v1498 = vmul.f32 %v1497, 1.442695
    %v1499 = vpow.pop %v1498
    %v1500 = vadd.f32 %v1499, 1.0
    %v1501 = vrcp.pop %v1500
    %v1502 = vmul.f32 1.0, %v1501
    %v1503 = vadd.f32 %v1494, %v1448
    %v1504 = vxor.u32 %v1503, 2147483648
    %v1505 = vmul.f32 %v1504, 1.442695
    %v1506 = vpow.pop %v1505
    %v1507 = vadd.f32 %v1506, 1.0
    %v1508 = vrcp.pop %v1507
    %v1509 = vmul.f32 1.0, %v1508
    %v1510 = vmul.f32 %v1502, %v1487
    %v1511 = vadd.f32 %v1495, %v1510
    %v1512 = vtanh.pop %v1511
    %v1513 = vsub.f32 1.0, %v1509
    %v1514 = vmul.f32 %v1513, %v1512
    %v1515 = vmul.f32 %v1509, %v1407
    %v1516 = vadd.f32 %v1514, %v1515
    %v1517 = vpack.c.bf16 %v1516, %v1516
    %s1518 = scalar_lea.vmem [#allocation3], 28
    %1519 = vst [vmem:[%s1518] sm:$0xf] %v1517
    %v1520 = vld [vmem:[#allocation3] sm:$0xf]
    %v1521 = vld [vmem:[#allocation3 + $0x4] sm:$0xf]
    %v1522 = vld [vmem:[#allocation3 + $0x8] sm:$0xf]
    %v1523 = vld [vmem:[#allocation3 + $0xc] sm:$0xf]
    %v1524 = vld [vmem:[#allocation3 + $0x10] sm:$0xf]
    %v1525 = vld [vmem:[#allocation3 + $0x14] sm:$0xf]
    %v1526 = vld [vmem:[#allocation3 + $0x18] sm:$0xf]
    %v1527 = vld [vmem:[#allocation3 + $0x1c] sm:$0xf]
    %v1528 = vld [vmem:[#allocation10] sm:$0xff]
    %v1529 = vld [vmem:[#allocation10 + $0x8] sm:$0xf]
    %v1530 = vld [vmem:[#allocation10 + $0xc] sm:$0xff]
    %v1531 = vld [vmem:[#allocation10 + $0x14] sm:$0xf]
    %v1532 = vld [vmem:[#allocation10 + $0x18] sm:$0xff]
    %v1533 = vld [vmem:[#allocation10 + $0x20] sm:$0xf]
    %v1534 = vld [vmem:[#allocation10 + $0x24] sm:$0xff]
    %v1535 = vld [vmem:[#allocation10 + $0x2c] sm:$0xf]
    %v1536 = vld [vmem:[#allocation10 + $0x30] sm:$0xff]
    %v1537 = vld [vmem:[#allocation10 + $0x38] sm:$0xf]
    %v1538 = vld [vmem:[#allocation10 + $0x3c] sm:$0xff]
    %v1539 = vld [vmem:[#allocation10 + $0x44] sm:$0xf]
    %v1540 = vld [vmem:[#allocation10 + $0x48] sm:$0xff]
    %v1541 = vld [vmem:[#allocation10 + $0x50] sm:$0xf]
    %v1542 = vld [vmem:[#allocation10 + $0x54] sm:$0xff]
    %v1543 = vld [vmem:[#allocation10 + $0x5c] sm:$0xf]
    %v1544 = vld [vmem:[#allocation10 + $0x60] sm:$0xff]
    %v1545 = vld [vmem:[#allocation10 + $0x68] sm:$0xf]
    %v1546 = vld [vmem:[#allocation10 + $0x6c] sm:$0xff]
    %v1547 = vld [vmem:[#allocation10 + $0x74] sm:$0xf]
    %v1548 = vld [vmem:[#allocation10 + $0x78] sm:$0xff]
    %v1549 = vld [vmem:[#allocation10 + $0x80] sm:$0xf]
    %v1550 = vld [vmem:[#allocation10 + $0x84] sm:$0xff]
    %v1551 = vld [vmem:[#allocation10 + $0x8c] sm:$0xf]
    %v1552 = vld [vmem:[#allocation10 + $0x90] sm:$0xff]
    %v1553 = vld [vmem:[#allocation10 + $0x98] sm:$0xf]
    %v1554 = vld [vmem:[#allocation10 + $0x9c] sm:$0xff]
    %v1555 = vld [vmem:[#allocation10 + $0xa4] sm:$0xf]
    %v1556 = vld [vmem:[#allocation10 + $0xa8] sm:$0xff]
    %v1557 = vld [vmem:[#allocation10 + $0xb0] sm:$0xf]
    %v1558 = vld [vmem:[#allocation10 + $0xb4] sm:$0xff]
    %v1559 = vld [vmem:[#allocation10 + $0xbc] sm:$0xf]
    %v1560 = vld [vmem:[%s7] sm:$0x7]
    %v1562 = vlaneseq
    %v1563 = vshrl.u32 %v1562, 7
    %v1564 = vsub.s32 0, %v1563
    %v1565 = vrot.slane %v1560, %v1564
    %v1566 = vlaneseq
    %v1567 = vshrl.u32 %v1566, 7
    %v1568 = vsub.s32 1, %v1567
    %v1569 = vrot.slane %v1560, %v1568
    %v1570 = vlaneseq
    %v1571 = vshrl.u32 %v1570, 7
    %v1572 = vsub.s32 2, %v1571
    %v1573 = vrot.slane %v1560, %v1572
    %v1585 = vunpack.c.l.b16 %v1520
    %v1586 = vunpack.c.l.b16 %v1521
    %v1587 = vunpack.c.l.b16 %v1522
    %v1588 = vunpack.c.l.b16 %v1523
    %v1589 = vunpack.c.l.b16 %v1524
    %v1590 = vunpack.c.l.b16 %v1525
    %v1591 = vunpack.c.l.b16 %v1526
    %v1592 = vunpack.c.l.b16 %v1527
    %v1593 = vpack.c.b16 %v1586, %v1585
    %v1594 = vpack.c.b16 %v1588, %v1587
    %v1595 = vpack.c.b16 %v1590, %v1589
    %v1596 = vpack.c.b16 %v1592, %v1591
    %v1633 = vunpack.c.l.b16 %v1528
    %v1634 = vunpack.c.h.b16 %v1528
    %v1635 = vunpack.c.l.b16 %v1529
    %v1636 = vunpack.c.l.b16 %v1530
    %v1637 = vunpack.c.h.b16 %v1530
    %v1638 = vunpack.c.l.b16 %v1531
    %v1639 = vunpack.c.l.b16 %v1532
    %v1640 = vunpack.c.h.b16 %v1532
    %v1641 = vunpack.c.l.b16 %v1533
    %v1642 = vunpack.c.l.b16 %v1534
    %v1643 = vunpack.c.h.b16 %v1534
    %v1644 = vunpack.c.l.b16 %v1535
    %v1645 = vunpack.c.l.b16 %v1536
    %v1646 = vunpack.c.h.b16 %v1536
    %v1647 = vunpack.c.l.b16 %v1537
    %v1648 = vunpack.c.l.b16 %v1538
    %v1649 = vunpack.c.h.b16 %v1538
    %v1650 = vunpack.c.l.b16 %v1539
    %v1651 = vunpack.c.l.b16 %v1540
    %v1652 = vunpack.c.h.b16 %v1540
    %v1653 = vunpack.c.l.b16 %v1541
    %v1654 = vunpack.c.l.b16 %v1542
    %v1655 = vunpack.c.h.b16 %v1542
    %v1656 = vunpack.c.l.b16 %v1543
    %v1657 = vunpack.c.l.b16 %v1544
    %v1658 = vunpack.c.h.b16 %v1544
    %v1659 = vunpack.c.l.b16 %v1545
    %v1660 = vunpack.c.l.b16 %v1546
    %v1661 = vunpack.c.h.b16 %v1546
    %v1662 = vunpack.c.l.b16 %v1547
    %v1663 = vunpack.c.l.b16 %v1548
    %v1664 = vunpack.c.h.b16 %v1548
    %v1665 = vunpack.c.l.b16 %v1549
    %v1666 = vunpack.c.l.b16 %v1550
    %v1667 = vunpack.c.h.b16 %v1550
    %v1668 = vunpack.c.l.b16 %v1551
    %v1669 = vunpack.c.l.b16 %v1552
    %v1670 = vunpack.c.h.b16 %v1552
    %v1671 = vunpack.c.l.b16 %v1553
    %v1672 = vunpack.c.l.b16 %v1554
    %v1673 = vunpack.c.h.b16 %v1554
    %v1674 = vunpack.c.l.b16 %v1555
    %v1675 = vunpack.c.l.b16 %v1556
    %v1676 = vunpack.c.h.b16 %v1556
    %v1677 = vunpack.c.l.b16 %v1557
    %v1678 = vunpack.c.l.b16 %v1558
    %v1679 = vunpack.c.h.b16 %v1558
    %v1680 = vunpack.c.l.b16 %v1559
    %v1681 = vpack.c.b16 %v1636, %v1633
    %v1682 = vpack.c.b16 %v1637, %v1634
    %v1683 = vpack.c.b16 %v1638, %v1635
    %v1684 = vpack.c.b16 %v1642, %v1639
    %v1685 = vpack.c.b16 %v1643, %v1640
    %v1686 = vpack.c.b16 %v1644, %v1641
    %v1687 = vpack.c.b16 %v1648, %v1645
    %v1688 = vpack.c.b16 %v1649, %v1646
    %v1689 = vpack.c.b16 %v1650, %v1647
    %v1690 = vpack.c.b16 %v1654, %v1651
    %v1691 = vpack.c.b16 %v1655, %v1652
    %v1692 = vpack.c.b16 %v1656, %v1653
    %v1693 = vpack.c.b16 %v1660, %v1657
    %v1694 = vpack.c.b16 %v1661, %v1658
    %v1695 = vpack.c.b16 %v1662, %v1659
    %v1696 = vpack.c.b16 %v1666, %v1663
    %v1697 = vpack.c.b16 %v1667, %v1664
    %v1698 = vpack.c.b16 %v1668, %v1665
    %v1699 = vpack.c.b16 %v1672, %v1669
    %v1700 = vpack.c.b16 %v1673, %v1670
    %v1701 = vpack.c.b16 %v1674, %v1671
    %v1702 = vpack.c.b16 %v1678, %v1675
    %v1703 = vpack.c.b16 %v1679, %v1676
    %v1704 = vpack.c.b16 %v1680, %v1677
    %1729 = vmatprep.subr.bf16.mxu0 %v1682
    %1730 = vmatpush1.bf16.msra.mxu0 %v1681
    %1731 = vmatprep.subr.bf16.mxu0 %v1685
    %1732 = vmatpush1.bf16.msra.mxu0 %v1684
    %1733 = vmatprep.subr.bf16.mxu0 %v1688
    %1734 = vmatpush1.bf16.msra.mxu0 %v1687
    %1735 = vmatprep.subr.bf16.mxu0 %v1691
    %1736 = vmatpush1.bf16.msra.mxu0 %v1690
    %1737 = vmatprep.subr.bf16.mxu0 %v1694
    %1738 = vmatpush1.bf16.msra.mxu0 %v1693
    %1739 = vmatprep.subr.bf16.mxu0 %v1697
    %1740 = vmatpush1.bf16.msra.mxu0 %v1696
    %1741 = vmatprep.subr.bf16.mxu0 %v1700
    %1742 = vmatpush1.bf16.msra.mxu0 %v1699
    %1743 = vmatprep.subr.bf16.mxu0 %v1703
    %1744 = vmatpush1.bf16.msra.mxu0 %v1702
    %1745 = vmatprep.subr.bf16.mxu0 0
    %1746 = vmatpush1.bf16.msra.mxu0 0
    %1747 = vmatprep.subr.bf16.mxu0 0
    %1748 = vmatpush1.bf16.msra.mxu0 0
    %1749 = vmatprep.subr.bf16.mxu0 0
    %1750 = vmatpush1.bf16.msra.mxu0 0
    %1751 = vmatprep.subr.bf16.mxu0 0
    %1752 = vmatpush1.bf16.msra.mxu0 0
    %1753 = vmatprep.subr.bf16.mxu0 0
    %1754 = vmatpush1.bf16.msra.mxu0 0
    %1755 = vmatprep.subr.bf16.mxu0 0
    %1756 = vmatpush1.bf16.msra.mxu0 0
    %1757 = vmatprep.subr.bf16.mxu0 0
    %1758 = vmatpush1.bf16.msra.mxu0 0
    %1759 = vmatprep.subr.bf16.mxu0 0
    %1760 = vmatpush1.bf16.msra.mxu0 0
    %1761 = vmatprep.mubr.bf16.mxu0 0
    %1762 = vmatmul.mubr.bf16.gmra.mrb[0].mxu0 %v1593
    %v1763 = vpop.f32.mrb[0].mxu0
    %v1764 = vadd.f32 %v1565, %v1763
    %v1765 = vpop.f32.mrb[0].mxu0
    %v1766 = vadd.f32 %v1569, %v1765
    %v1767 = vpop.f32.mrb[0].mxu0
    %v1768 = vadd.f32 %v1565, %v1767
    %v1769 = vpop.f32.mrb[0].mxu0
    %v1770 = vadd.f32 %v1569, %v1769
    %1771 = vmatprep.mubr.bf16.mxu0 0
    %1772 = vmatmul.mubr.bf16.gmra.mrb[0].mxu0 %v1594
    %v1773 = vpop.f32.mrb[0].mxu0
    %v1774 = vadd.f32 %v1565, %v1773
    %v1775 = vpop.f32.mrb[0].mxu0
    %v1776 = vadd.f32 %v1569, %v1775
    %v1777 = vpop.f32.mrb[0].mxu0
    %v1778 = vadd.f32 %v1565, %v1777
    %v1779 = vpop.f32.mrb[0].mxu0
    %v1780 = vadd.f32 %v1569, %v1779
    %1781 = vmatprep.mubr.bf16.mxu0 0
    %1782 = vmatmul.mubr.bf16.gmra.mrb[0].mxu0 %v1595
    %v1783 = vpop.f32.mrb[0].mxu0
    %v1784 = vadd.f32 %v1565, %v1783
    %v1785 = vpop.f32.mrb[0].mxu0
    %v1786 = vadd.f32 %v1569, %v1785
    %v1787 = vpop.f32.mrb[0].mxu0
    %v1788 = vadd.f32 %v1565, %v1787
    %v1789 = vpop.f32.mrb[0].mxu0
    %v1790 = vadd.f32 %v1569, %v1789
    %1791 = vmatprep.mubr.bf16.mxu0 0
    %1792 = vmatmul.mubr.bf16.gmra.mrb[0].mxu0 %v1596
    %v1793 = vpop.f32.mrb[0].mxu0
    %v1794 = vadd.f32 %v1565, %v1793
    %v1795 = vpop.f32.mrb[0].mxu0
    %v1796 = vadd.f32 %v1569, %v1795
    %v1797 = vpop.f32.mrb[0].mxu0
    %v1798 = vadd.f32 %v1565, %v1797
    %v1799 = vpop.f32.mrb[0].mxu0
    %v1800 = vadd.f32 %v1569, %v1799
    %1801 = vdwg.mxu0
    %1802 = vmatprep.subr.bf16.mxu0 0
    %1803 = vmatpush1.bf16.msra.mxu0 %v1683
    %1804 = vmatprep.subr.bf16.mxu0 0
    %1805 = vmatpush1.bf16.msra.mxu0 %v1686
    %1806 = vmatprep.subr.bf16.mxu0 0
    %1807 = vmatpush1.bf16.msra.mxu0 %v1689
    %1808 = vmatprep.subr.bf16.mxu0 0
    %1809 = vmatpush1.bf16.msra.mxu0 %v1692
    %1810 = vmatprep.subr.bf16.mxu0 0
    %1811 = vmatpush1.bf16.msra.mxu0 %v1695
    %1812 = vmatprep.subr.bf16.mxu0 0
    %1813 = vmatpush1.bf16.msra.mxu0 %v1698
    %1814 = vmatprep.subr.bf16.mxu0 0
    %1815 = vmatpush1.bf16.msra.mxu0 %v1701
    %1816 = vmatprep.subr.bf16.mxu0 0
    %1817 = vmatpush1.bf16.msra.mxu0 %v1704
    %1818 = vmatprep.subr.bf16.mxu0 0
    %1819 = vmatpush1.bf16.msra.mxu0 0
    %1820 = vmatprep.subr.bf16.mxu0 0
    %1821 = vmatpush1.bf16.msra.mxu0 0
    %1822 = vmatprep.subr.bf16.mxu0 0
    %1823 = vmatpush1.bf16.msra.mxu0 0
    %1824 = vmatprep.subr.bf16.mxu0 0
    %1825 = vmatpush1.bf16.msra.mxu0 0
    %1826 = vmatprep.subr.bf16.mxu0 0
    %1827 = vmatpush1.bf16.msra.mxu0 0
    %1828 = vmatprep.subr.bf16.mxu0 0
    %1829 = vmatpush1.bf16.msra.mxu0 0
    %1830 = vmatprep.subr.bf16.mxu0 0
    %1831 = vmatpush1.bf16.msra.mxu0 0
    %1832 = vmatprep.subr.bf16.mxu0 0
    %1833 = vmatpush1.bf16.msra.mxu0 0
    %1834 = vmatprep.mubr.bf16.mxu0 0
    %1835 = vmatmul.mubr.bf16.gmra.mrb[0].mxu0 %v1593
    %v1836 = vpop.f32.mrb[0].mxu0
    %v1837 = vadd.f32 %v1573, %v1836
    %v1838 = vpop.f32.mrb[0].mxu0
    %v1839 = vpop.f32.mrb[0].mxu0
    %v1840 = vadd.f32 %v1573, %v1839
    %v1841 = vpop.f32.mrb[0].mxu0
    %1842 = vmatprep.mubr.bf16.mxu0 0
    %1843 = vmatmul.mubr.bf16.gmra.mrb[0].mxu0 %v1594
    %v1844 = vpop.f32.mrb[0].mxu0
    %v1845 = vadd.f32 %v1573, %v1844
    %v1846 = vpop.f32.mrb[0].mxu0
    %v1847 = vpop.f32.mrb[0].mxu0
    %v1848 = vadd.f32 %v1573, %v1847
    %v1849 = vpop.f32.mrb[0].mxu0
    %1850 = vmatprep.mubr.bf16.mxu0 0
    %1851 = vmatmul.mubr.bf16.gmra.mrb[0].mxu0 %v1595
    %v1852 = vpop.f32.mrb[0].mxu0
    %v1853 = vadd.f32 %v1573, %v1852
    %v1854 = vpop.f32.mrb[0].mxu0
    %v1855 = vpop.f32.mrb[0].mxu0
    %v1856 = vadd.f32 %v1573, %v1855
    %v1857 = vpop.f32.mrb[0].mxu0
    %1858 = vmatprep.mubr.bf16.mxu0 0
    %1859 = vmatmul.mubr.bf16.gmra.mrb[0].mxu0 %v1596
    %v1860 = vpop.f32.mrb[0].mxu0
    %v1861 = vadd.f32 %v1573, %v1860
    %v1862 = vpop.f32.mrb[0].mxu0
    %v1863 = vpop.f32.mrb[0].mxu0
    %v1864 = vadd.f32 %v1573, %v1863
    %v1865 = vpop.f32.mrb[0].mxu0
    %1866 = vdwg.mxu0
    %1867 = vst [vmem:[#allocation2] sm:$0xff] %v1764
    %1868 = vst [vmem:[#allocation2 + $0x8] sm:$0xff] %v1766
    %1869 = vst [vmem:[#allocation2 + $0x10] sm:$0xff] %v1837
    %1870 = vst [vmem:[#allocation2 + $0x18] sm:$0xff] %v1768
    %1871 = vst [vmem:[#allocation2 + $0x20] sm:$0xff] %v1770
    %1872 = vst [vmem:[#allocation2 + $0x28] sm:$0xff] %v1840
    %1873 = vst [vmem:[#allocation2 + $0x30] sm:$0xff] %v1774
    %1874 = vst [vmem:[#allocation2 + $0x38] sm:$0xff] %v1776
    %1875 = vst [vmem:[#allocation2 + $0x40] sm:$0xff] %v1845
    %1876 = vst [vmem:[#allocation2 + $0x48] sm:$0xff] %v1778
    %1877 = vst [vmem:[#allocation2 + $0x50] sm:$0xff] %v1780
    %1878 = vst [vmem:[#allocation2 + $0x58] sm:$0xff] %v1848
    %1879 = vst [vmem:[#allocation2 + $0x60] sm:$0xff] %v1784
    %1880 = vst [vmem:[#allocation2 + $0x68] sm:$0xff] %v1786
    %1881 = vst [vmem:[#allocation2 + $0x70] sm:$0xff] %v1853
    %1882 = vst [vmem:[#allocation2 + $0x78] sm:$0xff] %v1788
    %1883 = vst [vmem:[#allocation2 + $0x80] sm:$0xff] %v1790
    %1884 = vst [vmem:[#allocation2 + $0x88] sm:$0xff] %v1856
    %1885 = vst [vmem:[#allocation2 + $0x90] sm:$0xff] %v1794
    %1886 = vst [vmem:[#allocation2 + $0x98] sm:$0xff] %v1796
    %1887 = vst [vmem:[#allocation2 + $0xa0] sm:$0xff] %v1861
    %1888 = vst [vmem:[#allocation2 + $0xa8] sm:$0xff] %v1798
    %1889 = vst [vmem:[#allocation2 + $0xb0] sm:$0xff] %v1800
    %1890 = vst [vmem:[#allocation2 + $0xb8] sm:$0xff] %v1864
    %v1891 = vld [vmem:[#allocation12] sm:$0xff]
    %v1892 = vld [vmem:[#allocation12 + $0x8] sm:$0xf]
    %v1893 = vld [vmem:[#allocation12 + $0xc] sm:$0xff]
    %v1894 = vld [vmem:[#allocation12 + $0x14] sm:$0xf]
    %v1895 = vld [vmem:[#allocation12 + $0x18] sm:$0xff]
    %v1896 = vld [vmem:[#allocation12 + $0x20] sm:$0xf]
    %v1897 = vld [vmem:[#allocation12 + $0x24] sm:$0xff]
    %v1898 = vld [vmem:[#allocation12 + $0x2c] sm:$0xf]
    %v1899 = vld [vmem:[#allocation12 + $0x30] sm:$0xff]
    %v1900 = vld [vmem:[#allocation12 + $0x38] sm:$0xf]
    %v1901 = vld [vmem:[#allocation12 + $0x3c] sm:$0xff]
    %v1902 = vld [vmem:[#allocation12 + $0x44] sm:$0xf]
    %v1903 = vld [vmem:[#allocation12 + $0x48] sm:$0xff]
    %v1904 = vld [vmem:[#allocation12 + $0x50] sm:$0xf]
    %v1905 = vld [vmem:[#allocation12 + $0x54] sm:$0xff]
    %v1906 = vld [vmem:[#allocation12 + $0x5c] sm:$0xf]
    %v1907 = vld [vmem:[#allocation12 + $0x60] sm:$0xff]
    %v1908 = vld [vmem:[#allocation12 + $0x68] sm:$0xf]
    %v1909 = vld [vmem:[#allocation12 + $0x6c] sm:$0xff]
    %v1910 = vld [vmem:[#allocation12 + $0x74] sm:$0xf]
    %v1911 = vld [vmem:[#allocation12 + $0x78] sm:$0xff]
    %v1912 = vld [vmem:[#allocation12 + $0x80] sm:$0xf]
    %v1913 = vld [vmem:[#allocation12 + $0x84] sm:$0xff]
    %v1914 = vld [vmem:[#allocation12 + $0x8c] sm:$0xf]
    %v1915 = vld [vmem:[#allocation12 + $0x90] sm:$0xff]
    %v1916 = vld [vmem:[#allocation12 + $0x98] sm:$0xf]
    %v1917 = vld [vmem:[#allocation12 + $0x9c] sm:$0xff]
    %v1918 = vld [vmem:[#allocation12 + $0xa4] sm:$0xf]
    %v1919 = vld [vmem:[#allocation12 + $0xa8] sm:$0xff]
    %v1920 = vld [vmem:[#allocation12 + $0xb0] sm:$0xf]
    %v1921 = vld [vmem:[#allocation12 + $0xb4] sm:$0xff]
    %v1922 = vld [vmem:[#allocation12 + $0xbc] sm:$0xf]
    %v1923 = vld [vmem:[%s8] sm:$0x7]
    %v1925 = vlaneseq
    %v1926 = vshrl.u32 %v1925, 7
    %v1927 = vsub.s32 0, %v1926
    %v1928 = vrot.slane %v1923, %v1927
    %v1929 = vlaneseq
    %v1930 = vshrl.u32 %v1929, 7
    %v1931 = vsub.s32 1, %v1930
    %v1932 = vrot.slane %v1923, %v1931
    %v1933 = vlaneseq
    %v1934 = vshrl.u32 %v1933, 7
    %v1935 = vsub.s32 2, %v1934
    %v1936 = vrot.slane %v1923, %v1935
    %v1972 = vunpack.c.l.b16 %v1891
    %v1973 = vunpack.c.h.b16 %v1891
    %v1974 = vunpack.c.l.b16 %v1892
    %v1975 = vunpack.c.l.b16 %v1893
    %v1976 = vunpack.c.h.b16 %v1893
    %v1977 = vunpack.c.l.b16 %v1894
    %v1978 = vunpack.c.l.b16 %v1895
    %v1979 = vunpack.c.h.b16 %v1895
    %v1980 = vunpack.c.l.b16 %v1896
    %v1981 = vunpack.c.l.b16 %v1897
    %v1982 = vunpack.c.h.b16 %v1897
    %v1983 = vunpack.c.l.b16 %v1898
    %v1984 = vunpack.c.l.b16 %v1899
    %v1985 = vunpack.c.h.b16 %v1899
    %v1986 = vunpack.c.l.b16 %v1900
    %v1987 = vunpack.c.l.b16 %v1901
    %v1988 = vunpack.c.h.b16 %v1901
    %v1989 = vunpack.c.l.b16 %v1902
    %v1990 = vunpack.c.l.b16 %v1903
    %v1991 = vunpack.c.h.b16 %v1903
    %v1992 = vunpack.c.l.b16 %v1904
    %v1993 = vunpack.c.l.b16 %v1905
    %v1994 = vunpack.c.h.b16 %v1905
    %v1995 = vunpack.c.l.b16 %v1906
    %v1996 = vunpack.c.l.b16 %v1907
    %v1997 = vunpack.c.h.b16 %v1907
    %v1998 = vunpack.c.l.b16 %v1908
    %v1999 = vunpack.c.l.b16 %v1909
    %v2000 = vunpack.c.h.b16 %v1909
    %v2001 = vunpack.c.l.b16 %v1910
    %v2002 = vunpack.c.l.b16 %v1911
    %v2003 = vunpack.c.h.b16 %v1911
    %v2004 = vunpack.c.l.b16 %v1912
    %v2005 = vunpack.c.l.b16 %v1913
    %v2006 = vunpack.c.h.b16 %v1913
    %v2007 = vunpack.c.l.b16 %v1914
    %v2008 = vunpack.c.l.b16 %v1915
    %v2009 = vunpack.c.h.b16 %v1915
    %v2010 = vunpack.c.l.b16 %v1916
    %v2011 = vunpack.c.l.b16 %v1917
    %v2012 = vunpack.c.h.b16 %v1917
    %v2013 = vunpack.c.l.b16 %v1918
    %v2014 = vunpack.c.l.b16 %v1919
    %v2015 = vunpack.c.h.b16 %v1919
    %v2016 = vunpack.c.l.b16 %v1920
    %v2017 = vunpack.c.l.b16 %v1921
    %v2018 = vunpack.c.h.b16 %v1921
    %v2019 = vunpack.c.l.b16 %v1922
    %v2020 = vpack.c.b16 %v1975, %v1972
    %v2021 = vpack.c.b16 %v1976, %v1973
    %v2022 = vpack.c.b16 %v1977, %v1974
    %v2023 = vpack.c.b16 %v1981, %v1978
    %v2024 = vpack.c.b16 %v1982, %v1979
    %v2025 = vpack.c.b16 %v1983, %v1980
    %v2026 = vpack.c.b16 %v1987, %v1984
    %v2027 = vpack.c.b16 %v1988, %v1985
    %v2028 = vpack.c.b16 %v1989, %v1986
    %v2029 = vpack.c.b16 %v1993, %v1990
    %v2030 = vpack.c.b16 %v1994, %v1991
    %v2031 = vpack.c.b16 %v1995, %v1992
    %v2032 = vpack.c.b16 %v1999, %v1996
    %v2033 = vpack.c.b16 %v2000, %v1997
    %v2034 = vpack.c.b16 %v2001, %v1998
    %v2035 = vpack.c.b16 %v2005, %v2002
    %v2036 = vpack.c.b16 %v2006, %v2003
    %v2037 = vpack.c.b16 %v2007, %v2004
    %v2038 = vpack.c.b16 %v2011, %v2008
    %v2039 = vpack.c.b16 %v2012, %v2009
    %v2040 = vpack.c.b16 %v2013, %v2010
    %v2041 = vpack.c.b16 %v2017, %v2014
    %v2042 = vpack.c.b16 %v2018, %v2015
    %v2043 = vpack.c.b16 %v2019, %v2016
    %2068 = vmatprep.subr.bf16.mxu0 %v2021
    %2069 = vmatpush1.bf16.msra.mxu0 %v2020
    %2070 = vmatprep.subr.bf16.mxu0 %v2024
    %2071 = vmatpush1.bf16.msra.mxu0 %v2023
    %2072 = vmatprep.subr.bf16.mxu0 %v2027
    %2073 = vmatpush1.bf16.msra.mxu0 %v2026
    %2074 = vmatprep.subr.bf16.mxu0 %v2030
    %2075 = vmatpush1.bf16.msra.mxu0 %v2029
    %2076 = vmatprep.subr.bf16.mxu0 %v2033
    %2077 = vmatpush1.bf16.msra.mxu0 %v2032
    %2078 = vmatprep.subr.bf16.mxu0 %v2036
    %2079 = vmatpush1.bf16.msra.mxu0 %v2035
    %2080 = vmatprep.subr.bf16.mxu0 %v2039
    %2081 = vmatpush1.bf16.msra.mxu0 %v2038
    %2082 = vmatprep.subr.bf16.mxu0 %v2042
    %2083 = vmatpush1.bf16.msra.mxu0 %v2041
    %2084 = vmatprep.subr.bf16.mxu0 0
    %2085 = vmatpush1.bf16.msra.mxu0 0
    %2086 = vmatprep.subr.bf16.mxu0 0
    %2087 = vmatpush1.bf16.msra.mxu0 0
    %2088 = vmatprep.subr.bf16.mxu0 0
    %2089 = vmatpush1.bf16.msra.mxu0 0
    %2090 = vmatprep.subr.bf16.mxu0 0
    %2091 = vmatpush1.bf16.msra.mxu0 0
    %2092 = vmatprep.subr.bf16.mxu0 0
    %2093 = vmatpush1.bf16.msra.mxu0 0
    %2094 = vmatprep.subr.bf16.mxu0 0
    %2095 = vmatpush1.bf16.msra.mxu0 0
    %2096 = vmatprep.subr.bf16.mxu0 0
    %2097 = vmatpush1.bf16.msra.mxu0 0
    %2098 = vmatprep.subr.bf16.mxu0 0
    %2099 = vmatpush1.bf16.msra.mxu0 0
    %2100 = vmatprep.mubr.bf16.mxu0 0
    %2101 = vmatmul.mubr.bf16.gmra.mrb[0].mxu0 0
    %v2102 = vpop.f32.mrb[0].mxu0
    %v2103 = vadd.f32 %v1928, %v2102
    %v2104 = vpop.f32.mrb[0].mxu0
    %v2105 = vadd.f32 %v1932, %v2104
    %v2106 = vpop.f32.mrb[0].mxu0
    %v2107 = vpop.f32.mrb[0].mxu0
    %2108 = vdwg.mxu0
    %2109 = vmatprep.subr.bf16.mxu0 0
    %2110 = vmatpush1.bf16.msra.mxu0 %v2022
    %2111 = vmatprep.subr.bf16.mxu0 0
    %2112 = vmatpush1.bf16.msra.mxu0 %v2025
    %2113 = vmatprep.subr.bf16.mxu0 0
    %2114 = vmatpush1.bf16.msra.mxu0 %v2028
    %2115 = vmatprep.subr.bf16.mxu0 0
    %2116 = vmatpush1.bf16.msra.mxu0 %v2031
    %2117 = vmatprep.subr.bf16.mxu0 0
    %2118 = vmatpush1.bf16.msra.mxu0 %v2034
    %2119 = vmatprep.subr.bf16.mxu0 0
    %2120 = vmatpush1.bf16.msra.mxu0 %v2037
    %2121 = vmatprep.subr.bf16.mxu0 0
    %2122 = vmatpush1.bf16.msra.mxu0 %v2040
    %2123 = vmatprep.subr.bf16.mxu0 0
    %2124 = vmatpush1.bf16.msra.mxu0 %v2043
    %2125 = vmatprep.subr.bf16.mxu0 0
    %2126 = vmatpush1.bf16.msra.mxu0 0
    %2127 = vmatprep.subr.bf16.mxu0 0
    %2128 = vmatpush1.bf16.msra.mxu0 0
    %2129 = vmatprep.subr.bf16.mxu0 0
    %2130 = vmatpush1.bf16.msra.mxu0 0
    %2131 = vmatprep.subr.bf16.mxu0 0
    %2132 = vmatpush1.bf16.msra.mxu0 0
    %2133 = vmatprep.subr.bf16.mxu0 0
    %2134 = vmatpush1.bf16.msra.mxu0 0
    %2135 = vmatprep.subr.bf16.mxu0 0
    %2136 = vmatpush1.bf16.msra.mxu0 0
    %2137 = vmatprep.subr.bf16.mxu0 0
    %2138 = vmatpush1.bf16.msra.mxu0 0
    %2139 = vmatprep.subr.bf16.mxu0 0
    %2140 = vmatpush1.bf16.msra.mxu0 0
    %2141 = vmatprep.mubr.bf16.mxu0 0
    %2142 = vmatmul.mubr.bf16.gmra.mrb[0].mxu0 0
    %v2143 = vpop.f32.mrb[0].mxu0
    %v2144 = vadd.f32 %v1936, %v2143
    %v2145 = vpop.f32.mrb[0].mxu0
    %v2146 = vpop.f32.mrb[0].mxu0
    %v2147 = vpop.f32.mrb[0].mxu0
    %2148 = vdwg.mxu0
    %v2149 = vld [vmem:[#allocation2] sm:$0xff]
    %v2150 = vld [vmem:[#allocation2 + $0x8] sm:$0xff]
    %v2151 = vld [vmem:[#allocation2 + $0x10] sm:$0xff]
    %v2152 = vadd.f32 %v2149, %v2103
    %v2153 = vxor.u32 %v2152, 2147483648
    %v2154 = vmul.f32 %v2153, 1.442695
    %v2155 = vpow.pop %v2154
    %v2156 = vadd.f32 %v2155, 1.0
    %v2157 = vrcp.pop %v2156
    %v2158 = vmul.f32 1.0, %v2157
    %v2159 = vadd.f32 %v2150, %v2105
    %v2160 = vxor.u32 %v2159, 2147483648
    %v2161 = vmul.f32 %v2160, 1.442695
    %v2162 = vpow.pop %v2161
    %v2163 = vadd.f32 %v2162, 1.0
    %v2164 = vrcp.pop %v2163
    %v2165 = vmul.f32 1.0, %v2164
    %v2166 = vmul.f32 %v2158, %v2144
    %v2167 = vadd.f32 %v2151, %v2166
    %v2168 = vtanh.pop %v2167
    %v2169 = vsub.f32 1.0, %v2165
    %v2170 = vmul.f32 %v2169, %v2168
    %v2171 = vmul.f32 %v2165, 0.0
    %v2172 = vadd.f32 %v2170, %v2171
    %v2173 = vpack.c.bf16 %v2172, %v2172
    %2174 = vmatprep.subr.bf16.mxu0 %v2021
    %2175 = vmatpush1.bf16.msra.mxu0 %v2020
    %2176 = vmatprep.subr.bf16.mxu0 %v2024
    %2177 = vmatpush1.bf16.msra.mxu0 %v2023
    %2178 = vmatprep.subr.bf16.mxu0 %v2027
    %2179 = vmatpush1.bf16.msra.mxu0 %v2026
    %2180 = vmatprep.subr.bf16.mxu0 %v2030
    %2181 = vmatpush1.bf16.msra.mxu0 %v2029
    %2182 = vmatprep.subr.bf16.mxu0 %v2033
    %2183 = vmatpush1.bf16.msra.mxu0 %v2032
    %2184 = vmatprep.subr.bf16.mxu0 %v2036
    %2185 = vmatpush1.bf16.msra.mxu0 %v2035
    %2186 = vmatprep.subr.bf16.mxu0 %v2039
    %2187 = vmatpush1.bf16.msra.mxu0 %v2038
    %2188 = vmatprep.subr.bf16.mxu0 %v2042
    %2189 = vmatpush1.bf16.msra.mxu0 %v2041
    %2190 = vmatprep.subr.bf16.mxu0 0
    %2191 = vmatpush1.bf16.msra.mxu0 0
    %2192 = vmatprep.subr.bf16.mxu0 0
    %2193 = vmatpush1.bf16.msra.mxu0 0
    %2194 = vmatprep.subr.bf16.mxu0 0
    %2195 = vmatpush1.bf16.msra.mxu0 0
    %2196 = vmatprep.subr.bf16.mxu0 0
    %2197 = vmatpush1.bf16.msra.mxu0 0
    %2198 = vmatprep.subr.bf16.mxu0 0
    %2199 = vmatpush1.bf16.msra.mxu0 0
    %2200 = vmatprep.subr.bf16.mxu0 0
    %2201 = vmatpush1.bf16.msra.mxu0 0
    %2202 = vmatprep.subr.bf16.mxu0 0
    %2203 = vmatpush1.bf16.msra.mxu0 0
    %2204 = vmatprep.subr.bf16.mxu0 0
    %2205 = vmatpush1.bf16.msra.mxu0 0
    %2206 = vmatprep.mubr.bf16.mxu0 0
    %2207 = vmatmul.mubr.bf16.gmra.mrb[0].mxu0 %v2173
    %v2208 = vpop.f32.mrb[0].mxu0
    %v2209 = vadd.f32 %v1928, %v2208
    %v2210 = vpop.f32.mrb[0].mxu0
    %v2211 = vadd.f32 %v1932, %v2210
    %v2212 = vpop.f32.mrb[0].mxu0
    %v2213 = vpop.f32.mrb[0].mxu0
    %2214 = vdwg.mxu0
    %2215 = vmatprep.subr.bf16.mxu0 0
    %2216 = vmatpush1.bf16.msra.mxu0 %v2022
    %2217 = vmatprep.subr.bf16.mxu0 0
    %2218 = vmatpush1.bf16.msra.mxu0 %v2025
    %2219 = vmatprep.subr.bf16.mxu0 0
    %2220 = vmatpush1.bf16.msra.mxu0 %v2028
    %2221 = vmatprep.subr.bf16.mxu0 0
    %2222 = vmatpush1.bf16.msra.mxu0 %v2031
    %2223 = vmatprep.subr.bf16.mxu0 0
    %2224 = vmatpush1.bf16.msra.mxu0 %v2034
    %2225 = vmatprep.subr.bf16.mxu0 0
    %2226 = vmatpush1.bf16.msra.mxu0 %v2037
    %2227 = vmatprep.subr.bf16.mxu0 0
    %2228 = vmatpush1.bf16.msra.mxu0 %v2040
    %2229 = vmatprep.subr.bf16.mxu0 0
    %2230 = vmatpush1.bf16.msra.mxu0 %v2043
    %2231 = vmatprep.subr.bf16.mxu0 0
    %2232 = vmatpush1.bf16.msra.mxu0 0
    %2233 = vmatprep.subr.bf16.mxu0 0
    %2234 = vmatpush1.bf16.msra.mxu0 0
    %2235 = vmatprep.subr.bf16.mxu0 0
    %2236 = vmatpush1.bf16.msra.mxu0 0
    %2237 = vmatprep.subr.bf16.mxu0 0
    %2238 = vmatpush1.bf16.msra.mxu0 0
    %2239 = vmatprep.subr.bf16.mxu0 0
    %2240 = vmatpush1.bf16.msra.mxu0 0
    %2241 = vmatprep.subr.bf16.mxu0 0
    %2242 = vmatpush1.bf16.msra.mxu0 0
    %2243 = vmatprep.subr.bf16.mxu0 0
    %2244 = vmatpush1.bf16.msra.mxu0 0
    %2245 = vmatprep.subr.bf16.mxu0 0
    %2246 = vmatpush1.bf16.msra.mxu0 0
    %2247 = vmatprep.mubr.bf16.mxu0 0
    %2248 = vmatmul.mubr.bf16.gmra.mrb[0].mxu0 %v2173
    %v2249 = vpop.f32.mrb[0].mxu0
    %v2250 = vadd.f32 %v1936, %v2249
    %v2251 = vpop.f32.mrb[0].mxu0
    %v2252 = vpop.f32.mrb[0].mxu0
    %v2253 = vpop.f32.mrb[0].mxu0
    %2254 = vdwg.mxu0
    %v2255 = vld [vmem:[%s838] sm:$0xff]
    %v2256 = vld [vmem:[%s838 + $0x8] sm:$0xff]
    %v2257 = vld [vmem:[%s838 + $0x10] sm:$0xff]
    %v2258 = vadd.f32 %v2255, %v2209
    %v2259 = vxor.u32 %v2258, 2147483648
    %v2260 = vmul.f32 %v2259, 1.442695
    %v2261 = vpow.pop %v2260
    %v2262 = vadd.f32 %v2261, 1.0
    %v2263 = vrcp.pop %v2262
    %v2264 = vmul.f32 1.0, %v2263
    %v2265 = vadd.f32 %v2256, %v2211
    %v2266 = vxor.u32 %v2265, 2147483648
    %v2267 = vmul.f32 %v2266, 1.442695
    %v2268 = vpow.pop %v2267
    %v2269 = vadd.f32 %v2268, 1.0
    %v2270 = vrcp.pop %v2269
    %v2271 = vmul.f32 1.0, %v2270
    %v2272 = vmul.f32 %v2264, %v2250
    %v2273 = vadd.f32 %v2257, %v2272
    %v2274 = vtanh.pop %v2273
    %v2275 = vsub.f32 1.0, %v2271
    %v2276 = vmul.f32 %v2275, %v2274
    %v2277 = vmul.f32 %v2271, %v2172
    %v2278 = vadd.f32 %v2276, %v2277
    %v2279 = vpack.c.bf16 %v2278, %v2278
    %2280 = vmatprep.subr.bf16.mxu0 %v2021
    %2281 = vmatpush1.bf16.msra.mxu0 %v2020
    %2282 = vmatprep.subr.bf16.mxu0 %v2024
    %2283 = vmatpush1.bf16.msra.mxu0 %v2023
    %2284 = vmatprep.subr.bf16.mxu0 %v2027
    %2285 = vmatpush1.bf16.msra.mxu0 %v2026
    %2286 = vmatprep.subr.bf16.mxu0 %v2030
    %2287 = vmatpush1.bf16.msra.mxu0 %v2029
    %2288 = vmatprep.subr.bf16.mxu0 %v2033
    %2289 = vmatpush1.bf16.msra.mxu0 %v2032
    %2290 = vmatprep.subr.bf16.mxu0 %v2036
    %2291 = vmatpush1.bf16.msra.mxu0 %v2035
    %2292 = vmatprep.subr.bf16.mxu0 %v2039
    %2293 = vmatpush1.bf16.msra.mxu0 %v2038
    %2294 = vmatprep.subr.bf16.mxu0 %v2042
    %2295 = vmatpush1.bf16.msra.mxu0 %v2041
    %2296 = vmatprep.subr.bf16.mxu0 0
    %2297 = vmatpush1.bf16.msra.mxu0 0
    %2298 = vmatprep.subr.bf16.mxu0 0
    %2299 = vmatpush1.bf16.msra.mxu0 0
    %2300 = vmatprep.subr.bf16.mxu0 0
    %2301 = vmatpush1.bf16.msra.mxu0 0
    %2302 = vmatprep.subr.bf16.mxu0 0
    %2303 = vmatpush1.bf16.msra.mxu0 0
    %2304 = vmatprep.subr.bf16.mxu0 0
    %2305 = vmatpush1.bf16.msra.mxu0 0
    %2306 = vmatprep.subr.bf16.mxu0 0
    %2307 = vmatpush1.bf16.msra.mxu0 0
    %2308 = vmatprep.subr.bf16.mxu0 0
    %2309 = vmatpush1.bf16.msra.mxu0 0
    %2310 = vmatprep.subr.bf16.mxu0 0
    %2311 = vmatpush1.bf16.msra.mxu0 0
    %2312 = vmatprep.mubr.bf16.mxu0 0
    %2313 = vmatmul.mubr.bf16.gmra.mrb[0].mxu0 %v2279
    %v2314 = vpop.f32.mrb[0].mxu0
    %v2315 = vadd.f32 %v1928, %v2314
    %v2316 = vpop.f32.mrb[0].mxu0
    %v2317 = vadd.f32 %v1932, %v2316
    %v2318 = vpop.f32.mrb[0].mxu0
    %v2319 = vpop.f32.mrb[0].mxu0
    %2320 = vdwg.mxu0
    %2321 = vmatprep.subr.bf16.mxu0 0
    %2322 = vmatpush1.bf16.msra.mxu0 %v2022
    %2323 = vmatprep.subr.bf16.mxu0 0
    %2324 = vmatpush1.bf16.msra.mxu0 %v2025
    %2325 = vmatprep.subr.bf16.mxu0 0
    %2326 = vmatpush1.bf16.msra.mxu0 %v2028
    %2327 = vmatprep.subr.bf16.mxu0 0
    %2328 = vmatpush1.bf16.msra.mxu0 %v2031
    %2329 = vmatprep.subr.bf16.mxu0 0
    %2330 = vmatpush1.bf16.msra.mxu0 %v2034
    %2331 = vmatprep.subr.bf16.mxu0 0
    %2332 = vmatpush1.bf16.msra.mxu0 %v2037
    %2333 = vmatprep.subr.bf16.mxu0 0
    %2334 = vmatpush1.bf16.msra.mxu0 %v2040
    %2335 = vmatprep.subr.bf16.mxu0 0
    %2336 = vmatpush1.bf16.msra.mxu0 %v2043
    %2337 = vmatprep.subr.bf16.mxu0 0
    %2338 = vmatpush1.bf16.msra.mxu0 0
    %2339 = vmatprep.subr.bf16.mxu0 0
    %2340 = vmatpush1.bf16.msra.mxu0 0
    %2341 = vmatprep.subr.bf16.mxu0 0
    %2342 = vmatpush1.bf16.msra.mxu0 0
    %2343 = vmatprep.subr.bf16.mxu0 0
    %2344 = vmatpush1.bf16.msra.mxu0 0
    %2345 = vmatprep.subr.bf16.mxu0 0
    %2346 = vmatpush1.bf16.msra.mxu0 0
    %2347 = vmatprep.subr.bf16.mxu0 0
    %2348 = vmatpush1.bf16.msra.mxu0 0
    %2349 = vmatprep.subr.bf16.mxu0 0
    %2350 = vmatpush1.bf16.msra.mxu0 0
    %2351 = vmatprep.subr.bf16.mxu0 0
    %2352 = vmatpush1.bf16.msra.mxu0 0
    %2353 = vmatprep.mubr.bf16.mxu0 0
    %2354 = vmatmul.mubr.bf16.gmra.mrb[0].mxu0 %v2279
    %v2355 = vpop.f32.mrb[0].mxu0
    %v2356 = vadd.f32 %v1936, %v2355
    %v2357 = vpop.f32.mrb[0].mxu0
    %v2358 = vpop.f32.mrb[0].mxu0
    %v2359 = vpop.f32.mrb[0].mxu0
    %2360 = vdwg.mxu0
    %v2361 = vld [vmem:[%s947] sm:$0xff]
    %v2362 = vld [vmem:[%s947 + $0x8] sm:$0xff]
    %v2363 = vld [vmem:[%s947 + $0x10] sm:$0xff]
    %v2364 = vadd.f32 %v2361, %v2315
    %v2365 = vxor.u32 %v2364, 2147483648
    %v2366 = vmul.f32 %v2365, 1.442695
    %v2367 = vpow.pop %v2366
    %v2368 = vadd.f32 %v2367, 1.0
    %v2369 = vrcp.pop %v2368
    %v2370 = vmul.f32 1.0, %v2369
    %v2371 = vadd.f32 %v2362, %v2317
    %v2372 = vxor.u32 %v2371, 2147483648
    %v2373 = vmul.f32 %v2372, 1.442695
    %v2374 = vpow.pop %v2373
    %v2375 = vadd.f32 %v2374, 1.0
    %v2376 = vrcp.pop %v2375
    %v2377 = vmul.f32 1.0, %v2376
    %v2378 = vmul.f32 %v2370, %v2356
    %v2379 = vadd.f32 %v2363, %v2378
    %v2380 = vtanh.pop %v2379
    %v2381 = vsub.f32 1.0, %v2377
    %v2382 = vmul.f32 %v2381, %v2380
    %v2383 = vmul.f32 %v2377, %v2278
    %v2384 = vadd.f32 %v2382, %v2383
    %v2385 = vpack.c.bf16 %v2384, %v2384
    %2386 = vmatprep.subr.bf16.mxu0 %v2021
    %2387 = vmatpush1.bf16.msra.mxu0 %v2020
    %2388 = vmatprep.subr.bf16.mxu0 %v2024
    %2389 = vmatpush1.bf16.msra.mxu0 %v2023
    %2390 = vmatprep.subr.bf16.mxu0 %v2027
    %2391 = vmatpush1.bf16.msra.mxu0 %v2026
    %2392 = vmatprep.subr.bf16.mxu0 %v2030
    %2393 = vmatpush1.bf16.msra.mxu0 %v2029
    %2394 = vmatprep.subr.bf16.mxu0 %v2033
    %2395 = vmatpush1.bf16.msra.mxu0 %v2032
    %2396 = vmatprep.subr.bf16.mxu0 %v2036
    %2397 = vmatpush1.bf16.msra.mxu0 %v2035
    %2398 = vmatprep.subr.bf16.mxu0 %v2039
    %2399 = vmatpush1.bf16.msra.mxu0 %v2038
    %2400 = vmatprep.subr.bf16.mxu0 %v2042
    %2401 = vmatpush1.bf16.msra.mxu0 %v2041
    %2402 = vmatprep.subr.bf16.mxu0 0
    %2403 = vmatpush1.bf16.msra.mxu0 0
    %2404 = vmatprep.subr.bf16.mxu0 0
    %2405 = vmatpush1.bf16.msra.mxu0 0
    %2406 = vmatprep.subr.bf16.mxu0 0
    %2407 = vmatpush1.bf16.msra.mxu0 0
    %2408 = vmatprep.subr.bf16.mxu0 0
    %2409 = vmatpush1.bf16.msra.mxu0 0
    %2410 = vmatprep.subr.bf16.mxu0 0
    %2411 = vmatpush1.bf16.msra.mxu0 0
    %2412 = vmatprep.subr.bf16.mxu0 0
    %2413 = vmatpush1.bf16.msra.mxu0 0
    %2414 = vmatprep.subr.bf16.mxu0 0
    %2415 = vmatpush1.bf16.msra.mxu0 0
    %2416 = vmatprep.subr.bf16.mxu0 0
    %2417 = vmatpush1.bf16.msra.mxu0 0
    %2418 = vmatprep.mubr.bf16.mxu0 0
    %2419 = vmatmul.mubr.bf16.gmra.mrb[0].mxu0 %v2385
    %v2420 = vpop.f32.mrb[0].mxu0
    %v2421 = vadd.f32 %v1928, %v2420
    %v2422 = vpop.f32.mrb[0].mxu0
    %v2423 = vadd.f32 %v1932, %v2422
    %v2424 = vpop.f32.mrb[0].mxu0
    %v2425 = vpop.f32.mrb[0].mxu0
    %2426 = vdwg.mxu0
    %2427 = vmatprep.subr.bf16.mxu0 0
    %2428 = vmatpush1.bf16.msra.mxu0 %v2022
    %2429 = vmatprep.subr.bf16.mxu0 0
    %2430 = vmatpush1.bf16.msra.mxu0 %v2025
    %2431 = vmatprep.subr.bf16.mxu0 0
    %2432 = vmatpush1.bf16.msra.mxu0 %v2028
    %2433 = vmatprep.subr.bf16.mxu0 0
    %2434 = vmatpush1.bf16.msra.mxu0 %v2031
    %2435 = vmatprep.subr.bf16.mxu0 0
    %2436 = vmatpush1.bf16.msra.mxu0 %v2034
    %2437 = vmatprep.subr.bf16.mxu0 0
    %2438 = vmatpush1.bf16.msra.mxu0 %v2037
    %2439 = vmatprep.subr.bf16.mxu0 0
    %2440 = vmatpush1.bf16.msra.mxu0 %v2040
    %2441 = vmatprep.subr.bf16.mxu0 0
    %2442 = vmatpush1.bf16.msra.mxu0 %v2043
    %2443 = vmatprep.subr.bf16.mxu0 0
    %2444 = vmatpush1.bf16.msra.mxu0 0
    %2445 = vmatprep.subr.bf16.mxu0 0
    %2446 = vmatpush1.bf16.msra.mxu0 0
    %2447 = vmatprep.subr.bf16.mxu0 0
    %2448 = vmatpush1.bf16.msra.mxu0 0
    %2449 = vmatprep.subr.bf16.mxu0 0
    %2450 = vmatpush1.bf16.msra.mxu0 0
    %2451 = vmatprep.subr.bf16.mxu0 0
    %2452 = vmatpush1.bf16.msra.mxu0 0
    %2453 = vmatprep.subr.bf16.mxu0 0
    %2454 = vmatpush1.bf16.msra.mxu0 0
    %2455 = vmatprep.subr.bf16.mxu0 0
    %2456 = vmatpush1.bf16.msra.mxu0 0
    %2457 = vmatprep.subr.bf16.mxu0 0
    %2458 = vmatpush1.bf16.msra.mxu0 0
    %2459 = vmatprep.mubr.bf16.mxu0 0
    %2460 = vmatmul.mubr.bf16.gmra.mrb[0].mxu0 %v2385
    %v2461 = vpop.f32.mrb[0].mxu0
    %v2462 = vadd.f32 %v1936, %v2461
    %v2463 = vpop.f32.mrb[0].mxu0
    %v2464 = vpop.f32.mrb[0].mxu0
    %v2465 = vpop.f32.mrb[0].mxu0
    %2466 = vdwg.mxu0
    %v2467 = vld [vmem:[%s1056] sm:$0xff]
    %v2468 = vld [vmem:[%s1056 + $0x8] sm:$0xff]
    %v2469 = vld [vmem:[%s1056 + $0x10] sm:$0xff]
    %v2470 = vadd.f32 %v2467, %v2421
    %v2471 = vxor.u32 %v2470, 2147483648
    %v2472 = vmul.f32 %v2471, 1.442695
    %v2473 = vpow.pop %v2472
    %v2474 = vadd.f32 %v2473, 1.0
    %v2475 = vrcp.pop %v2474
    %v2476 = vmul.f32 1.0, %v2475
    %v2477 = vadd.f32 %v2468, %v2423
    %v2478 = vxor.u32 %v2477, 2147483648
    %v2479 = vmul.f32 %v2478, 1.442695
    %v2480 = vpow.pop %v2479
    %v2481 = vadd.f32 %v2480, 1.0
    %v2482 = vrcp.pop %v2481
    %v2483 = vmul.f32 1.0, %v2482
    %v2484 = vmul.f32 %v2476, %v2462
    %v2485 = vadd.f32 %v2469, %v2484
    %v2486 = vtanh.pop %v2485
    %v2487 = vsub.f32 1.0, %v2483
    %v2488 = vmul.f32 %v2487, %v2486
    %v2489 = vmul.f32 %v2483, %v2384
    %v2490 = vadd.f32 %v2488, %v2489
    %v2491 = vpack.c.bf16 %v2490, %v2490
    %2492 = vmatprep.subr.bf16.mxu0 %v2021
    %2493 = vmatpush1.bf16.msra.mxu0 %v2020
    %2494 = vmatprep.subr.bf16.mxu0 %v2024
    %2495 = vmatpush1.bf16.msra.mxu0 %v2023
    %2496 = vmatprep.subr.bf16.mxu0 %v2027
    %2497 = vmatpush1.bf16.msra.mxu0 %v2026
    %2498 = vmatprep.subr.bf16.mxu0 %v2030
    %2499 = vmatpush1.bf16.msra.mxu0 %v2029
    %2500 = vmatprep.subr.bf16.mxu0 %v2033
    %2501 = vmatpush1.bf16.msra.mxu0 %v2032
    %2502 = vmatprep.subr.bf16.mxu0 %v2036
    %2503 = vmatpush1.bf16.msra.mxu0 %v2035
    %2504 = vmatprep.subr.bf16.mxu0 %v2039
    %2505 = vmatpush1.bf16.msra.mxu0 %v2038
    %2506 = vmatprep.subr.bf16.mxu0 %v2042
    %2507 = vmatpush1.bf16.msra.mxu0 %v2041
    %2508 = vmatprep.subr.bf16.mxu0 0
    %2509 = vmatpush1.bf16.msra.mxu0 0
    %2510 = vmatprep.subr.bf16.mxu0 0
    %2511 = vmatpush1.bf16.msra.mxu0 0
    %2512 = vmatprep.subr.bf16.mxu0 0
    %2513 = vmatpush1.bf16.msra.mxu0 0
    %2514 = vmatprep.subr.bf16.mxu0 0
    %2515 = vmatpush1.bf16.msra.mxu0 0
    %2516 = vmatprep.subr.bf16.mxu0 0
    %2517 = vmatpush1.bf16.msra.mxu0 0
    %2518 = vmatprep.subr.bf16.mxu0 0
    %2519 = vmatpush1.bf16.msra.mxu0 0
    %2520 = vmatprep.subr.bf16.mxu0 0
    %2521 = vmatpush1.bf16.msra.mxu0 0
    %2522 = vmatprep.subr.bf16.mxu0 0
    %2523 = vmatpush1.bf16.msra.mxu0 0
    %2524 = vmatprep.mubr.bf16.mxu0 0
    %2525 = vmatmul.mubr.bf16.gmra.mrb[0].mxu0 %v2491
    %v2526 = vpop.f32.mrb[0].mxu0
    %v2527 = vadd.f32 %v1928, %v2526
    %v2528 = vpop.f32.mrb[0].mxu0
    %v2529 = vadd.f32 %v1932, %v2528
    %v2530 = vpop.f32.mrb[0].mxu0
    %v2531 = vpop.f32.mrb[0].mxu0
    %2532 = vdwg.mxu0
    %2533 = vmatprep.subr.bf16.mxu0 0
    %2534 = vmatpush1.bf16.msra.mxu0 %v2022
    %2535 = vmatprep.subr.bf16.mxu0 0
    %2536 = vmatpush1.bf16.msra.mxu0 %v2025
    %2537 = vmatprep.subr.bf16.mxu0 0
    %2538 = vmatpush1.bf16.msra.mxu0 %v2028
    %2539 = vmatprep.subr.bf16.mxu0 0
    %2540 = vmatpush1.bf16.msra.mxu0 %v2031
    %2541 = vmatprep.subr.bf16.mxu0 0
    %2542 = vmatpush1.bf16.msra.mxu0 %v2034
    %2543 = vmatprep.subr.bf16.mxu0 0
    %2544 = vmatpush1.bf16.msra.mxu0 %v2037
    %2545 = vmatprep.subr.bf16.mxu0 0
    %2546 = vmatpush1.bf16.msra.mxu0 %v2040
    %2547 = vmatprep.subr.bf16.mxu0 0
    %2548 = vmatpush1.bf16.msra.mxu0 %v2043
    %2549 = vmatprep.subr.bf16.mxu0 0
    %2550 = vmatpush1.bf16.msra.mxu0 0
    %2551 = vmatprep.subr.bf16.mxu0 0
    %2552 = vmatpush1.bf16.msra.mxu0 0
    %2553 = vmatprep.subr.bf16.mxu0 0
    %2554 = vmatpush1.bf16.msra.mxu0 0
    %2555 = vmatprep.subr.bf16.mxu0 0
    %2556 = vmatpush1.bf16.msra.mxu0 0
    %2557 = vmatprep.subr.bf16.mxu0 0
    %2558 = vmatpush1.bf16.msra.mxu0 0
    %2559 = vmatprep.subr.bf16.mxu0 0
    %2560 = vmatpush1.bf16.msra.mxu0 0
    %2561 = vmatprep.subr.bf16.mxu0 0
    %2562 = vmatpush1.bf16.msra.mxu0 0
    %2563 = vmatprep.subr.bf16.mxu0 0
    %2564 = vmatpush1.bf16.msra.mxu0 0
    %2565 = vmatprep.mubr.bf16.mxu0 0
    %2566 = vmatmul.mubr.bf16.gmra.mrb[0].mxu0 %v2491
    %v2567 = vpop.f32.mrb[0].mxu0
    %v2568 = vadd.f32 %v1936, %v2567
    %v2569 = vpop.f32.mrb[0].mxu0
    %v2570 = vpop.f32.mrb[0].mxu0
    %v2571 = vpop.f32.mrb[0].mxu0
    %2572 = vdwg.mxu0
    %v2573 = vld [vmem:[%s1165] sm:$0xff]
    %v2574 = vld [vmem:[%s1165 + $0x8] sm:$0xff]
    %v2575 = vld [vmem:[%s1165 + $0x10] sm:$0xff]
    %v2576 = vadd.f32 %v2573, %v2527
    %v2577 = vxor.u32 %v2576, 2147483648
    %v2578 = vmul.f32 %v2577, 1.442695
    %v2579 = vpow.pop %v2578
    %v2580 = vadd.f32 %v2579, 1.0
    %v2581 = vrcp.pop %v2580
    %v2582 = vmul.f32 1.0, %v2581
    %v2583 = vadd.f32 %v2574, %v2529
    %v2584 = vxor.u32 %v2583, 2147483648
    %v2585 = vmul.f32 %v2584, 1.442695
    %v2586 = vpow.pop %v2585
    %v2587 = vadd.f32 %v2586, 1.0
    %v2588 = vrcp.pop %v2587
    %v2589 = vmul.f32 1.0, %v2588
    %v2590 = vmul.f32 %v2582, %v2568
    %v2591 = vadd.f32 %v2575, %v2590
    %v2592 = vtanh.pop %v2591
    %v2593 = vsub.f32 1.0, %v2589
    %v2594 = vmul.f32 %v2593, %v2592
    %v2595 = vmul.f32 %v2589, %v2490
    %v2596 = vadd.f32 %v2594, %v2595
    %v2597 = vpack.c.bf16 %v2596, %v2596
    %2598 = vmatprep.subr.bf16.mxu0 %v2021
    %2599 = vmatpush1.bf16.msra.mxu0 %v2020
    %2600 = vmatprep.subr.bf16.mxu0 %v2024
    %2601 = vmatpush1.bf16.msra.mxu0 %v2023
    %2602 = vmatprep.subr.bf16.mxu0 %v2027
    %2603 = vmatpush1.bf16.msra.mxu0 %v2026
    %2604 = vmatprep.subr.bf16.mxu0 %v2030
    %2605 = vmatpush1.bf16.msra.mxu0 %v2029
    %2606 = vmatprep.subr.bf16.mxu0 %v2033
    %2607 = vmatpush1.bf16.msra.mxu0 %v2032
    %2608 = vmatprep.subr.bf16.mxu0 %v2036
    %2609 = vmatpush1.bf16.msra.mxu0 %v2035
    %2610 = vmatprep.subr.bf16.mxu0 %v2039
    %2611 = vmatpush1.bf16.msra.mxu0 %v2038
    %2612 = vmatprep.subr.bf16.mxu0 %v2042
    %2613 = vmatpush1.bf16.msra.mxu0 %v2041
    %2614 = vmatprep.subr.bf16.mxu0 0
    %2615 = vmatpush1.bf16.msra.mxu0 0
    %2616 = vmatprep.subr.bf16.mxu0 0
    %2617 = vmatpush1.bf16.msra.mxu0 0
    %2618 = vmatprep.subr.bf16.mxu0 0
    %2619 = vmatpush1.bf16.msra.mxu0 0
    %2620 = vmatprep.subr.bf16.mxu0 0
    %2621 = vmatpush1.bf16.msra.mxu0 0
    %2622 = vmatprep.subr.bf16.mxu0 0
    %2623 = vmatpush1.bf16.msra.mxu0 0
    %2624 = vmatprep.subr.bf16.mxu0 0
    %2625 = vmatpush1.bf16.msra.mxu0 0
    %2626 = vmatprep.subr.bf16.mxu0 0
    %2627 = vmatpush1.bf16.msra.mxu0 0
    %2628 = vmatprep.subr.bf16.mxu0 0
    %2629 = vmatpush1.bf16.msra.mxu0 0
    %2630 = vmatprep.mubr.bf16.mxu0 0
    %2631 = vmatmul.mubr.bf16.gmra.mrb[0].mxu0 %v2597
    %v2632 = vpop.f32.mrb[0].mxu0
    %v2633 = vadd.f32 %v1928, %v2632
    %v2634 = vpop.f32.mrb[0].mxu0
    %v2635 = vadd.f32 %v1932, %v2634
    %v2636 = vpop.f32.mrb[0].mxu0
    %v2637 = vpop.f32.mrb[0].mxu0
    %2638 = vdwg.mxu0
    %2639 = vmatprep.subr.bf16.mxu0 0
    %2640 = vmatpush1.bf16.msra.mxu0 %v2022
    %2641 = vmatprep.subr.bf16.mxu0 0
    %2642 = vmatpush1.bf16.msra.mxu0 %v2025
    %2643 = vmatprep.subr.bf16.mxu0 0
    %2644 = vmatpush1.bf16.msra.mxu0 %v2028
    %2645 = vmatprep.subr.bf16.mxu0 0
    %2646 = vmatpush1.bf16.msra.mxu0 %v2031
    %2647 = vmatprep.subr.bf16.mxu0 0
    %2648 = vmatpush1.bf16.msra.mxu0 %v2034
    %2649 = vmatprep.subr.bf16.mxu0 0
    %2650 = vmatpush1.bf16.msra.mxu0 %v2037
    %2651 = vmatprep.subr.bf16.mxu0 0
    %2652 = vmatpush1.bf16.msra.mxu0 %v2040
    %2653 = vmatprep.subr.bf16.mxu0 0
    %2654 = vmatpush1.bf16.msra.mxu0 %v2043
    %2655 = vmatprep.subr.bf16.mxu0 0
    %2656 = vmatpush1.bf16.msra.mxu0 0
    %2657 = vmatprep.subr.bf16.mxu0 0
    %2658 = vmatpush1.bf16.msra.mxu0 0
    %2659 = vmatprep.subr.bf16.mxu0 0
    %2660 = vmatpush1.bf16.msra.mxu0 0
    %2661 = vmatprep.subr.bf16.mxu0 0
    %2662 = vmatpush1.bf16.msra.mxu0 0
    %2663 = vmatprep.subr.bf16.mxu0 0
    %2664 = vmatpush1.bf16.msra.mxu0 0
    %2665 = vmatprep.subr.bf16.mxu0 0
    %2666 = vmatpush1.bf16.msra.mxu0 0
    %2667 = vmatprep.subr.bf16.mxu0 0
    %2668 = vmatpush1.bf16.msra.mxu0 0
    %2669 = vmatprep.subr.bf16.mxu0 0
    %2670 = vmatpush1.bf16.msra.mxu0 0
    %2671 = vmatprep.mubr.bf16.mxu0 0
    %2672 = vmatmul.mubr.bf16.gmra.mrb[0].mxu0 %v2597
    %v2673 = vpop.f32.mrb[0].mxu0
    %v2674 = vadd.f32 %v1936, %v2673
    %v2675 = vpop.f32.mrb[0].mxu0
    %v2676 = vpop.f32.mrb[0].mxu0
    %v2677 = vpop.f32.mrb[0].mxu0
    %2678 = vdwg.mxu0
    %v2679 = vld [vmem:[%s1274] sm:$0xff]
    %v2680 = vld [vmem:[%s1274 + $0x8] sm:$0xff]
    %v2681 = vld [vmem:[%s1274 + $0x10] sm:$0xff]
    %v2682 = vadd.f32 %v2679, %v2633
    %v2683 = vxor.u32 %v2682, 2147483648
    %v2684 = vmul.f32 %v2683, 1.442695
    %v2685 = vpow.pop %v2684
    %v2686 = vadd.f32 %v2685, 1.0
    %v2687 = vrcp.pop %v2686
    %v2688 = vmul.f32 1.0, %v2687
    %v2689 = vadd.f32 %v2680, %v2635
    %v2690 = vxor.u32 %v2689, 2147483648
    %v2691 = vmul.f32 %v2690, 1.442695
    %v2692 = vpow.pop %v2691
    %v2693 = vadd.f32 %v2692, 1.0
    %v2694 = vrcp.pop %v2693
    %v2695 = vmul.f32 1.0, %v2694
    %v2696 = vmul.f32 %v2688, %v2674
    %v2697 = vadd.f32 %v2681, %v2696
    %v2698 = vtanh.pop %v2697
    %v2699 = vsub.f32 1.0, %v2695
    %v2700 = vmul.f32 %v2699, %v2698
    %v2701 = vmul.f32 %v2695, %v2596
    %v2702 = vadd.f32 %v2700, %v2701
    %v2703 = vpack.c.bf16 %v2702, %v2702
    %2704 = vmatprep.subr.bf16.mxu0 %v2021
    %2705 = vmatpush1.bf16.msra.mxu0 %v2020
    %2706 = vmatprep.subr.bf16.mxu0 %v2024
    %2707 = vmatpush1.bf16.msra.mxu0 %v2023
    %2708 = vmatprep.subr.bf16.mxu0 %v2027
    %2709 = vmatpush1.bf16.msra.mxu0 %v2026
    %2710 = vmatprep.subr.bf16.mxu0 %v2030
    %2711 = vmatpush1.bf16.msra.mxu0 %v2029
    %2712 = vmatprep.subr.bf16.mxu0 %v2033
    %2713 = vmatpush1.bf16.msra.mxu0 %v2032
    %2714 = vmatprep.subr.bf16.mxu0 %v2036
    %2715 = vmatpush1.bf16.msra.mxu0 %v2035
    %2716 = vmatprep.subr.bf16.mxu0 %v2039
    %2717 = vmatpush1.bf16.msra.mxu0 %v2038
    %2718 = vmatprep.subr.bf16.mxu0 %v2042
    %2719 = vmatpush1.bf16.msra.mxu0 %v2041
    %2720 = vmatprep.subr.bf16.mxu0 0
    %2721 = vmatpush1.bf16.msra.mxu0 0
    %2722 = vmatprep.subr.bf16.mxu0 0
    %2723 = vmatpush1.bf16.msra.mxu0 0
    %2724 = vmatprep.subr.bf16.mxu0 0
    %2725 = vmatpush1.bf16.msra.mxu0 0
    %2726 = vmatprep.subr.bf16.mxu0 0
    %2727 = vmatpush1.bf16.msra.mxu0 0
    %2728 = vmatprep.subr.bf16.mxu0 0
    %2729 = vmatpush1.bf16.msra.mxu0 0
    %2730 = vmatprep.subr.bf16.mxu0 0
    %2731 = vmatpush1.bf16.msra.mxu0 0
    %2732 = vmatprep.subr.bf16.mxu0 0
    %2733 = vmatpush1.bf16.msra.mxu0 0
    %2734 = vmatprep.subr.bf16.mxu0 0
    %2735 = vmatpush1.bf16.msra.mxu0 0
    %2736 = vmatprep.mubr.bf16.mxu0 0
    %2737 = vmatmul.mubr.bf16.gmra.mrb[0].mxu0 %v2703
    %v2738 = vpop.f32.mrb[0].mxu0
    %v2739 = vadd.f32 %v1928, %v2738
    %v2740 = vpop.f32.mrb[0].mxu0
    %v2741 = vadd.f32 %v1932, %v2740
    %v2742 = vpop.f32.mrb[0].mxu0
    %v2743 = vpop.f32.mrb[0].mxu0
    %2744 = vdwg.mxu0
    %2745 = vmatprep.subr.bf16.mxu0 0
    %2746 = vmatpush1.bf16.msra.mxu0 %v2022
    %2747 = vmatprep.subr.bf16.mxu0 0
    %2748 = vmatpush1.bf16.msra.mxu0 %v2025
    %2749 = vmatprep.subr.bf16.mxu0 0
    %2750 = vmatpush1.bf16.msra.mxu0 %v2028
    %2751 = vmatprep.subr.bf16.mxu0 0
    %2752 = vmatpush1.bf16.msra.mxu0 %v2031
    %2753 = vmatprep.subr.bf16.mxu0 0
    %2754 = vmatpush1.bf16.msra.mxu0 %v2034
    %2755 = vmatprep.subr.bf16.mxu0 0
    %2756 = vmatpush1.bf16.msra.mxu0 %v2037
    %2757 = vmatprep.subr.bf16.mxu0 0
    %2758 = vmatpush1.bf16.msra.mxu0 %v2040
    %2759 = vmatprep.subr.bf16.mxu0 0
    %2760 = vmatpush1.bf16.msra.mxu0 %v2043
    %2761 = vmatprep.subr.bf16.mxu0 0
    %2762 = vmatpush1.bf16.msra.mxu0 0
    %2763 = vmatprep.subr.bf16.mxu0 0
    %2764 = vmatpush1.bf16.msra.mxu0 0
    %2765 = vmatprep.subr.bf16.mxu0 0
    %2766 = vmatpush1.bf16.msra.mxu0 0
    %2767 = vmatprep.subr.bf16.mxu0 0
    %2768 = vmatpush1.bf16.msra.mxu0 0
    %2769 = vmatprep.subr.bf16.mxu0 0
    %2770 = vmatpush1.bf16.msra.mxu0 0
    %2771 = vmatprep.subr.bf16.mxu0 0
    %2772 = vmatpush1.bf16.msra.mxu0 0
    %2773 = vmatprep.subr.bf16.mxu0 0
    %2774 = vmatpush1.bf16.msra.mxu0 0
    %2775 = vmatprep.subr.bf16.mxu0 0
    %2776 = vmatpush1.bf16.msra.mxu0 0
    %2777 = vmatprep.mubr.bf16.mxu0 0
    %2778 = vmatmul.mubr.bf16.gmra.mrb[0].mxu0 %v2703
    %v2779 = vpop.f32.mrb[0].mxu0
    %v2780 = vadd.f32 %v1936, %v2779
    %v2781 = vpop.f32.mrb[0].mxu0
    %v2782 = vpop.f32.mrb[0].mxu0
    %v2783 = vpop.f32.mrb[0].mxu0
    %2784 = vdwg.mxu0
    %v2785 = vld [vmem:[%s1383] sm:$0xff]
    %v2786 = vld [vmem:[%s1383 + $0x8] sm:$0xff]
    %v2787 = vld [vmem:[%s1383 + $0x10] sm:$0xff]
    %v2788 = vadd.f32 %v2785, %v2739
    %v2789 = vxor.u32 %v2788, 2147483648
    %v2790 = vmul.f32 %v2789, 1.442695
    %v2791 = vpow.pop %v2790
    %v2792 = vadd.f32 %v2791, 1.0
    %v2793 = vrcp.pop %v2792
    %v2794 = vmul.f32 1.0, %v2793
    %v2795 = vadd.f32 %v2786, %v2741
    %v2796 = vxor.u32 %v2795, 2147483648
    %v2797 = vmul.f32 %v2796, 1.442695
    %v2798 = vpow.pop %v2797
    %v2799 = vadd.f32 %v2798, 1.0
    %v2800 = vrcp.pop %v2799
    %v2801 = vmul.f32 1.0, %v2800
    %v2802 = vmul.f32 %v2794, %v2780
    %v2803 = vadd.f32 %v2787, %v2802
    %v2804 = vtanh.pop %v2803
    %v2805 = vsub.f32 1.0, %v2801
    %v2806 = vmul.f32 %v2805, %v2804
    %v2807 = vmul.f32 %v2801, %v2702
    %v2808 = vadd.f32 %v2806, %v2807
    %v2809 = vpack.c.bf16 %v2808, %v2808
    %2810 = vmatprep.subr.bf16.mxu0 %v2021
    %2811 = vmatpush1.bf16.msra.mxu0 %v2020
    %2812 = vmatprep.subr.bf16.mxu0 %v2024
    %2813 = vmatpush1.bf16.msra.mxu0 %v2023
    %2814 = vmatprep.subr.bf16.mxu0 %v2027
    %2815 = vmatpush1.bf16.msra.mxu0 %v2026
    %2816 = vmatprep.subr.bf16.mxu0 %v2030
    %2817 = vmatpush1.bf16.msra.mxu0 %v2029
    %2818 = vmatprep.subr.bf16.mxu0 %v2033
    %2819 = vmatpush1.bf16.msra.mxu0 %v2032
    %2820 = vmatprep.subr.bf16.mxu0 %v2036
    %2821 = vmatpush1.bf16.msra.mxu0 %v2035
    %2822 = vmatprep.subr.bf16.mxu0 %v2039
    %2823 = vmatpush1.bf16.msra.mxu0 %v2038
    %2824 = vmatprep.subr.bf16.mxu0 %v2042
    %2825 = vmatpush1.bf16.msra.mxu0 %v2041
    %2826 = vmatprep.subr.bf16.mxu0 0
    %2827 = vmatpush1.bf16.msra.mxu0 0
    %2828 = vmatprep.subr.bf16.mxu0 0
    %2829 = vmatpush1.bf16.msra.mxu0 0
    %2830 = vmatprep.subr.bf16.mxu0 0
    %2831 = vmatpush1.bf16.msra.mxu0 0
    %2832 = vmatprep.subr.bf16.mxu0 0
    %2833 = vmatpush1.bf16.msra.mxu0 0
    %2834 = vmatprep.subr.bf16.mxu0 0
    %2835 = vmatpush1.bf16.msra.mxu0 0
    %2836 = vmatprep.subr.bf16.mxu0 0
    %2837 = vmatpush1.bf16.msra.mxu0 0
    %2838 = vmatprep.subr.bf16.mxu0 0
    %2839 = vmatpush1.bf16.msra.mxu0 0
    %2840 = vmatprep.subr.bf16.mxu0 0
    %2841 = vmatpush1.bf16.msra.mxu0 0
    %2842 = vmatprep.mubr.bf16.mxu0 0
    %2843 = vmatmul.mubr.bf16.gmra.mrb[0].mxu0 %v2809
    %v2844 = vpop.f32.mrb[0].mxu0
    %v2845 = vadd.f32 %v1928, %v2844
    %v2846 = vpop.f32.mrb[0].mxu0
    %v2847 = vadd.f32 %v1932, %v2846
    %v2848 = vpop.f32.mrb[0].mxu0
    %v2849 = vpop.f32.mrb[0].mxu0
    %2850 = vdwg.mxu0
    %2851 = vmatprep.subr.bf16.mxu0 0
    %2852 = vmatpush1.bf16.msra.mxu0 %v2022
    %2853 = vmatprep.subr.bf16.mxu0 0
    %2854 = vmatpush1.bf16.msra.mxu0 %v2025
    %2855 = vmatprep.subr.bf16.mxu0 0
    %2856 = vmatpush1.bf16.msra.mxu0 %v2028
    %2857 = vmatprep.subr.bf16.mxu0 0
    %2858 = vmatpush1.bf16.msra.mxu0 %v2031
    %2859 = vmatprep.subr.bf16.mxu0 0
    %2860 = vmatpush1.bf16.msra.mxu0 %v2034
    %2861 = vmatprep.subr.bf16.mxu0 0
    %2862 = vmatpush1.bf16.msra.mxu0 %v2037
    %2863 = vmatprep.subr.bf16.mxu0 0
    %2864 = vmatpush1.bf16.msra.mxu0 %v2040
    %2865 = vmatprep.subr.bf16.mxu0 0
    %2866 = vmatpush1.bf16.msra.mxu0 %v2043
    %2867 = vmatprep.subr.bf16.mxu0 0
    %2868 = vmatpush1.bf16.msra.mxu0 0
    %2869 = vmatprep.subr.bf16.mxu0 0
    %2870 = vmatpush1.bf16.msra.mxu0 0
    %2871 = vmatprep.subr.bf16.mxu0 0
    %2872 = vmatpush1.bf16.msra.mxu0 0
    %2873 = vmatprep.subr.bf16.mxu0 0
    %2874 = vmatpush1.bf16.msra.mxu0 0
    %2875 = vmatprep.subr.bf16.mxu0 0
    %2876 = vmatpush1.bf16.msra.mxu0 0
    %2877 = vmatprep.subr.bf16.mxu0 0
    %2878 = vmatpush1.bf16.msra.mxu0 0
    %2879 = vmatprep.subr.bf16.mxu0 0
    %2880 = vmatpush1.bf16.msra.mxu0 0
    %2881 = vmatprep.subr.bf16.mxu0 0
    %2882 = vmatpush1.bf16.msra.mxu0 0
    %2883 = vmatprep.mubr.bf16.mxu0 0
    %2884 = vmatmul.mubr.bf16.gmra.mrb[0].mxu0 %v2809
    %v2885 = vpop.f32.mrb[0].mxu0
    %v2886 = vadd.f32 %v1936, %v2885
    %v2887 = vpop.f32.mrb[0].mxu0
    %v2888 = vpop.f32.mrb[0].mxu0
    %v2889 = vpop.f32.mrb[0].mxu0
    %2890 = vdwg.mxu0
    %v2891 = vld [vmem:[%s1492] sm:$0xff]
    %v2892 = vld [vmem:[%s1492 + $0x8] sm:$0xff]
    %v2893 = vld [vmem:[%s1492 + $0x10] sm:$0xff]
    %v2894 = vadd.f32 %v2891, %v2845
    %v2895 = vxor.u32 %v2894, 2147483648
    %v2896 = vmul.f32 %v2895, 1.442695
    %v2897 = vpow.pop %v2896
    %v2898 = vadd.f32 %v2897, 1.0
    %v2899 = vrcp.pop %v2898
    %v2900 = vmul.f32 1.0, %v2899
    %v2901 = vadd.f32 %v2892, %v2847
    %v2902 = vxor.u32 %v2901, 2147483648
    %v2903 = vmul.f32 %v2902, 1.442695
    %v2904 = vpow.pop %v2903
    %v2905 = vadd.f32 %v2904, 1.0
    %v2906 = vrcp.pop %v2905
    %v2907 = vmul.f32 1.0, %v2906
    %v2908 = vmul.f32 %v2900, %v2886
    %v2909 = vadd.f32 %v2893, %v2908
    %v2910 = vtanh.pop %v2909
    %v2911 = vsub.f32 1.0, %v2907
    %v2912 = vmul.f32 %v2911, %v2910
    %v2913 = vmul.f32 %v2907, %v2808
    %v2914 = vadd.f32 %v2912, %v2913
    %v2915 = vpack.c.bf16 %v2914, %v2914
    %v2916 = vld [vmem:[#allocation13] sm:$0xf]
    %v2917 = vld [vmem:[#allocation13 + $0x4] sm:$0xf]
    %v2918 = vld [vmem:[#allocation13 + $0x8] sm:$0xf]
    %v2919 = vld [vmem:[#allocation13 + $0xc] sm:$0xf]
    %v2920 = vld [vmem:[#allocation13 + $0x10] sm:$0xf]
    %v2921 = vld [vmem:[#allocation13 + $0x14] sm:$0xf]
    %v2922 = vld [vmem:[#allocation13 + $0x18] sm:$0xf]
    %v2923 = vld [vmem:[#allocation13 + $0x1c] sm:$0xf]
    %v2924 = vld [vmem:[#allocation13 + $0x20] sm:$0xf]
    %v2925 = vld [vmem:[#allocation13 + $0x24] sm:$0xf]
    %v2926 = vld [vmem:[#allocation13 + $0x28] sm:$0xf]
    %v2927 = vld [vmem:[#allocation13 + $0x2c] sm:$0xf]
    %v2928 = vld [vmem:[#allocation13 + $0x30] sm:$0xf]
    %v2929 = vld [vmem:[#allocation13 + $0x34] sm:$0xf]
    %v2930 = vld [vmem:[#allocation13 + $0x38] sm:$0xf]
    %v2931 = vld [vmem:[#allocation13 + $0x3c] sm:$0xf]
    %v2932 = vld [vmem:[%s10] sm:$0x1]
    %v2934 = vlaneseq
    %v2935 = vshrl.u32 %v2934, 7
    %v2936 = vsub.s32 0, %v2935
    %v2937 = vrot.slane %v2932, %v2936
    %v2955 = vunpack.c.l.b16 %v2916
    %v2956 = vunpack.c.l.b16 %v2917
    %v2957 = vunpack.c.l.b16 %v2918
    %v2958 = vunpack.c.l.b16 %v2919
    %v2959 = vunpack.c.l.b16 %v2920
    %v2960 = vunpack.c.l.b16 %v2921
    %v2961 = vunpack.c.l.b16 %v2922
    %v2962 = vunpack.c.l.b16 %v2923
    %v2963 = vunpack.c.l.b16 %v2924
    %v2964 = vunpack.c.l.b16 %v2925
    %v2965 = vunpack.c.l.b16 %v2926
    %v2966 = vunpack.c.l.b16 %v2927
    %v2967 = vunpack.c.l.b16 %v2928
    %v2968 = vunpack.c.l.b16 %v2929
    %v2969 = vunpack.c.l.b16 %v2930
    %v2970 = vunpack.c.l.b16 %v2931
    %v2971 = vpack.c.b16 %v2956, %v2955
    %v2972 = vpack.c.b16 %v2958, %v2957
    %v2973 = vpack.c.b16 %v2960, %v2959
    %v2974 = vpack.c.b16 %v2962, %v2961
    %v2975 = vpack.c.b16 %v2964, %v2963
    %v2976 = vpack.c.b16 %v2966, %v2965
    %v2977 = vpack.c.b16 %v2968, %v2967
    %v2978 = vpack.c.b16 %v2970, %v2969
    %2987 = vmatprep.subr.bf16.mxu0 0
    %2988 = vmatpush1.bf16.msra.mxu0 %v2971
    %2989 = vmatprep.subr.bf16.mxu0 0
    %2990 = vmatpush1.bf16.msra.mxu0 %v2972
    %2991 = vmatprep.subr.bf16.mxu0 0
    %2992 = vmatpush1.bf16.msra.mxu0 %v2973
    %2993 = vmatprep.subr.bf16.mxu0 0
    %2994 = vmatpush1.bf16.msra.mxu0 %v2974
    %2995 = vmatprep.subr.bf16.mxu0 0
    %2996 = vmatpush1.bf16.msra.mxu0 %v2975
    %2997 = vmatprep.subr.bf16.mxu0 0
    %2998 = vmatpush1.bf16.msra.mxu0 %v2976
    %2999 = vmatprep.subr.bf16.mxu0 0
    %3000 = vmatpush1.bf16.msra.mxu0 %v2977
    %3001 = vmatprep.subr.bf16.mxu0 0
    %3002 = vmatpush1.bf16.msra.mxu0 %v2978
    %3003 = vmatprep.subr.bf16.mxu0 0
    %3004 = vmatpush1.bf16.msra.mxu0 0
    %3005 = vmatprep.subr.bf16.mxu0 0
    %3006 = vmatpush1.bf16.msra.mxu0 0
    %3007 = vmatprep.subr.bf16.mxu0 0
    %3008 = vmatpush1.bf16.msra.mxu0 0
    %3009 = vmatprep.subr.bf16.mxu0 0
    %3010 = vmatpush1.bf16.msra.mxu0 0
    %3011 = vmatprep.subr.bf16.mxu0 0
    %3012 = vmatpush1.bf16.msra.mxu0 0
    %3013 = vmatprep.subr.bf16.mxu0 0
    %3014 = vmatpush1.bf16.msra.mxu0 0
    %3015 = vmatprep.subr.bf16.mxu0 0
    %3016 = vmatpush1.bf16.msra.mxu0 0
    %3017 = vmatprep.subr.bf16.mxu0 0
    %3018 = vmatpush1.bf16.msra.mxu0 0
    %3019 = vmatprep.mubr.bf16.mxu0 0
    %3020 = vmatmul.mubr.bf16.gmra.mrb[0].mxu0 %v2915
    %v3021 = vpop.f32.mrb[0].mxu0
    %v3022 = vadd.f32 %v2937, %v3021
    %v3023 = vpop.f32.mrb[0].mxu0
    %v3024 = vpop.f32.mrb[0].mxu0
    %v3025 = vpop.f32.mrb[0].mxu0
    %3026 = vdwg.mxu0
    %3027 = vst [vmem:[#allocation15] sm:$0xff] %v3022
    // Predicated region
    $region70: #{tpu_custom_call.1} parent=1 // pred_check
      _
    $region71: #{tpu_custom_call.1} parent=1 // pred_check_branch
      %3029 = sbr.rel (0) target = $region73
    $region72: #{tpu_custom_call.1} parent=1 // pred_region
      %s3031 = ssub.s32 128, 128
      %3032 = vsyncadd [#allocation6], %s3031
      %s3034 = sshll.u32 [#allocation15], 4
      %s3035 = int_to_ptr.vmem [resolvable:$true] %s3034
      %3037 = dma.vmem_to_hbm [thread:$0]  %s3035, 128, %s11, [#allocation6]
    $region73: #{tpu_custom_call.1} parent=1 // pred_fallthru
      _
    // Predicated region
    $region74: #{tpu_custom_call.1} parent=1 // pred_check
      _
    $region75: #{tpu_custom_call.1} parent=1 // pred_check_branch
      %3039 = sbr.rel (0) target = $region77
    $region76: #{tpu_custom_call.1} parent=1 // pred_region
      %3040 = dma.done [#allocation6], 128
    $region77: #{tpu_custom_call.1} parent=1 // pred_fallthru
      _
    %3041 = vsyncpa [#allocation5], 1
    %3042 = vsyncpa [#allocation8], 1
    %3043 = vsyncpa [#allocation11], 1
    %3044 = vsyncpa [#allocation14], 1
    %3045 = vsyncpa [#allocation6], 1

</llo_original>
